<compile_context>
chip_gen: v7x
topology: tpu7x:2x2x1
jax: 0.10.0
libtpu: 0.0.40
codegen_flags: <defaults>
</compile_context>

<pallas_src>
import functools

import jax
import jax.numpy as jnp
from jax.experimental import pallas as pl
from jax.experimental.pallas import tpu as pltpu

C_LANE = 128        # lane-dense output-channel padding
TM_MAX = 256        # rows per matmul tile (multiple of 8 sublanes)
BN_EPS = 1e-5
LRELU_SLOPE = 0.2


def _round_up(x, m):
    return (x + m - 1) // m * m


# ----------------------------- Pallas kernels ------------------------------

def _conv_kernel(a_ref, w_ref, b_ref, y_ref, stats_ref, *,
                 activation, m_true, tm):
    """(tm, K)bf16 @ (K, C)bf16 -> f32 acc, + bias, fused activation.

    Also writes per-tile, per-channel sum / sum-of-squares of the output
    (masked against padded rows >= m_true) so BatchNorm batch statistics need
    no extra pass over the activation.
    """
    acc = jnp.dot(a_ref[...], w_ref[...], preferred_element_type=jnp.float32)
    y = acc + b_ref[...]                      # bias broadcast over rows (f32)
    if activation == "leaky_relu":
        y = jnp.where(y > 0, y, LRELU_SLOPE * y)
    elif activation == "sigmoid":
        y = jax.nn.sigmoid(y)                 # exp/recip land on the EUP
    y_ref[...] = y.astype(y_ref.dtype)

    # Masked per-channel statistics (rows beyond the true M are padding).
    rows = jax.lax.broadcasted_iota(jnp.int32, y.shape, 0) + pl.program_id(0) * tm
    ym = jnp.where(rows < m_true, y, 0.0)
    s = jnp.sum(ym, axis=0, keepdims=True)           # (1, C)
    ss = jnp.sum(ym * ym, axis=0, keepdims=True)     # (1, C)
    r8 = jax.lax.broadcasted_iota(jnp.int32, (8, y.shape[1]), 0)
    stats_ref[0] = jnp.where(r8 == 0, s, 0.0) + jnp.where(r8 == 1, ss, 0.0)


def _bn_lrelu_kernel(x_ref, sc_ref, sh_ref, o_ref):
    """y = x * scale + shift, then LeakyReLU(0.2). All f32."""
    y = x_ref[...] * sc_ref[...] + sh_ref[...]
    o_ref[...] = jnp.where(y > 0, y, LRELU_SLOPE * y).astype(o_ref.dtype)


# ----------------------------- wrappers -------------------------------------

def conv_layer(patches, w, b, activation):
    """patches: (M, K) f32, w: (K, C_LANE) bf16, b: (1, C_LANE) f32."""
    M, K = patches.shape
    C = w.shape[1]
    tm = min(TM_MAX, _round_up(M, 8))
    m_pad = _round_up(M, tm)
    if m_pad != M:
        patches = jnp.pad(patches, ((0, m_pad - M), (0, 0)))
    a = patches.astype(jnp.bfloat16)          # bf16 MXU operands, f32 accum
    grid = m_pad // tm

    kernel = functools.partial(_conv_kernel, activation=activation,
                               m_true=M, tm=tm)
    y, stats = pl.pallas_call(
        kernel,
        out_shape=(jax.ShapeDtypeStruct((m_pad, C), jnp.float32),
                   jax.ShapeDtypeStruct((grid, 8, C), jnp.float32)),
        grid=(grid,),
        in_specs=[
            pl.BlockSpec((tm, K), lambda i: (i, 0)),
            pl.BlockSpec((K, C), lambda i: (0, 0)),
            pl.BlockSpec((1, C), lambda i: (0, 0)),
        ],
        out_specs=(
            pl.BlockSpec((tm, C), lambda i: (i, 0)),
            pl.BlockSpec((1, 8, C), lambda i: (i, 0, 0)),
        ),
        compiler_params=pltpu.CompilerParams(
            dimension_semantics=("parallel",)),
    )(a, w, b)
    return y, stats, tm


def bn_lrelu_apply(y, scale, shift, tm):
    m_pad, C = y.shape
    grid = m_pad // tm
    return pl.pallas_call(
        _bn_lrelu_kernel,
        out_shape=jax.ShapeDtypeStruct((m_pad, C), jnp.float32),
        grid=(grid,),
        in_specs=[
            pl.BlockSpec((tm, C), lambda i: (i, 0)),
            pl.BlockSpec((1, C), lambda i: (0, 0)),
            pl.BlockSpec((1, C), lambda i: (0, 0)),
        ],
        out_specs=pl.BlockSpec((tm, C), lambda i: (i, 0)),
        compiler_params=pltpu.CompilerParams(
            dimension_semantics=("parallel",)),
    )(y, scale, shift)


def extract_patches(x_nhwc, k=4, s=2, p=1):
    """im2col for NHWC input. Returns ((M, k*k*C), (N, Ho, Wo))."""
    x = jnp.pad(x_nhwc, ((0, 0), (p, p), (p, p), (0, 0)))
    N, Hp, Wp, C = x.shape
    Ho = (Hp - k) // s + 1
    Wo = (Wp - k) // s + 1
    cols = []
    for i in range(k):
        for j in range(k):
            cols.append(x[:, i:i + s * Ho:s, j:j + s * Wo:s, :])  # (N,Ho,Wo,C)
    pat = jnp.stack(cols, axis=3)                 # (N, Ho, Wo, k*k, C)
    return pat.reshape(N * Ho * Wo, k * k * C), (N, Ho, Wo)


# ----------------------------- the model ------------------------------------

def _channel_plan(input_channel, n_filters):
    chans = [input_channel, n_filters, n_filters * 2, n_filters * 4,
             n_filters * 8, 1]
    carried = [_round_up(c, 8) for c in chans]    # channels carried between layers
    return chans, carried


def init_params(key, input_channel, n_filters):
    chans, carried = _channel_plan(input_channel, n_filters)
    params = []
    for li in range(5):
        cin, cout = chans[li], chans[li + 1]
        cc_in = carried[li]
        key, kw, kb, kg, kbt = jax.random.split(key, 5)
        # HWIO weight, zero-padded: input channels -> cc_in, output -> 128.
        w = 0.05 * jax.random.normal(kw, (4, 4, cin, cout), jnp.float32)
        b = 0.01 * jax.random.normal(kb, (cout,), jnp.float32)
        w_pad = jnp.zeros((4, 4, cc_in, C_LANE), jnp.float32)
        w_pad = w_pad.at[:, :, :cin, :cout].set(w)
        b_pad = jnp.zeros((1, C_LANE), jnp.float32).at[0, :cout].set(b)
        layer = {
            "w": w_pad.reshape(4 * 4 * cc_in, C_LANE).astype(jnp.bfloat16),
            "b": b_pad,
        }
        if 1 <= li <= 3:   # layers with BatchNorm
            g = 1.0 + 0.1 * jax.random.normal(kg, (cout,), jnp.float32)
            bt = 0.1 * jax.random.normal(kbt, (cout,), jnp.float32)
            layer["gamma"] = jnp.zeros((1, C_LANE), jnp.float32).at[0, :cout].set(g)
            layer["beta"] = jnp.zeros((1, C_LANE), jnp.float32).at[0, :cout].set(bt)
        params.append(layer)
    return params


def discriminator_forward(params, x_nchw, *, input_channel, n_filters):
    """x_nchw: (N, C, H, W) f32. Returns (N, 1, H_out, W_out) like PyTorch."""
    chans, carried = _channel_plan(input_channel, n_filters)
    x = jnp.transpose(x_nchw, (0, 2, 3, 1))                  # NCHW -> NHWC
    # Pad input channels to a multiple of 8 so K = 16*C is a multiple of 128.
    x = jnp.pad(x, ((0, 0), (0, 0), (0, 0), (0, carried[0] - chans[0])))

    for li in range(5):
        pat, (N, Ho, Wo) = extract_patches(x)
        M = N * Ho * Wo
        act = "leaky_relu" if li == 0 else ("sigmoid" if li == 4 else "none")
        y, stats, tm = conv_layer(pat, params[li]["w"], params[li]["b"], act)
        if 1 <= li <= 3:
            # BatchNorm batch stats from the kernel's per-tile side outputs.
            s = jnp.sum(stats[:, 0, :], axis=0, keepdims=True)     # (1, C_LANE)
            ss = jnp.sum(stats[:, 1, :], axis=0, keepdims=True)
            mean = s / M
            var = jnp.maximum(ss / M - mean * mean, 0.0)           # biased var
            scale = params[li]["gamma"] * jax.lax.rsqrt(var + BN_EPS)
            shift = params[li]["beta"] - mean * scale
            y = bn_lrelu_apply(y, scale, shift, tm)
        c_keep = chans[li + 1] if li == 4 else carried[li + 1]
        x = y[:M, :c_keep].reshape(N, Ho, Wo, c_keep)

    return jnp.transpose(x, (0, 3, 1, 2))                     # NHWC -> NCHW


if __name__ == "__main__":
    key = jax.random.PRNGKey(0)
    key, kx = jax.random.split(key)

    input_channel = 4
    n_filters = 8
    # spatial 32 so all five stride-2 convs produce valid sizes: 32->16->8->4->2->1
    x = jax.random.normal(kx, (2, input_channel, 32, 32), jnp.float32)

    params = init_params(key, input_channel, n_filters)
    fwd = jax.jit(functools.partial(discriminator_forward,
                                    input_channel=input_channel,
                                    n_filters=n_filters))
    out = jax.block_until_ready(fwd(params, x))

    assert out.shape == (2, 1, 1, 1), out.shape
    assert bool(jnp.all((out >= 0.0) & (out <= 1.0)))
    print("KERNEL_OK")
</pallas_src>

<mosaic_0001>
module attributes {stable_mosaic.version = 11 : i64} {
  func.func @_conv_kernel(%arg0: i32, %arg1: memref<256x128xbf16, #tpu.memory_space<vmem>>, %arg2: memref<128x128xbf16, #tpu.memory_space<vmem>>, %arg3: memref<1x128xf32, #tpu.memory_space<vmem>>, %arg4: memref<256x128xf32, #tpu.memory_space<vmem>>, %arg5: memref<1x8x128xf32, #tpu.memory_space<vmem>>) attributes {dimension_semantics = [#tpu.dimension_semantics<parallel>], iteration_bounds = array<i64: 2>, scalar_prefetch = 0 : i64, scratch_operands = 0 : i64, tpu.core_type = #tpu.core_type<tc>, window_params = [{transform_indices = @transform_0, window_bounds = array<i64: 256, 128>}, {pipeline_mode = #tpu.pipeline_mode<synchronous>, transform_indices = @transform_1, window_bounds = array<i64: 128, 128>}, {pipeline_mode = #tpu.pipeline_mode<synchronous>, transform_indices = @transform_2, window_bounds = array<i64: 1, 128>}, {transform_indices = @transform_3, window_bounds = array<i64: 256, 128>}, {transform_indices = @transform_4, window_bounds = array<i64: 1, 8, 128>}]} {
    %c0 = arith.constant 0 : index
    %c0_0 = arith.constant 0 : index
    %0 = vector.load %arg1[%c0, %c0_0] : memref<256x128xbf16, #tpu.memory_space<vmem>>, vector<256x128xbf16>
    %c0_1 = arith.constant 0 : index
    %c0_2 = arith.constant 0 : index
    %1 = vector.load %arg2[%c0_1, %c0_2] : memref<128x128xbf16, #tpu.memory_space<vmem>>, vector<128x128xbf16>
    %cst = arith.constant dense<0.000000e+00> : vector<256x128xf32>
    %2 = tpu.matmul %0, %1, %cst {dimension_numbers = #tpu.dot_dimension_numbers<[1], [0], [0], [1], [0, 0, 1, 1], [], []>} : vector<256x128xbf16>, vector<128x128xbf16>, vector<256x128xf32> -> vector<256x128xf32>
    %c0_3 = arith.constant 0 : index
    %c0_4 = arith.constant 0 : index
    %3 = vector.load %arg3[%c0_3, %c0_4] : memref<1x128xf32, #tpu.memory_space<vmem>>, vector<1x128xf32>
    %4 = vector.broadcast %3 : vector<1x128xf32> to vector<256x128xf32>
    %5 = arith.addf %2, %4 : vector<256x128xf32>
    %cst_5 = arith.constant 0.000000e+00 : f32
    %6 = vector.broadcast %cst_5 : f32 to vector<256x128xf32>
    %7 = arith.cmpf ogt, %5, %6 : vector<256x128xf32>
    %cst_6 = arith.constant 2.000000e-01 : f32
    %8 = vector.broadcast %cst_6 : f32 to vector<256x128xf32>
    %9 = arith.mulf %8, %5 : vector<256x128xf32>
    %10 = arith.select %7, %5, %9 : vector<256x128xi1>, vector<256x128xf32>
    %c0_7 = arith.constant 0 : index
    %c0_8 = arith.constant 0 : index
    %11 = vector.load %arg4[%c0_7, %c0_8] : memref<256x128xf32, #tpu.memory_space<vmem>>, vector<256x128xf32>
    tpu.vector_store %arg4[%c0_7, %c0_8], %10 {strides = array<i32>} : memref<256x128xf32, #tpu.memory_space<vmem>>, vector<256x128xf32>,
    %12 = tpu.iota {dimensions = array<i32: 0>} : vector<256x128xi32>
    %c256_i32 = arith.constant 256 : i32
    %13 = arith.muli %arg0, %c256_i32 : i32
    %14 = vector.broadcast %13 : i32 to vector<256x128xi32>
    %15 = arith.addi %12, %14 : vector<256x128xi32>
    %c512_i32 = arith.constant 512 : i32
    %16 = vector.broadcast %c512_i32 : i32 to vector<256x128xi32>
    %17 = arith.cmpi slt, %15, %16 : vector<256x128xi32>
    %cst_9 = arith.constant 0.000000e+00 : f32
    %18 = vector.broadcast %cst_9 : f32 to vector<256x128xf32>
    %19 = arith.select %17, %10, %18 : vector<256x128xi1>, vector<256x128xf32>
    %cst_10 = arith.constant dense<0.000000e+00> : vector<128xf32>
    %20 = vector.multi_reduction <add>, %19, %cst_10 [0] : vector<256x128xf32> to vector<128xf32>
    %21 = vector.shape_cast %20 : vector<128xf32> to vector<1x128xf32>
    %22 = arith.mulf %19, %19 : vector<256x128xf32>
    %cst_11 = arith.constant dense<0.000000e+00> : vector<128xf32>
    %23 = vector.multi_reduction <add>, %22, %cst_11 [0] : vector<256x128xf32> to vector<128xf32>
    %24 = vector.shape_cast %23 : vector<128xf32> to vector<1x128xf32>
    %25 = tpu.iota {dimensions = array<i32: 0>} : vector<8x128xi32>
    %c0_i32 = arith.constant 0 : i32
    %26 = vector.broadcast %c0_i32 : i32 to vector<8x128xi32>
    %27 = arith.cmpi eq, %25, %26 : vector<8x128xi32>
    %cst_12 = arith.constant 0.000000e+00 : f32
    %28 = vector.shape_cast %21 : vector<1x128xf32> to vector<1x128xf32>
    %29 = vector.broadcast %28 : vector<1x128xf32> to vector<8x128xf32>
    %30 = vector.broadcast %cst_12 : f32 to vector<8x128xf32>
    %31 = arith.select %27, %29, %30 : vector<8x128xi1>, vector<8x128xf32>
    %c1_i32 = arith.constant 1 : i32
    %32 = vector.broadcast %c1_i32 : i32 to vector<8x128xi32>
    %33 = arith.cmpi eq, %25, %32 : vector<8x128xi32>
    %cst_13 = arith.constant 0.000000e+00 : f32
    %34 = vector.shape_cast %24 : vector<1x128xf32> to vector<1x128xf32>
    %35 = vector.broadcast %34 : vector<1x128xf32> to vector<8x128xf32>
    %36 = vector.broadcast %cst_13 : f32 to vector<8x128xf32>
    %37 = arith.select %33, %35, %36 : vector<8x128xi1>, vector<8x128xf32>
    %38 = arith.addf %31, %37 : vector<8x128xf32>
    %c0_14 = arith.constant 0 : index
    %c0_15 = arith.constant 0 : index
    %c0_16 = arith.constant 0 : index
    %39 = vector.load %arg5[%c0_14, %c0_15, %c0_16] : memref<1x8x128xf32, #tpu.memory_space<vmem>>, vector<1x8x128xf32>
    %40 = vector.shape_cast %39 : vector<1x8x128xf32> to vector<8x128xf32>
    %41 = vector.shape_cast %38 : vector<8x128xf32> to vector<1x8x128xf32>
    tpu.vector_store %arg5[%c0_14, %c0_15, %c0_16], %41 {strides = array<i32>} : memref<1x8x128xf32, #tpu.memory_space<vmem>>, vector<1x8x128xf32>,
    return
  }
  func.func @transform_0(%arg0: i32) -> (i32, i32) {
    %c0_i32 = arith.constant 0 : i32
    %c0_i32_0 = arith.constant 0 : i32
    return %arg0, %c0_i32 : i32, i32
  }
  func.func @transform_1(%arg0: i32) -> (i32, i32) {
    %c0_i32 = arith.constant 0 : i32
    %c0_i32_0 = arith.constant 0 : i32
    %c0_i32_1 = arith.constant 0 : i32
    return %c0_i32, %c0_i32_0 : i32, i32
  }
  func.func @transform_2(%arg0: i32) -> (i32, i32) {
    %c0_i32 = arith.constant 0 : i32
    %c0_i32_0 = arith.constant 0 : i32
    %c0_i32_1 = arith.constant 0 : i32
    return %c0_i32, %c0_i32_0 : i32, i32
  }
  func.func @transform_3(%arg0: i32) -> (i32, i32) {
    %c0_i32 = arith.constant 0 : i32
    %c0_i32_0 = arith.constant 0 : i32
    return %arg0, %c0_i32 : i32, i32
  }
  func.func @transform_4(%arg0: i32) -> (i32, i32, i32) {
    %c0_i32 = arith.constant 0 : i32
    %c0_i32_0 = arith.constant 0 : i32
    %c0_i32_1 = arith.constant 0 : i32
    return %arg0, %c0_i32, %c0_i32_0 : i32, i32, i32
  }
}

module attributes {stable_mosaic.version = 11 : i64} {
  func.func @_conv_kernel(%arg0: i32, %arg1: memref<128x128xbf16, #tpu.memory_space<vmem>>, %arg2: memref<128x128xbf16, #tpu.memory_space<vmem>>, %arg3: memref<1x128xf32, #tpu.memory_space<vmem>>, %arg4: memref<128x128xf32, #tpu.memory_space<vmem>>, %arg5: memref<1x8x128xf32, #tpu.memory_space<vmem>>) attributes {dimension_semantics = [#tpu.dimension_semantics<parallel>], iteration_bounds = array<i64: 1>, scalar_prefetch = 0 : i64, scratch_operands = 0 : i64, tpu.core_type = #tpu.core_type<tc>, window_params = [{transform_indices = @transform_0, window_bounds = array<i64: 128, 128>}, {pipeline_mode = #tpu.pipeline_mode<synchronous>, transform_indices = @transform_1, window_bounds = array<i64: 128, 128>}, {pipeline_mode = #tpu.pipeline_mode<synchronous>, transform_indices = @transform_2, window_bounds = array<i64: 1, 128>}, {transform_indices = @transform_3, window_bounds = array<i64: 128, 128>}, {transform_indices = @transform_4, window_bounds = array<i64: 1, 8, 128>}]} {
    %c0 = arith.constant 0 : index
    %c0_0 = arith.constant 0 : index
    %0 = vector.load %arg1[%c0, %c0_0] : memref<128x128xbf16, #tpu.memory_space<vmem>>, vector<128x128xbf16>
    %c0_1 = arith.constant 0 : index
    %c0_2 = arith.constant 0 : index
    %1 = vector.load %arg2[%c0_1, %c0_2] : memref<128x128xbf16, #tpu.memory_space<vmem>>, vector<128x128xbf16>
    %cst = arith.constant dense<0.000000e+00> : vector<128x128xf32>
    %2 = tpu.matmul %0, %1, %cst {dimension_numbers = #tpu.dot_dimension_numbers<[1], [0], [0], [1], [0, 0, 1, 1], [], []>} : vector<128x128xbf16>, vector<128x128xbf16>, vector<128x128xf32> -> vector<128x128xf32>
    %c0_3 = arith.constant 0 : index
    %c0_4 = arith.constant 0 : index
    %3 = vector.load %arg3[%c0_3, %c0_4] : memref<1x128xf32, #tpu.memory_space<vmem>>, vector<1x128xf32>
    %4 = vector.broadcast %3 : vector<1x128xf32> to vector<128x128xf32>
    %5 = arith.addf %2, %4 : vector<128x128xf32>
    %c0_5 = arith.constant 0 : index
    %c0_6 = arith.constant 0 : index
    %6 = vector.load %arg4[%c0_5, %c0_6] : memref<128x128xf32, #tpu.memory_space<vmem>>, vector<128x128xf32>
    tpu.vector_store %arg4[%c0_5, %c0_6], %5 {strides = array<i32>} : memref<128x128xf32, #tpu.memory_space<vmem>>, vector<128x128xf32>,
    %7 = tpu.iota {dimensions = array<i32: 0>} : vector<128x128xi32>
    %c128_i32 = arith.constant 128 : i32
    %8 = arith.muli %arg0, %c128_i32 : i32
    %9 = vector.broadcast %8 : i32 to vector<128x128xi32>
    %10 = arith.addi %7, %9 : vector<128x128xi32>
    %c128_i32_7 = arith.constant 128 : i32
    %11 = vector.broadcast %c128_i32_7 : i32 to vector<128x128xi32>
    %12 = arith.cmpi slt, %10, %11 : vector<128x128xi32>
    %cst_8 = arith.constant 0.000000e+00 : f32
    %13 = vector.broadcast %cst_8 : f32 to vector<128x128xf32>
    %14 = arith.select %12, %5, %13 : vector<128x128xi1>, vector<128x128xf32>
    %cst_9 = arith.constant dense<0.000000e+00> : vector<128xf32>
    %15 = vector.multi_reduction <add>, %14, %cst_9 [0] : vector<128x128xf32> to vector<128xf32>
    %16 = vector.shape_cast %15 : vector<128xf32> to vector<1x128xf32>
    %17 = arith.mulf %14, %14 : vector<128x128xf32>
    %cst_10 = arith.constant dense<0.000000e+00> : vector<128xf32>
    %18 = vector.multi_reduction <add>, %17, %cst_10 [0] : vector<128x128xf32> to vector<128xf32>
    %19 = vector.shape_cast %18 : vector<128xf32> to vector<1x128xf32>
    %20 = tpu.iota {dimensions = array<i32: 0>} : vector<8x128xi32>
    %c0_i32 = arith.constant 0 : i32
    %21 = vector.broadcast %c0_i32 : i32 to vector<8x128xi32>
    %22 = arith.cmpi eq, %20, %21 : vector<8x128xi32>
    %cst_11 = arith.constant 0.000000e+00 : f32
    %23 = vector.shape_cast %16 : vector<1x128xf32> to vector<1x128xf32>
    %24 = vector.broadcast %23 : vector<1x128xf32> to vector<8x128xf32>
    %25 = vector.broadcast %cst_11 : f32 to vector<8x128xf32>
    %26 = arith.select %22, %24, %25 : vector<8x128xi1>, vector<8x128xf32>
    %c1_i32 = arith.constant 1 : i32
    %27 = vector.broadcast %c1_i32 : i32 to vector<8x128xi32>
    %28 = arith.cmpi eq, %20, %27 : vector<8x128xi32>
    %cst_12 = arith.constant 0.000000e+00 : f32
    %29 = vector.shape_cast %19 : vector<1x128xf32> to vector<1x128xf32>
    %30 = vector.broadcast %29 : vector<1x128xf32> to vector<8x128xf32>
    %31 = vector.broadcast %cst_12 : f32 to vector<8x128xf32>
    %32 = arith.select %28, %30, %31 : vector<8x128xi1>, vector<8x128xf32>
    %33 = arith.addf %26, %32 : vector<8x128xf32>
    %c0_13 = arith.constant 0 : index
    %c0_14 = arith.constant 0 : index
    %c0_15 = arith.constant 0 : index
    %34 = vector.load %arg5[%c0_13, %c0_14, %c0_15] : memref<1x8x128xf32, #tpu.memory_space<vmem>>, vector<1x8x128xf32>
    %35 = vector.shape_cast %34 : vector<1x8x128xf32> to vector<8x128xf32>
    %36 = vector.shape_cast %33 : vector<8x128xf32> to vector<1x8x128xf32>
    tpu.vector_store %arg5[%c0_13, %c0_14, %c0_15], %36 {strides = array<i32>} : memref<1x8x128xf32, #tpu.memory_space<vmem>>, vector<1x8x128xf32>,
    return
  }
  func.func @transform_0(%arg0: i32) -> (i32, i32) {
    %c0_i32 = arith.constant 0 : i32
    %c0_i32_0 = arith.constant 0 : i32
    return %arg0, %c0_i32 : i32, i32
  }
  func.func @transform_1(%arg0: i32) -> (i32, i32) {
    %c0_i32 = arith.constant 0 : i32
    %c0_i32_0 = arith.constant 0 : i32
    %c0_i32_1 = arith.constant 0 : i32
    return %c0_i32, %c0_i32_0 : i32, i32
  }
  func.func @transform_2(%arg0: i32) -> (i32, i32) {
    %c0_i32 = arith.constant 0 : i32
    %c0_i32_0 = arith.constant 0 : i32
    %c0_i32_1 = arith.constant 0 : i32
    return %c0_i32, %c0_i32_0 : i32, i32
  }
  func.func @transform_3(%arg0: i32) -> (i32, i32) {
    %c0_i32 = arith.constant 0 : i32
    %c0_i32_0 = arith.constant 0 : i32
    return %arg0, %c0_i32 : i32, i32
  }
  func.func @transform_4(%arg0: i32) -> (i32, i32, i32) {
    %c0_i32 = arith.constant 0 : i32
    %c0_i32_0 = arith.constant 0 : i32
    %c0_i32_1 = arith.constant 0 : i32
    return %arg0, %c0_i32, %c0_i32_0 : i32, i32, i32
  }
}

module attributes {stable_mosaic.version = 11 : i64} {
  func.func @_bn_lrelu_kernel(%arg0: i32, %arg1: memref<128x128xf32, #tpu.memory_space<vmem>>, %arg2: memref<1x128xf32, #tpu.memory_space<vmem>>, %arg3: memref<1x128xf32, #tpu.memory_space<vmem>>, %arg4: memref<128x128xf32, #tpu.memory_space<vmem>>) attributes {dimension_semantics = [#tpu.dimension_semantics<parallel>], iteration_bounds = array<i64: 1>, scalar_prefetch = 0 : i64, scratch_operands = 0 : i64, tpu.core_type = #tpu.core_type<tc>, window_params = [{transform_indices = @transform_0, window_bounds = array<i64: 128, 128>}, {pipeline_mode = #tpu.pipeline_mode<synchronous>, transform_indices = @transform_1, window_bounds = array<i64: 1, 128>}, {pipeline_mode = #tpu.pipeline_mode<synchronous>, transform_indices = @transform_2, window_bounds = array<i64: 1, 128>}, {transform_indices = @transform_3, window_bounds = array<i64: 128, 128>}]} {
    %c0 = arith.constant 0 : index
    %c0_0 = arith.constant 0 : index
    %0 = vector.load %arg1[%c0, %c0_0] : memref<128x128xf32, #tpu.memory_space<vmem>>, vector<128x128xf32>
    %c0_1 = arith.constant 0 : index
    %c0_2 = arith.constant 0 : index
    %1 = vector.load %arg2[%c0_1, %c0_2] : memref<1x128xf32, #tpu.memory_space<vmem>>, vector<1x128xf32>
    %2 = vector.broadcast %1 : vector<1x128xf32> to vector<128x128xf32>
    %3 = arith.mulf %0, %2 : vector<128x128xf32>
    %c0_3 = arith.constant 0 : index
    %c0_4 = arith.constant 0 : index
    %4 = vector.load %arg3[%c0_3, %c0_4] : memref<1x128xf32, #tpu.memory_space<vmem>>, vector<1x128xf32>
    %5 = vector.broadcast %4 : vector<1x128xf32> to vector<128x128xf32>
    %6 = arith.addf %3, %5 : vector<128x128xf32>
    %cst = arith.constant 0.000000e+00 : f32
    %7 = vector.broadcast %cst : f32 to vector<128x128xf32>
    %8 = arith.cmpf ogt, %6, %7 : vector<128x128xf32>
    %cst_5 = arith.constant 2.000000e-01 : f32
    %9 = vector.broadcast %cst_5 : f32 to vector<128x128xf32>
    %10 = arith.mulf %9, %6 : vector<128x128xf32>
    %11 = arith.select %8, %6, %10 : vector<128x128xi1>, vector<128x128xf32>
    %c0_6 = arith.constant 0 : index
    %c0_7 = arith.constant 0 : index
    %12 = vector.load %arg4[%c0_6, %c0_7] : memref<128x128xf32, #tpu.memory_space<vmem>>, vector<128x128xf32>
    tpu.vector_store %arg4[%c0_6, %c0_7], %11 {strides = array<i32>} : memref<128x128xf32, #tpu.memory_space<vmem>>, vector<128x128xf32>,
    return
  }
  func.func @transform_0(%arg0: i32) -> (i32, i32) {
    %c0_i32 = arith.constant 0 : i32
    %c0_i32_0 = arith.constant 0 : i32
    return %arg0, %c0_i32 : i32, i32
  }
  func.func @transform_1(%arg0: i32) -> (i32, i32) {
    %c0_i32 = arith.constant 0 : i32
    %c0_i32_0 = arith.constant 0 : i32
    %c0_i32_1 = arith.constant 0 : i32
    return %c0_i32, %c0_i32_0 : i32, i32
  }
  func.func @transform_2(%arg0: i32) -> (i32, i32) {
    %c0_i32 = arith.constant 0 : i32
    %c0_i32_0 = arith.constant 0 : i32
    %c0_i32_1 = arith.constant 0 : i32
    return %c0_i32, %c0_i32_0 : i32, i32
  }
  func.func @transform_3(%arg0: i32) -> (i32, i32) {
    %c0_i32 = arith.constant 0 : i32
    %c0_i32_0 = arith.constant 0 : i32
    return %arg0, %c0_i32 : i32, i32
  }
}

module attributes {stable_mosaic.version = 11 : i64} {
  func.func @_conv_kernel(%arg0: i32, %arg1: memref<32x256xbf16, #tpu.memory_space<vmem>>, %arg2: memref<256x128xbf16, #tpu.memory_space<vmem>>, %arg3: memref<1x128xf32, #tpu.memory_space<vmem>>, %arg4: memref<32x128xf32, #tpu.memory_space<vmem>>, %arg5: memref<1x8x128xf32, #tpu.memory_space<vmem>>) attributes {dimension_semantics = [#tpu.dimension_semantics<parallel>], iteration_bounds = array<i64: 1>, scalar_prefetch = 0 : i64, scratch_operands = 0 : i64, tpu.core_type = #tpu.core_type<tc>, window_params = [{transform_indices = @transform_0, window_bounds = array<i64: 32, 256>}, {pipeline_mode = #tpu.pipeline_mode<synchronous>, transform_indices = @transform_1, window_bounds = array<i64: 256, 128>}, {pipeline_mode = #tpu.pipeline_mode<synchronous>, transform_indices = @transform_2, window_bounds = array<i64: 1, 128>}, {transform_indices = @transform_3, window_bounds = array<i64: 32, 128>}, {transform_indices = @transform_4, window_bounds = array<i64: 1, 8, 128>}]} {
    %c0 = arith.constant 0 : index
    %c0_0 = arith.constant 0 : index
    %0 = vector.load %arg1[%c0, %c0_0] : memref<32x256xbf16, #tpu.memory_space<vmem>>, vector<32x256xbf16>
    %c0_1 = arith.constant 0 : index
    %c0_2 = arith.constant 0 : index
    %1 = vector.load %arg2[%c0_1, %c0_2] : memref<256x128xbf16, #tpu.memory_space<vmem>>, vector<256x128xbf16>
    %cst = arith.constant dense<0.000000e+00> : vector<32x128xf32>
    %2 = tpu.matmul %0, %1, %cst {dimension_numbers = #tpu.dot_dimension_numbers<[1], [0], [0], [1], [0, 0, 1, 1], [], []>} : vector<32x256xbf16>, vector<256x128xbf16>, vector<32x128xf32> -> vector<32x128xf32>
    %c0_3 = arith.constant 0 : index
    %c0_4 = arith.constant 0 : index
    %3 = vector.load %arg3[%c0_3, %c0_4] : memref<1x128xf32, #tpu.memory_space<vmem>>, vector<1x128xf32>
    %4 = vector.broadcast %3 : vector<1x128xf32> to vector<32x128xf32>
    %5 = arith.addf %2, %4 : vector<32x128xf32>
    %c0_5 = arith.constant 0 : index
    %c0_6 = arith.constant 0 : index
    %6 = vector.load %arg4[%c0_5, %c0_6] : memref<32x128xf32, #tpu.memory_space<vmem>>, vector<32x128xf32>
    tpu.vector_store %arg4[%c0_5, %c0_6], %5 {strides = array<i32>} : memref<32x128xf32, #tpu.memory_space<vmem>>, vector<32x128xf32>,
    %7 = tpu.iota {dimensions = array<i32: 0>} : vector<32x128xi32>
    %c32_i32 = arith.constant 32 : i32
    %8 = arith.muli %arg0, %c32_i32 : i32
    %9 = vector.broadcast %8 : i32 to vector<32x128xi32>
    %10 = arith.addi %7, %9 : vector<32x128xi32>
    %c32_i32_7 = arith.constant 32 : i32
    %11 = vector.broadcast %c32_i32_7 : i32 to vector<32x128xi32>
    %12 = arith.cmpi slt, %10, %11 : vector<32x128xi32>
    %cst_8 = arith.constant 0.000000e+00 : f32
    %13 = vector.broadcast %cst_8 : f32 to vector<32x128xf32>
    %14 = arith.select %12, %5, %13 : vector<32x128xi1>, vector<32x128xf32>
    %cst_9 = arith.constant dense<0.000000e+00> : vector<128xf32>
    %15 = vector.multi_reduction <add>, %14, %cst_9 [0] : vector<32x128xf32> to vector<128xf32>
    %16 = vector.shape_cast %15 : vector<128xf32> to vector<1x128xf32>
    %17 = arith.mulf %14, %14 : vector<32x128xf32>
    %cst_10 = arith.constant dense<0.000000e+00> : vector<128xf32>
    %18 = vector.multi_reduction <add>, %17, %cst_10 [0] : vector<32x128xf32> to vector<128xf32>
    %19 = vector.shape_cast %18 : vector<128xf32> to vector<1x128xf32>
    %20 = tpu.iota {dimensions = array<i32: 0>} : vector<8x128xi32>
    %c0_i32 = arith.constant 0 : i32
    %21 = vector.broadcast %c0_i32 : i32 to vector<8x128xi32>
    %22 = arith.cmpi eq, %20, %21 : vector<8x128xi32>
    %cst_11 = arith.constant 0.000000e+00 : f32
    %23 = vector.shape_cast %16 : vector<1x128xf32> to vector<1x128xf32>
    %24 = vector.broadcast %23 : vector<1x128xf32> to vector<8x128xf32>
    %25 = vector.broadcast %cst_11 : f32 to vector<8x128xf32>
    %26 = arith.select %22, %24, %25 : vector<8x128xi1>, vector<8x128xf32>
    %c1_i32 = arith.constant 1 : i32
    %27 = vector.broadcast %c1_i32 : i32 to vector<8x128xi32>
    %28 = arith.cmpi eq, %20, %27 : vector<8x128xi32>
    %cst_12 = arith.constant 0.000000e+00 : f32
    %29 = vector.shape_cast %19 : vector<1x128xf32> to vector<1x128xf32>
    %30 = vector.broadcast %29 : vector<1x128xf32> to vector<8x128xf32>
    %31 = vector.broadcast %cst_12 : f32 to vector<8x128xf32>
    %32 = arith.select %28, %30, %31 : vector<8x128xi1>, vector<8x128xf32>
    %33 = arith.addf %26, %32 : vector<8x128xf32>
    %c0_13 = arith.constant 0 : index
    %c0_14 = arith.constant 0 : index
    %c0_15 = arith.constant 0 : index
    %34 = vector.load %arg5[%c0_13, %c0_14, %c0_15] : memref<1x8x128xf32, #tpu.memory_space<vmem>>, vector<1x8x128xf32>
    %35 = vector.shape_cast %34 : vector<1x8x128xf32> to vector<8x128xf32>
    %36 = vector.shape_cast %33 : vector<8x128xf32> to vector<1x8x128xf32>
    tpu.vector_store %arg5[%c0_13, %c0_14, %c0_15], %36 {strides = array<i32>} : memref<1x8x128xf32, #tpu.memory_space<vmem>>, vector<1x8x128xf32>,
    return
  }
  func.func @transform_0(%arg0: i32) -> (i32, i32) {
    %c0_i32 = arith.constant 0 : i32
    %c0_i32_0 = arith.constant 0 : i32
    return %arg0, %c0_i32 : i32, i32
  }
  func.func @transform_1(%arg0: i32) -> (i32, i32) {
    %c0_i32 = arith.constant 0 : i32
    %c0_i32_0 = arith.constant 0 : i32
    %c0_i32_1 = arith.constant 0 : i32
    return %c0_i32, %c0_i32_0 : i32, i32
  }
  func.func @transform_2(%arg0: i32) -> (i32, i32) {
    %c0_i32 = arith.constant 0 : i32
    %c0_i32_0 = arith.constant 0 : i32
    %c0_i32_1 = arith.constant 0 : i32
    return %c0_i32, %c0_i32_0 : i32, i32
  }
  func.func @transform_3(%arg0: i32) -> (i32, i32) {
    %c0_i32 = arith.constant 0 : i32
    %c0_i32_0 = arith.constant 0 : i32
    return %arg0, %c0_i32 : i32, i32
  }
  func.func @transform_4(%arg0: i32) -> (i32, i32, i32) {
    %c0_i32 = arith.constant 0 : i32
    %c0_i32_0 = arith.constant 0 : i32
    %c0_i32_1 = arith.constant 0 : i32
    return %arg0, %c0_i32, %c0_i32_0 : i32, i32, i32
  }
}

module attributes {stable_mosaic.version = 11 : i64} {
  func.func @_bn_lrelu_kernel(%arg0: i32, %arg1: memref<32x128xf32, #tpu.memory_space<vmem>>, %arg2: memref<1x128xf32, #tpu.memory_space<vmem>>, %arg3: memref<1x128xf32, #tpu.memory_space<vmem>>, %arg4: memref<32x128xf32, #tpu.memory_space<vmem>>) attributes {dimension_semantics = [#tpu.dimension_semantics<parallel>], iteration_bounds = array<i64: 1>, scalar_prefetch = 0 : i64, scratch_operands = 0 : i64, tpu.core_type = #tpu.core_type<tc>, window_params = [{transform_indices = @transform_0, window_bounds = array<i64: 32, 128>}, {pipeline_mode = #tpu.pipeline_mode<synchronous>, transform_indices = @transform_1, window_bounds = array<i64: 1, 128>}, {pipeline_mode = #tpu.pipeline_mode<synchronous>, transform_indices = @transform_2, window_bounds = array<i64: 1, 128>}, {transform_indices = @transform_3, window_bounds = array<i64: 32, 128>}]} {
    %c0 = arith.constant 0 : index
    %c0_0 = arith.constant 0 : index
    %0 = vector.load %arg1[%c0, %c0_0] : memref<32x128xf32, #tpu.memory_space<vmem>>, vector<32x128xf32>
    %c0_1 = arith.constant 0 : index
    %c0_2 = arith.constant 0 : index
    %1 = vector.load %arg2[%c0_1, %c0_2] : memref<1x128xf32, #tpu.memory_space<vmem>>, vector<1x128xf32>
    %2 = vector.broadcast %1 : vector<1x128xf32> to vector<32x128xf32>
    %3 = arith.mulf %0, %2 : vector<32x128xf32>
    %c0_3 = arith.constant 0 : index
    %c0_4 = arith.constant 0 : index
    %4 = vector.load %arg3[%c0_3, %c0_4] : memref<1x128xf32, #tpu.memory_space<vmem>>, vector<1x128xf32>
    %5 = vector.broadcast %4 : vector<1x128xf32> to vector<32x128xf32>
    %6 = arith.addf %3, %5 : vector<32x128xf32>
    %cst = arith.constant 0.000000e+00 : f32
    %7 = vector.broadcast %cst : f32 to vector<32x128xf32>
    %8 = arith.cmpf ogt, %6, %7 : vector<32x128xf32>
    %cst_5 = arith.constant 2.000000e-01 : f32
    %9 = vector.broadcast %cst_5 : f32 to vector<32x128xf32>
    %10 = arith.mulf %9, %6 : vector<32x128xf32>
    %11 = arith.select %8, %6, %10 : vector<32x128xi1>, vector<32x128xf32>
    %c0_6 = arith.constant 0 : index
    %c0_7 = arith.constant 0 : index
    %12 = vector.load %arg4[%c0_6, %c0_7] : memref<32x128xf32, #tpu.memory_space<vmem>>, vector<32x128xf32>
    tpu.vector_store %arg4[%c0_6, %c0_7], %11 {strides = array<i32>} : memref<32x128xf32, #tpu.memory_space<vmem>>, vector<32x128xf32>,
    return
  }
  func.func @transform_0(%arg0: i32) -> (i32, i32) {
    %c0_i32 = arith.constant 0 : i32
    %c0_i32_0 = arith.constant 0 : i32
    return %arg0, %c0_i32 : i32, i32
  }
  func.func @transform_1(%arg0: i32) -> (i32, i32) {
    %c0_i32 = arith.constant 0 : i32
    %c0_i32_0 = arith.constant 0 : i32
    %c0_i32_1 = arith.constant 0 : i32
    return %c0_i32, %c0_i32_0 : i32, i32
  }
  func.func @transform_2(%arg0: i32) -> (i32, i32) {
    %c0_i32 = arith.constant 0 : i32
    %c0_i32_0 = arith.constant 0 : i32
    %c0_i32_1 = arith.constant 0 : i32
    return %c0_i32, %c0_i32_0 : i32, i32
  }
  func.func @transform_3(%arg0: i32) -> (i32, i32) {
    %c0_i32 = arith.constant 0 : i32
    %c0_i32_0 = arith.constant 0 : i32
    return %arg0, %c0_i32 : i32, i32
  }
}

module attributes {stable_mosaic.version = 11 : i64} {
  func.func @_conv_kernel(%arg0: i32, %arg1: memref<8x512xbf16, #tpu.memory_space<vmem>>, %arg2: memref<512x128xbf16, #tpu.memory_space<vmem>>, %arg3: memref<1x128xf32, #tpu.memory_space<vmem>>, %arg4: memref<8x128xf32, #tpu.memory_space<vmem>>, %arg5: memref<1x8x128xf32, #tpu.memory_space<vmem>>) attributes {dimension_semantics = [#tpu.dimension_semantics<parallel>], iteration_bounds = array<i64: 1>, scalar_prefetch = 0 : i64, scratch_operands = 0 : i64, tpu.core_type = #tpu.core_type<tc>, window_params = [{transform_indices = @transform_0, window_bounds = array<i64: 8, 512>}, {pipeline_mode = #tpu.pipeline_mode<synchronous>, transform_indices = @transform_1, window_bounds = array<i64: 512, 128>}, {pipeline_mode = #tpu.pipeline_mode<synchronous>, transform_indices = @transform_2, window_bounds = array<i64: 1, 128>}, {transform_indices = @transform_3, window_bounds = array<i64: 8, 128>}, {transform_indices = @transform_4, window_bounds = array<i64: 1, 8, 128>}]} {
    %c0 = arith.constant 0 : index
    %c0_0 = arith.constant 0 : index
    %0 = vector.load %arg1[%c0, %c0_0] : memref<8x512xbf16, #tpu.memory_space<vmem>>, vector<8x512xbf16>
    %c0_1 = arith.constant 0 : index
    %c0_2 = arith.constant 0 : index
    %1 = vector.load %arg2[%c0_1, %c0_2] : memref<512x128xbf16, #tpu.memory_space<vmem>>, vector<512x128xbf16>
    %cst = arith.constant dense<0.000000e+00> : vector<8x128xf32>
    %2 = tpu.matmul %0, %1, %cst {dimension_numbers = #tpu.dot_dimension_numbers<[1], [0], [0], [1], [0, 0, 1, 1], [], []>} : vector<8x512xbf16>, vector<512x128xbf16>, vector<8x128xf32> -> vector<8x128xf32>
    %c0_3 = arith.constant 0 : index
    %c0_4 = arith.constant 0 : index
    %3 = vector.load %arg3[%c0_3, %c0_4] : memref<1x128xf32, #tpu.memory_space<vmem>>, vector<1x128xf32>
    %4 = vector.broadcast %3 : vector<1x128xf32> to vector<8x128xf32>
    %5 = arith.addf %2, %4 : vector<8x128xf32>
    %c0_5 = arith.constant 0 : index
    %c0_6 = arith.constant 0 : index
    %6 = vector.load %arg4[%c0_5, %c0_6] : memref<8x128xf32, #tpu.memory_space<vmem>>, vector<8x128xf32>
    tpu.vector_store %arg4[%c0_5, %c0_6], %5 {strides = array<i32>} : memref<8x128xf32, #tpu.memory_space<vmem>>, vector<8x128xf32>,
    %7 = tpu.iota {dimensions = array<i32: 0>} : vector<8x128xi32>
    %c8_i32 = arith.constant 8 : i32
    %8 = arith.muli %arg0, %c8_i32 : i32
    %9 = vector.broadcast %8 : i32 to vector<8x128xi32>
    %10 = arith.addi %7, %9 : vector<8x128xi32>
    %c8_i32_7 = arith.constant 8 : i32
    %11 = vector.broadcast %c8_i32_7 : i32 to vector<8x128xi32>
    %12 = arith.cmpi slt, %10, %11 : vector<8x128xi32>
    %cst_8 = arith.constant 0.000000e+00 : f32
    %13 = vector.broadcast %cst_8 : f32 to vector<8x128xf32>
    %14 = arith.select %12, %5, %13 : vector<8x128xi1>, vector<8x128xf32>
    %cst_9 = arith.constant dense<0.000000e+00> : vector<128xf32>
    %15 = vector.multi_reduction <add>, %14, %cst_9 [0] : vector<8x128xf32> to vector<128xf32>
    %16 = vector.shape_cast %15 : vector<128xf32> to vector<1x128xf32>
    %17 = arith.mulf %14, %14 : vector<8x128xf32>
    %cst_10 = arith.constant dense<0.000000e+00> : vector<128xf32>
    %18 = vector.multi_reduction <add>, %17, %cst_10 [0] : vector<8x128xf32> to vector<128xf32>
    %19 = vector.shape_cast %18 : vector<128xf32> to vector<1x128xf32>
    %20 = tpu.iota {dimensions = array<i32: 0>} : vector<8x128xi32>
    %c0_i32 = arith.constant 0 : i32
    %21 = vector.broadcast %c0_i32 : i32 to vector<8x128xi32>
    %22 = arith.cmpi eq, %20, %21 : vector<8x128xi32>
    %cst_11 = arith.constant 0.000000e+00 : f32
    %23 = vector.shape_cast %16 : vector<1x128xf32> to vector<1x128xf32>
    %24 = vector.broadcast %23 : vector<1x128xf32> to vector<8x128xf32>
    %25 = vector.broadcast %cst_11 : f32 to vector<8x128xf32>
    %26 = arith.select %22, %24, %25 : vector<8x128xi1>, vector<8x128xf32>
    %c1_i32 = arith.constant 1 : i32
    %27 = vector.broadcast %c1_i32 : i32 to vector<8x128xi32>
    %28 = arith.cmpi eq, %20, %27 : vector<8x128xi32>
    %cst_12 = arith.constant 0.000000e+00 : f32
    %29 = vector.shape_cast %19 : vector<1x128xf32> to vector<1x128xf32>
    %30 = vector.broadcast %29 : vector<1x128xf32> to vector<8x128xf32>
    %31 = vector.broadcast %cst_12 : f32 to vector<8x128xf32>
    %32 = arith.select %28, %30, %31 : vector<8x128xi1>, vector<8x128xf32>
    %33 = arith.addf %26, %32 : vector<8x128xf32>
    %c0_13 = arith.constant 0 : index
    %c0_14 = arith.constant 0 : index
    %c0_15 = arith.constant 0 : index
    %34 = vector.load %arg5[%c0_13, %c0_14, %c0_15] : memref<1x8x128xf32, #tpu.memory_space<vmem>>, vector<1x8x128xf32>
    %35 = vector.shape_cast %34 : vector<1x8x128xf32> to vector<8x128xf32>
    %36 = vector.shape_cast %33 : vector<8x128xf32> to vector<1x8x128xf32>
    tpu.vector_store %arg5[%c0_13, %c0_14, %c0_15], %36 {strides = array<i32>} : memref<1x8x128xf32, #tpu.memory_space<vmem>>, vector<1x8x128xf32>,
    return
  }
  func.func @transform_0(%arg0: i32) -> (i32, i32) {
    %c0_i32 = arith.constant 0 : i32
    %c0_i32_0 = arith.constant 0 : i32
    return %arg0, %c0_i32 : i32, i32
  }
  func.func @transform_1(%arg0: i32) -> (i32, i32) {
    %c0_i32 = arith.constant 0 : i32
    %c0_i32_0 = arith.constant 0 : i32
    %c0_i32_1 = arith.constant 0 : i32
    return %c0_i32, %c0_i32_0 : i32, i32
  }
  func.func @transform_2(%arg0: i32) -> (i32, i32) {
    %c0_i32 = arith.constant 0 : i32
    %c0_i32_0 = arith.constant 0 : i32
    %c0_i32_1 = arith.constant 0 : i32
    return %c0_i32, %c0_i32_0 : i32, i32
  }
  func.func @transform_3(%arg0: i32) -> (i32, i32) {
    %c0_i32 = arith.constant 0 : i32
    %c0_i32_0 = arith.constant 0 : i32
    return %arg0, %c0_i32 : i32, i32
  }
  func.func @transform_4(%arg0: i32) -> (i32, i32, i32) {
    %c0_i32 = arith.constant 0 : i32
    %c0_i32_0 = arith.constant 0 : i32
    %c0_i32_1 = arith.constant 0 : i32
    return %arg0, %c0_i32, %c0_i32_0 : i32, i32, i32
  }
}

module attributes {stable_mosaic.version = 11 : i64} {
  func.func @_bn_lrelu_kernel(%arg0: i32, %arg1: memref<8x128xf32, #tpu.memory_space<vmem>>, %arg2: memref<1x128xf32, #tpu.memory_space<vmem>>, %arg3: memref<1x128xf32, #tpu.memory_space<vmem>>, %arg4: memref<8x128xf32, #tpu.memory_space<vmem>>) attributes {dimension_semantics = [#tpu.dimension_semantics<parallel>], iteration_bounds = array<i64: 1>, scalar_prefetch = 0 : i64, scratch_operands = 0 : i64, tpu.core_type = #tpu.core_type<tc>, window_params = [{transform_indices = @transform_0, window_bounds = array<i64: 8, 128>}, {pipeline_mode = #tpu.pipeline_mode<synchronous>, transform_indices = @transform_1, window_bounds = array<i64: 1, 128>}, {pipeline_mode = #tpu.pipeline_mode<synchronous>, transform_indices = @transform_2, window_bounds = array<i64: 1, 128>}, {transform_indices = @transform_3, window_bounds = array<i64: 8, 128>}]} {
    %c0 = arith.constant 0 : index
    %c0_0 = arith.constant 0 : index
    %0 = vector.load %arg1[%c0, %c0_0] : memref<8x128xf32, #tpu.memory_space<vmem>>, vector<8x128xf32>
    %c0_1 = arith.constant 0 : index
    %c0_2 = arith.constant 0 : index
    %1 = vector.load %arg2[%c0_1, %c0_2] : memref<1x128xf32, #tpu.memory_space<vmem>>, vector<1x128xf32>
    %2 = vector.broadcast %1 : vector<1x128xf32> to vector<8x128xf32>
    %3 = arith.mulf %0, %2 : vector<8x128xf32>
    %c0_3 = arith.constant 0 : index
    %c0_4 = arith.constant 0 : index
    %4 = vector.load %arg3[%c0_3, %c0_4] : memref<1x128xf32, #tpu.memory_space<vmem>>, vector<1x128xf32>
    %5 = vector.broadcast %4 : vector<1x128xf32> to vector<8x128xf32>
    %6 = arith.addf %3, %5 : vector<8x128xf32>
    %cst = arith.constant 0.000000e+00 : f32
    %7 = vector.broadcast %cst : f32 to vector<8x128xf32>
    %8 = arith.cmpf ogt, %6, %7 : vector<8x128xf32>
    %cst_5 = arith.constant 2.000000e-01 : f32
    %9 = vector.broadcast %cst_5 : f32 to vector<8x128xf32>
    %10 = arith.mulf %9, %6 : vector<8x128xf32>
    %11 = arith.select %8, %6, %10 : vector<8x128xi1>, vector<8x128xf32>
    %c0_6 = arith.constant 0 : index
    %c0_7 = arith.constant 0 : index
    %12 = vector.load %arg4[%c0_6, %c0_7] : memref<8x128xf32, #tpu.memory_space<vmem>>, vector<8x128xf32>
    tpu.vector_store %arg4[%c0_6, %c0_7], %11 {strides = array<i32>} : memref<8x128xf32, #tpu.memory_space<vmem>>, vector<8x128xf32>,
    return
  }
  func.func @transform_0(%arg0: i32) -> (i32, i32) {
    %c0_i32 = arith.constant 0 : i32
    %c0_i32_0 = arith.constant 0 : i32
    return %arg0, %c0_i32 : i32, i32
  }
  func.func @transform_1(%arg0: i32) -> (i32, i32) {
    %c0_i32 = arith.constant 0 : i32
    %c0_i32_0 = arith.constant 0 : i32
    %c0_i32_1 = arith.constant 0 : i32
    return %c0_i32, %c0_i32_0 : i32, i32
  }
  func.func @transform_2(%arg0: i32) -> (i32, i32) {
    %c0_i32 = arith.constant 0 : i32
    %c0_i32_0 = arith.constant 0 : i32
    %c0_i32_1 = arith.constant 0 : i32
    return %c0_i32, %c0_i32_0 : i32, i32
  }
  func.func @transform_3(%arg0: i32) -> (i32, i32) {
    %c0_i32 = arith.constant 0 : i32
    %c0_i32_0 = arith.constant 0 : i32
    return %arg0, %c0_i32 : i32, i32
  }
}

module attributes {stable_mosaic.version = 11 : i64} {
  func.func @_conv_kernel(%arg0: i32, %arg1: memref<8x1024xbf16, #tpu.memory_space<vmem>>, %arg2: memref<1024x128xbf16, #tpu.memory_space<vmem>>, %arg3: memref<1x128xf32, #tpu.memory_space<vmem>>, %arg4: memref<8x128xf32, #tpu.memory_space<vmem>>, %arg5: memref<1x8x128xf32, #tpu.memory_space<vmem>>) attributes {dimension_semantics = [#tpu.dimension_semantics<parallel>], iteration_bounds = array<i64: 1>, scalar_prefetch = 0 : i64, scratch_operands = 0 : i64, tpu.core_type = #tpu.core_type<tc>, window_params = [{transform_indices = @transform_0, window_bounds = array<i64: 8, 1024>}, {pipeline_mode = #tpu.pipeline_mode<synchronous>, transform_indices = @transform_1, window_bounds = array<i64: 1024, 128>}, {pipeline_mode = #tpu.pipeline_mode<synchronous>, transform_indices = @transform_2, window_bounds = array<i64: 1, 128>}, {transform_indices = @transform_3, window_bounds = array<i64: 8, 128>}, {transform_indices = @transform_4, window_bounds = array<i64: 1, 8, 128>}]} {
    %c0 = arith.constant 0 : index
    %c0_0 = arith.constant 0 : index
    %0 = vector.load %arg1[%c0, %c0_0] : memref<8x1024xbf16, #tpu.memory_space<vmem>>, vector<8x1024xbf16>
    %c0_1 = arith.constant 0 : index
    %c0_2 = arith.constant 0 : index
    %1 = vector.load %arg2[%c0_1, %c0_2] : memref<1024x128xbf16, #tpu.memory_space<vmem>>, vector<1024x128xbf16>
    %cst = arith.constant dense<0.000000e+00> : vector<8x128xf32>
    %2 = tpu.matmul %0, %1, %cst {dimension_numbers = #tpu.dot_dimension_numbers<[1], [0], [0], [1], [0, 0, 1, 1], [], []>} : vector<8x1024xbf16>, vector<1024x128xbf16>, vector<8x128xf32> -> vector<8x128xf32>
    %c0_3 = arith.constant 0 : index
    %c0_4 = arith.constant 0 : index
    %3 = vector.load %arg3[%c0_3, %c0_4] : memref<1x128xf32, #tpu.memory_space<vmem>>, vector<1x128xf32>
    %4 = vector.broadcast %3 : vector<1x128xf32> to vector<8x128xf32>
    %5 = arith.addf %2, %4 : vector<8x128xf32>
    %6 = arith.negf %5 : vector<8x128xf32>
    %7 = math.exp %6 : vector<8x128xf32>
    %cst_5 = arith.constant 1.000000e+00 : f32
    %8 = vector.broadcast %cst_5 : f32 to vector<8x128xf32>
    %9 = arith.addf %8, %7 : vector<8x128xf32>
    %10 = arith.divf %8, %9 : vector<8x128xf32>
    %c0_6 = arith.constant 0 : index
    %c0_7 = arith.constant 0 : index
    %11 = vector.load %arg4[%c0_6, %c0_7] : memref<8x128xf32, #tpu.memory_space<vmem>>, vector<8x128xf32>
    tpu.vector_store %arg4[%c0_6, %c0_7], %10 {strides = array<i32>} : memref<8x128xf32, #tpu.memory_space<vmem>>, vector<8x128xf32>,
    %12 = tpu.iota {dimensions = array<i32: 0>} : vector<8x128xi32>
    %c8_i32 = arith.constant 8 : i32
    %13 = arith.muli %arg0, %c8_i32 : i32
    %14 = vector.broadcast %13 : i32 to vector<8x128xi32>
    %15 = arith.addi %12, %14 : vector<8x128xi32>
    %c2_i32 = arith.constant 2 : i32
    %16 = vector.broadcast %c2_i32 : i32 to vector<8x128xi32>
    %17 = arith.cmpi slt, %15, %16 : vector<8x128xi32>
    %cst_8 = arith.constant 0.000000e+00 : f32
    %18 = vector.broadcast %cst_8 : f32 to vector<8x128xf32>
    %19 = arith.select %17, %10, %18 : vector<8x128xi1>, vector<8x128xf32>
    %cst_9 = arith.constant dense<0.000000e+00> : vector<128xf32>
    %20 = vector.multi_reduction <add>, %19, %cst_9 [0] : vector<8x128xf32> to vector<128xf32>
    %21 = vector.shape_cast %20 : vector<128xf32> to vector<1x128xf32>
    %22 = arith.mulf %19, %19 : vector<8x128xf32>
    %cst_10 = arith.constant dense<0.000000e+00> : vector<128xf32>
    %23 = vector.multi_reduction <add>, %22, %cst_10 [0] : vector<8x128xf32> to vector<128xf32>
    %24 = vector.shape_cast %23 : vector<128xf32> to vector<1x128xf32>
    %25 = tpu.iota {dimensions = array<i32: 0>} : vector<8x128xi32>
    %c0_i32 = arith.constant 0 : i32
    %26 = vector.broadcast %c0_i32 : i32 to vector<8x128xi32>
    %27 = arith.cmpi eq, %25, %26 : vector<8x128xi32>
    %cst_11 = arith.constant 0.000000e+00 : f32
    %28 = vector.shape_cast %21 : vector<1x128xf32> to vector<1x128xf32>
    %29 = vector.broadcast %28 : vector<1x128xf32> to vector<8x128xf32>
    %30 = vector.broadcast %cst_11 : f32 to vector<8x128xf32>
    %31 = arith.select %27, %29, %30 : vector<8x128xi1>, vector<8x128xf32>
    %c1_i32 = arith.constant 1 : i32
    %32 = vector.broadcast %c1_i32 : i32 to vector<8x128xi32>
    %33 = arith.cmpi eq, %25, %32 : vector<8x128xi32>
    %cst_12 = arith.constant 0.000000e+00 : f32
    %34 = vector.shape_cast %24 : vector<1x128xf32> to vector<1x128xf32>
    %35 = vector.broadcast %34 : vector<1x128xf32> to vector<8x128xf32>
    %36 = vector.broadcast %cst_12 : f32 to vector<8x128xf32>
    %37 = arith.select %33, %35, %36 : vector<8x128xi1>, vector<8x128xf32>
    %38 = arith.addf %31, %37 : vector<8x128xf32>
    %c0_13 = arith.constant 0 : index
    %c0_14 = arith.constant 0 : index
    %c0_15 = arith.constant 0 : index
    %39 = vector.load %arg5[%c0_13, %c0_14, %c0_15] : memref<1x8x128xf32, #tpu.memory_space<vmem>>, vector<1x8x128xf32>
    %40 = vector.shape_cast %39 : vector<1x8x128xf32> to vector<8x128xf32>
    %41 = vector.shape_cast %38 : vector<8x128xf32> to vector<1x8x128xf32>
    tpu.vector_store %arg5[%c0_13, %c0_14, %c0_15], %41 {strides = array<i32>} : memref<1x8x128xf32, #tpu.memory_space<vmem>>, vector<1x8x128xf32>,
    return
  }
  func.func @transform_0(%arg0: i32) -> (i32, i32) {
    %c0_i32 = arith.constant 0 : i32
    %c0_i32_0 = arith.constant 0 : i32
    return %arg0, %c0_i32 : i32, i32
  }
  func.func @transform_1(%arg0: i32) -> (i32, i32) {
    %c0_i32 = arith.constant 0 : i32
    %c0_i32_0 = arith.constant 0 : i32
    %c0_i32_1 = arith.constant 0 : i32
    return %c0_i32, %c0_i32_0 : i32, i32
  }
  func.func @transform_2(%arg0: i32) -> (i32, i32) {
    %c0_i32 = arith.constant 0 : i32
    %c0_i32_0 = arith.constant 0 : i32
    %c0_i32_1 = arith.constant 0 : i32
    return %c0_i32, %c0_i32_0 : i32, i32
  }
  func.func @transform_3(%arg0: i32) -> (i32, i32) {
    %c0_i32 = arith.constant 0 : i32
    %c0_i32_0 = arith.constant 0 : i32
    return %arg0, %c0_i32 : i32, i32
  }
  func.func @transform_4(%arg0: i32) -> (i32, i32, i32) {
    %c0_i32 = arith.constant 0 : i32
    %c0_i32_0 = arith.constant 0 : i32
    %c0_i32_1 = arith.constant 0 : i32
    return %arg0, %c0_i32, %c0_i32_0 : i32, i32, i32
  }
}

</mosaic_0001>

<llo_original>
// kernel: discriminator_forward.8
$region0: #{discriminator_forward.8}
  #allocation0 [shape = 'u32[]', space=smem, size = 0x4, offset = 0x4, fixed_abs, tag = 'smem constant byte address 0x4 - core index']
  #allocation1 [shape = 'u32[144,128]{1,0:T(1,128)}', space=vmem, size = 0x12000, scoped, tag = 'internal scratch']
  %s0 = inlined_call_operand.vmem [shape: bf16[512,128], index: 0, kind: input, shape index: {}]
  %s1 = inlined_call_operand.vmem [shape: bf16[128,128], index: 1, kind: input, shape index: {}]
  %s2 = inlined_call_operand.vmem [shape: f32[1,128], index: 2, kind: input, shape index: {}]
  %s3 = inlined_call_operand.vmem [shape: f32[512,128], index: 3, kind: output, shape index: {0}]
  %s4 = inlined_call_operand.hbm [shape: f32[2,8,128], index: 4, kind: output, shape index: {1}]
  %5 = xla_tuple %s3, %s4
  %s6 = sld [smem:[#allocation0]]
  $region53: #{discriminator_forward.8} parent=0
    _
  %s8 = ssub.s32 1, %s6
  %s9 = scalar_select 0, %s8, %s6
  $region1: #{discriminator_forward.8} parent=0
    #allocation2 [shape = 'u8[8192]{0}', space=vmem, size = 0x2000, scoped, tag = 'output window, operand 1']
    #allocation3 [shape = 's32[2]{0}', space=sflag, size = 0x8, scoped, tag = 'scoped memory for discriminator_forward.8']
    %10 = vsyncpa [#allocation3], 0
    %s11 = scalar_lea.sflag [#allocation3], 1
    %12 = vsyncpa %s11, 0
    loop: start=0, step=1, limit=4
    $region2: #{discriminator_forward.8} parent=1 // loop_pre_header
      _
    $region3: #{discriminator_forward.8} parent=1 // loop_header
      %s14 = sphi 0, %s18
      %p15 = scmp.ge.s32.totalorder %s14, 4
      %s24 = sphi 0, %s26
      %s27 = sphi 0, %s24
      %s28 = sphi 0, %s27
      %s44 = sphi 0, %s28
      %s48 = sphi 0, %s48
      %s50 = sphi 0, %s48
      %s51 = sphi 0, %s50
      %s65 = sphi 0, %s51
      %s69 = sphi 0, %s69
      %s71 = sphi 0, %s69
      %s72 = sphi 0, %s71
      %s86 = sphi 0, %s72
      %s92 = sphi 0, %s94
      %s95 = sphi 0, %s92
      %s96 = sphi 0, %s95
      %s112 = sphi 0, %s96
      %s118 = sphi 0, %s120
      %s121 = sphi 0, %s118
      %s122 = sphi 0, %s121
      %s138 = sphi 0, %s122
    $region4: #{discriminator_forward.8} parent=1 // loop_header_branch
      %17 = sbr.rel (%p15) target = $region8
    $region5: #{discriminator_forward.8} parent=1 // loop_body
      %s19 = ssub.s32 %s14, 1
      %s20 = ssub.s32 %s14, 2
      %s21 = sadd.s32 %s14, 1
      %s22 = ssub.s32 %s14, %s21
      %p23 = scmp.eq.s32.totalorder %s22, 0
      %s25 = sadd.s32 %s24, 1
      %s26 = scalar_select %p23, %s24, %s25
      %p29 = pneg %p23
      %p30 = scmp.eq.s32.totalorder %s14, 1
      %p31 = por %p29, %p30
      %p32 = scmp.ne.s32.totalorder %s24, %s27
      %p33 = scmp.eq.s32.totalorder %s14, 0
      %p34 = por %p32, %p33
      %p35 = scmp.ne.s32.totalorder %s24, %s27
      %p36 = scmp.eq.s32.totalorder %s19, 1
      %p37 = por %p35, %p36
      %p38 = scmp.ne.s32.totalorder %s27, %s28
      %p39 = scmp.eq.s32.totalorder %s19, 0
      %p40 = por %p38, %p39
      %p41 = scmp.ne.s32.totalorder %s27, %s28
      %p42 = scmp.eq.s32.totalorder %s20, 1
      %p43 = por %p41, %p42
      %p45 = scmp.ne.s32.totalorder %s28, %s44
      %p46 = scmp.eq.s32.totalorder %s20, 0
      %p47 = por %p45, %p46
      %s49 = sadd.s32 %s48, 1
      %p52 = scmp.eq.s32.totalorder %s14, 1
      %p53 = scmp.ne.s32.totalorder %s48, %s50
      %p54 = scmp.eq.s32.totalorder %s14, 0
      %p55 = por %p53, %p54
      %p56 = scmp.ne.s32.totalorder %s48, %s50
      %p57 = scmp.eq.s32.totalorder %s19, 1
      %p58 = por %p56, %p57
      %p59 = scmp.ne.s32.totalorder %s50, %s51
      %p60 = scmp.eq.s32.totalorder %s19, 0
      %p61 = por %p59, %p60
      %p62 = scmp.ne.s32.totalorder %s50, %s51
      %p63 = scmp.eq.s32.totalorder %s20, 1
      %p64 = por %p62, %p63
      %p66 = scmp.ne.s32.totalorder %s51, %s65
      %p67 = scmp.eq.s32.totalorder %s20, 0
      %p68 = por %p66, %p67
      %s70 = sadd.s32 %s69, 1
      %p73 = scmp.eq.s32.totalorder %s14, 1
      %p74 = scmp.ne.s32.totalorder %s69, %s71
      %p75 = scmp.eq.s32.totalorder %s14, 0
      %p76 = por %p74, %p75
      %p77 = scmp.ne.s32.totalorder %s69, %s71
      %p78 = scmp.eq.s32.totalorder %s19, 1
      %p79 = por %p77, %p78
      %p80 = scmp.ne.s32.totalorder %s71, %s72
      %p81 = scmp.eq.s32.totalorder %s19, 0
      %p82 = por %p80, %p81
      %p83 = scmp.ne.s32.totalorder %s71, %s72
      %p84 = scmp.eq.s32.totalorder %s20, 1
      %p85 = por %p83, %p84
      %p87 = scmp.ne.s32.totalorder %s72, %s86
      %p88 = scmp.eq.s32.totalorder %s20, 0
      %p89 = por %p87, %p88
      %s90 = ssub.s32 %s14, %s21
      %p91 = scmp.eq.s32.totalorder %s90, 0
      %s93 = sadd.s32 %s92, 1
      %s94 = scalar_select %p91, %s92, %s93
      %p97 = pneg %p91
      %p98 = scmp.eq.s32.totalorder %s14, 1
      %p99 = por %p97, %p98
      %p100 = scmp.ne.s32.totalorder %s92, %s95
      %p101 = scmp.eq.s32.totalorder %s14, 0
      %p102 = por %p100, %p101
      %p103 = scmp.ne.s32.totalorder %s92, %s95
      %p104 = scmp.eq.s32.totalorder %s19, 1
      %p105 = por %p103, %p104
      %p106 = scmp.ne.s32.totalorder %s95, %s96
      %p107 = scmp.eq.s32.totalorder %s19, 0
      %p108 = por %p106, %p107
      %p109 = scmp.ne.s32.totalorder %s95, %s96
      %p110 = scmp.eq.s32.totalorder %s20, 1
      %p111 = por %p109, %p110
      %p113 = scmp.ne.s32.totalorder %s96, %s112
      %p114 = scmp.eq.s32.totalorder %s20, 0
      %p115 = por %p113, %p114
      %s116 = ssub.s32 %s14, %s21
      %p117 = scmp.eq.s32.totalorder %s116, 0
      %s119 = sadd.s32 %s118, 1
      %s120 = scalar_select %p117, %s118, %s119
      %p123 = pneg %p117
      %p124 = scmp.eq.s32.totalorder %s14, 1
      %p125 = por %p123, %p124
      %p126 = scmp.ne.s32.totalorder %s118, %s121
      %p127 = scmp.eq.s32.totalorder %s14, 0
      %p128 = por %p126, %p127
      %p129 = scmp.ne.s32.totalorder %s118, %s121
      %p130 = scmp.eq.s32.totalorder %s19, 1
      %p131 = por %p129, %p130
      %p132 = scmp.ne.s32.totalorder %s121, %s122
      %p133 = scmp.eq.s32.totalorder %s19, 0
      %p134 = por %p132, %p133
      %p135 = scmp.ne.s32.totalorder %s121, %s122
      %p136 = scmp.eq.s32.totalorder %s20, 1
      %p137 = por %p135, %p136
      %p139 = scmp.ne.s32.totalorder %s122, %s138
      %p140 = scmp.eq.s32.totalorder %s20, 0
      %p141 = por %p139, %p140
      %p142 = scmp.le.s32.totalorder 1, %s14
      %p143 = scmp.lt.s32.totalorder %s14, 3
      %p144 = pnand %p142, %p143
      %p145 = pneg %p144
      // Predicated region
      $region9: #{discriminator_forward.8} parent=5 // pred_check
        _
      $region10: #{discriminator_forward.8} parent=5 // pred_check_branch
        %147 = sbr.rel (%p144) target = $region12
      $region11: #{discriminator_forward.8} parent=5 // pred_region
        %s148 = ssub.s32 %s14, 1
        // Predicated region
        $region13: #{discriminator_forward.8} parent=11 // pred_check
          %p149 = pneg %p61
        $region14: #{discriminator_forward.8} parent=11 // pred_check_branch
          %151 = sbr.rel (%p149) target = $region16
        $region15: #{discriminator_forward.8} parent=11 // pred_region
          _
        $region16: #{discriminator_forward.8} parent=11 // pred_fallthru
          _
        // Predicated region
        $region17: #{discriminator_forward.8} parent=11 // pred_check
          %p152 = pneg %p82
        $region18: #{discriminator_forward.8} parent=11 // pred_check_branch
          %154 = sbr.rel (%p152) target = $region20
        $region19: #{discriminator_forward.8} parent=11 // pred_region
          _
        $region20: #{discriminator_forward.8} parent=11 // pred_fallthru
          _
      $region12: #{discriminator_forward.8} parent=5 // pred_fallthru
        _
      %p155 = scmp.lt.s32.totalorder %s14, 2
      // Predicated region
      $region21: #{discriminator_forward.8} parent=5 // pred_check
        %p156 = pneg %p155
      $region22: #{discriminator_forward.8} parent=5 // pred_check_branch
        %158 = sbr.rel (%p156) target = $region24
      $region23: #{discriminator_forward.8} parent=5 // pred_region
        // Predicated region
        $region25: #{discriminator_forward.8} parent=23 // pred_check
          %p159 = pneg %p34
        $region26: #{discriminator_forward.8} parent=23 // pred_check_branch
          %161 = sbr.rel (%p159) target = $region28
        $region27: #{discriminator_forward.8} parent=23 // pred_region
          %s162 = smul.u32 32, %s14
          %p163 = scmp.lt.s32.totalorder %s162, 63
          %s164 = scalar_select %p163, %s162, 63
          %s165 = smul.addr %s164, 4
          %s166 = scalar_lea.vmem %s0, %s165
          %s167 = smul.u32 32, %s14
        $region28: #{discriminator_forward.8} parent=23 // pred_fallthru
          _
      $region24: #{discriminator_forward.8} parent=5 // pred_fallthru
        _
      %p168 = scmp.le.s32.totalorder 1, %s14
      %p169 = scmp.lt.s32.totalorder %s14, 3
      %p170 = pnand %p168, %p169
      %p171 = pneg %p170
      // Predicated region
      $region29: #{discriminator_forward.8} parent=5 // pred_check
        _
      $region30: #{discriminator_forward.8} parent=5 // pred_check_branch
        %173 = sbr.rel (%p170) target = $region32
      $region31: #{discriminator_forward.8} parent=5 // pred_region
        %s174 = ssub.s32 %s14, 1
        %s175 = smul.u32 32, %s19
        %p176 = scmp.lt.s32.totalorder %s175, 63
        %s177 = scalar_select %p176, %s175, 63
        %s178 = smul.addr %s177, 4
        %s179 = scalar_lea.vmem %s0, %s178
        %p180 = pneg %p40
        %p181 = pneg %p37
        %p182 = pneg %p61
        %p183 = pneg %p58
        %p184 = pneg %p82
        %p185 = pneg %p79
        %p186 = pneg %p108
        %p187 = pneg %p105
        %s188 = smul.u32 32, %s19
        %p189 = scmp.lt.s32.totalorder %s188, 63
        %s190 = scalar_select %p189, %s188, 63
        %s191 = smul.addr %s190, 8
        %s192 = scalar_lea.vmem %s3, %s191
        %p193 = pneg %p134
        %p194 = pneg %p131
        %s195 = sand.u32 %s121, 1
        %s196 = scalar_lea.sflag [#allocation3], %s195
        %s197 = sand.u32 %s121, 1
        %s198 = smul.addr %s197, 8
        %s199 = scalar_lea.vmem [#allocation2], %s198
        %s200 = smul.u32 32, %s19
        %p201 = scmp.lt.s32.totalorder %s200, 63
        %s202 = scalar_select %p201, %s200, 63
        %s203 = smul.addr %s202, 4
        %s204 = scalar_lea.vmem %s0, %s203
        %s205 = smul.u32 32, %s19
        %s206 = smul.u32 32, %s19
        %p207 = scmp.lt.s32.totalorder %s206, 63
        %s208 = scalar_select %p207, %s206, 63
        %s209 = smul.addr %s208, 8
        %s210 = scalar_lea.vmem %s3, %s209
        %s211 = smul.u32 32, %s19
        %v213 = vld [vmem:[%s204] sm:$0xf]
        %v214 = vld [vmem:[%s204 + $0x4] sm:$0xf]
        %v215 = vld [vmem:[%s204 + $0x8] sm:$0xf]
        %v216 = vld [vmem:[%s204 + $0xc] sm:$0xf]
        %v217 = vld [vmem:[%s204 + $0x10] sm:$0xf]
        %v218 = vld [vmem:[%s204 + $0x14] sm:$0xf]
        %v219 = vld [vmem:[%s204 + $0x18] sm:$0xf]
        %v220 = vld [vmem:[%s204 + $0x1c] sm:$0xf]
        %v221 = vld [vmem:[%s204 + $0x20] sm:$0xf]
        %v222 = vld [vmem:[%s204 + $0x24] sm:$0xf]
        %v223 = vld [vmem:[%s204 + $0x28] sm:$0xf]
        %v224 = vld [vmem:[%s204 + $0x2c] sm:$0xf]
        %v225 = vld [vmem:[%s204 + $0x30] sm:$0xf]
        %v226 = vld [vmem:[%s204 + $0x34] sm:$0xf]
        %v227 = vld [vmem:[%s204 + $0x38] sm:$0xf]
        %v228 = vld [vmem:[%s204 + $0x3c] sm:$0xf]
        %v229 = vld [vmem:[%s204 + $0x40] sm:$0xf]
        %v230 = vld [vmem:[%s204 + $0x44] sm:$0xf]
        %v231 = vld [vmem:[%s204 + $0x48] sm:$0xf]
        %v232 = vld [vmem:[%s204 + $0x4c] sm:$0xf]
        %v233 = vld [vmem:[%s204 + $0x50] sm:$0xf]
        %v234 = vld [vmem:[%s204 + $0x54] sm:$0xf]
        %v235 = vld [vmem:[%s204 + $0x58] sm:$0xf]
        %v236 = vld [vmem:[%s204 + $0x5c] sm:$0xf]
        %v237 = vld [vmem:[%s204 + $0x60] sm:$0xf]
        %v238 = vld [vmem:[%s204 + $0x64] sm:$0xf]
        %v239 = vld [vmem:[%s204 + $0x68] sm:$0xf]
        %v240 = vld [vmem:[%s204 + $0x6c] sm:$0xf]
        %v241 = vld [vmem:[%s204 + $0x70] sm:$0xf]
        %v242 = vld [vmem:[%s204 + $0x74] sm:$0xf]
        %v243 = vld [vmem:[%s204 + $0x78] sm:$0xf]
        %v244 = vld [vmem:[%s204 + $0x7c] sm:$0xf]
        %v245 = vld [vmem:[%s1] sm:$0xf]
        %v246 = vld [vmem:[%s1 + $0x4] sm:$0xf]
        %v247 = vld [vmem:[%s1 + $0x8] sm:$0xf]
        %v248 = vld [vmem:[%s1 + $0xc] sm:$0xf]
        %v249 = vld [vmem:[%s1 + $0x10] sm:$0xf]
        %v250 = vld [vmem:[%s1 + $0x14] sm:$0xf]
        %v251 = vld [vmem:[%s1 + $0x18] sm:$0xf]
        %v252 = vld [vmem:[%s1 + $0x1c] sm:$0xf]
        %v253 = vld [vmem:[%s1 + $0x20] sm:$0xf]
        %v254 = vld [vmem:[%s1 + $0x24] sm:$0xf]
        %v255 = vld [vmem:[%s1 + $0x28] sm:$0xf]
        %v256 = vld [vmem:[%s1 + $0x2c] sm:$0xf]
        %v257 = vld [vmem:[%s1 + $0x30] sm:$0xf]
        %v258 = vld [vmem:[%s1 + $0x34] sm:$0xf]
        %v259 = vld [vmem:[%s1 + $0x38] sm:$0xf]
        %v260 = vld [vmem:[%s1 + $0x3c] sm:$0xf]
        %v261 = vld [vmem:[%s2] sm:$0x1]
        %v263 = vlaneseq
        %v264 = vshrl.u32 %v263, 7
        %v265 = vsub.s32 0, %v264
        %v266 = vrot.slane %v261, %v265
        %v300 = vunpack.c.l.b16 %v213
        %v301 = vunpack.c.l.b16 %v214
        %v302 = vunpack.c.l.b16 %v215
        %v303 = vunpack.c.l.b16 %v216
        %v304 = vunpack.c.l.b16 %v217
        %v305 = vunpack.c.l.b16 %v218
        %v306 = vunpack.c.l.b16 %v219
        %v307 = vunpack.c.l.b16 %v220
        %v308 = vunpack.c.l.b16 %v221
        %v309 = vunpack.c.l.b16 %v222
        %v310 = vunpack.c.l.b16 %v223
        %v311 = vunpack.c.l.b16 %v224
        %v312 = vunpack.c.l.b16 %v225
        %v313 = vunpack.c.l.b16 %v226
        %v314 = vunpack.c.l.b16 %v227
        %v315 = vunpack.c.l.b16 %v228
        %v316 = vunpack.c.l.b16 %v229
        %v317 = vunpack.c.l.b16 %v230
        %v318 = vunpack.c.l.b16 %v231
        %v319 = vunpack.c.l.b16 %v232
        %v320 = vunpack.c.l.b16 %v233
        %v321 = vunpack.c.l.b16 %v234
        %v322 = vunpack.c.l.b16 %v235
        %v323 = vunpack.c.l.b16 %v236
        %v324 = vunpack.c.l.b16 %v237
        %v325 = vunpack.c.l.b16 %v238
        %v326 = vunpack.c.l.b16 %v239
        %v327 = vunpack.c.l.b16 %v240
        %v328 = vunpack.c.l.b16 %v241
        %v329 = vunpack.c.l.b16 %v242
        %v330 = vunpack.c.l.b16 %v243
        %v331 = vunpack.c.l.b16 %v244
        %v332 = vpack.c.b16 %v301, %v300
        %v333 = vpack.c.b16 %v303, %v302
        %v334 = vpack.c.b16 %v305, %v304
        %v335 = vpack.c.b16 %v307, %v306
        %v336 = vpack.c.b16 %v309, %v308
        %v337 = vpack.c.b16 %v311, %v310
        %v338 = vpack.c.b16 %v313, %v312
        %v339 = vpack.c.b16 %v315, %v314
        %v340 = vpack.c.b16 %v317, %v316
        %v341 = vpack.c.b16 %v319, %v318
        %v342 = vpack.c.b16 %v321, %v320
        %v343 = vpack.c.b16 %v323, %v322
        %v344 = vpack.c.b16 %v325, %v324
        %v345 = vpack.c.b16 %v327, %v326
        %v346 = vpack.c.b16 %v329, %v328
        %v347 = vpack.c.b16 %v331, %v330
        %v380 = vunpack.c.l.b16 %v245
        %v381 = vunpack.c.l.b16 %v246
        %v382 = vunpack.c.l.b16 %v247
        %v383 = vunpack.c.l.b16 %v248
        %v384 = vunpack.c.l.b16 %v249
        %v385 = vunpack.c.l.b16 %v250
        %v386 = vunpack.c.l.b16 %v251
        %v387 = vunpack.c.l.b16 %v252
        %v388 = vunpack.c.l.b16 %v253
        %v389 = vunpack.c.l.b16 %v254
        %v390 = vunpack.c.l.b16 %v255
        %v391 = vunpack.c.l.b16 %v256
        %v392 = vunpack.c.l.b16 %v257
        %v393 = vunpack.c.l.b16 %v258
        %v394 = vunpack.c.l.b16 %v259
        %v395 = vunpack.c.l.b16 %v260
        %v396 = vpack.c.b16 %v381, %v380
        %v397 = vpack.c.b16 %v383, %v382
        %v398 = vpack.c.b16 %v385, %v384
        %v399 = vpack.c.b16 %v387, %v386
        %v400 = vpack.c.b16 %v389, %v388
        %v401 = vpack.c.b16 %v391, %v390
        %v402 = vpack.c.b16 %v393, %v392
        %v403 = vpack.c.b16 %v395, %v394
        %412 = vmatprep.subr.bf16.mxu0 0
        %413 = vmatpush1.bf16.msra.mxu0 %v396
        %414 = vmatprep.subr.bf16.mxu0 0
        %415 = vmatpush1.bf16.msra.mxu0 %v397
        %416 = vmatprep.subr.bf16.mxu0 0
        %417 = vmatpush1.bf16.msra.mxu0 %v398
        %418 = vmatprep.subr.bf16.mxu0 0
        %419 = vmatpush1.bf16.msra.mxu0 %v399
        %420 = vmatprep.subr.bf16.mxu0 0
        %421 = vmatpush1.bf16.msra.mxu0 %v400
        %422 = vmatprep.subr.bf16.mxu0 0
        %423 = vmatpush1.bf16.msra.mxu0 %v401
        %424 = vmatprep.subr.bf16.mxu0 0
        %425 = vmatpush1.bf16.msra.mxu0 %v402
        %426 = vmatprep.subr.bf16.mxu0 0
        %427 = vmatpush1.bf16.msra.mxu0 %v403
        %428 = vmatprep.subr.bf16.mxu0 0
        %429 = vmatpush1.bf16.msra.mxu0 0
        %430 = vmatprep.subr.bf16.mxu0 0
        %431 = vmatpush1.bf16.msra.mxu0 0
        %432 = vmatprep.subr.bf16.mxu0 0
        %433 = vmatpush1.bf16.msra.mxu0 0
        %434 = vmatprep.subr.bf16.mxu0 0
        %435 = vmatpush1.bf16.msra.mxu0 0
        %436 = vmatprep.subr.bf16.mxu0 0
        %437 = vmatpush1.bf16.msra.mxu0 0
        %438 = vmatprep.subr.bf16.mxu0 0
        %439 = vmatpush1.bf16.msra.mxu0 0
        %440 = vmatprep.subr.bf16.mxu0 0
        %441 = vmatpush1.bf16.msra.mxu0 0
        %442 = vmatprep.subr.bf16.mxu0 0
        %443 = vmatpush1.bf16.msra.mxu0 0
        %444 = vmatprep.mubr.bf16.mxu0 0
        %445 = vmatmul.mubr.bf16.gmra.mrb[0].mxu0 %v332
        %v446 = vpop.f32.mrb[0].mxu0
        %v447 = vadd.f32 %v266, %v446
        %v448 = vpop.f32.mrb[0].mxu0
        %v449 = vpop.f32.mrb[0].mxu0
        %v450 = vadd.f32 %v266, %v449
        %v451 = vpop.f32.mrb[0].mxu0
        %452 = vmatprep.mubr.bf16.mxu0 0
        %453 = vmatmul.mubr.bf16.gmra.mrb[0].mxu0 %v333
        %v454 = vpop.f32.mrb[0].mxu0
        %v455 = vadd.f32 %v266, %v454
        %v456 = vpop.f32.mrb[0].mxu0
        %v457 = vpop.f32.mrb[0].mxu0
        %v458 = vadd.f32 %v266, %v457
        %v459 = vpop.f32.mrb[0].mxu0
        %460 = vmatprep.mubr.bf16.mxu0 0
        %461 = vmatmul.mubr.bf16.gmra.mrb[0].mxu0 %v334
        %v462 = vpop.f32.mrb[0].mxu0
        %v463 = vadd.f32 %v266, %v462
        %v464 = vpop.f32.mrb[0].mxu0
        %v465 = vpop.f32.mrb[0].mxu0
        %v466 = vadd.f32 %v266, %v465
        %v467 = vpop.f32.mrb[0].mxu0
        %468 = vmatprep.mubr.bf16.mxu0 0
        %469 = vmatmul.mubr.bf16.gmra.mrb[0].mxu0 %v335
        %v470 = vpop.f32.mrb[0].mxu0
        %v471 = vadd.f32 %v266, %v470
        %v472 = vpop.f32.mrb[0].mxu0
        %v473 = vpop.f32.mrb[0].mxu0
        %v474 = vadd.f32 %v266, %v473
        %v475 = vpop.f32.mrb[0].mxu0
        %476 = vmatprep.mubr.bf16.mxu0 0
        %477 = vmatmul.mubr.bf16.gmra.mrb[0].mxu0 %v336
        %v478 = vpop.f32.mrb[0].mxu0
        %v479 = vadd.f32 %v266, %v478
        %v480 = vpop.f32.mrb[0].mxu0
        %v481 = vpop.f32.mrb[0].mxu0
        %v482 = vadd.f32 %v266, %v481
        %v483 = vpop.f32.mrb[0].mxu0
        %484 = vmatprep.mubr.bf16.mxu0 0
        %485 = vmatmul.mubr.bf16.gmra.mrb[0].mxu0 %v337
        %v486 = vpop.f32.mrb[0].mxu0
        %v487 = vadd.f32 %v266, %v486
        %v488 = vpop.f32.mrb[0].mxu0
        %v489 = vpop.f32.mrb[0].mxu0
        %v490 = vadd.f32 %v266, %v489
        %v491 = vpop.f32.mrb[0].mxu0
        %492 = vmatprep.mubr.bf16.mxu0 0
        %493 = vmatmul.mubr.bf16.gmra.mrb[0].mxu0 %v338
        %v494 = vpop.f32.mrb[0].mxu0
        %v495 = vadd.f32 %v266, %v494
        %v496 = vpop.f32.mrb[0].mxu0
        %v497 = vpop.f32.mrb[0].mxu0
        %v498 = vadd.f32 %v266, %v497
        %v499 = vpop.f32.mrb[0].mxu0
        %500 = vmatprep.mubr.bf16.mxu0 0
        %501 = vmatmul.mubr.bf16.gmra.mrb[0].mxu0 %v339
        %v502 = vpop.f32.mrb[0].mxu0
        %v503 = vadd.f32 %v266, %v502
        %v504 = vpop.f32.mrb[0].mxu0
        %v505 = vpop.f32.mrb[0].mxu0
        %v506 = vadd.f32 %v266, %v505
        %v507 = vpop.f32.mrb[0].mxu0
        %508 = vmatprep.mubr.bf16.mxu0 0
        %509 = vmatmul.mubr.bf16.gmra.mrb[0].mxu0 %v340
        %v510 = vpop.f32.mrb[0].mxu0
        %v511 = vadd.f32 %v266, %v510
        %v512 = vpop.f32.mrb[0].mxu0
        %v513 = vpop.f32.mrb[0].mxu0
        %v514 = vadd.f32 %v266, %v513
        %v515 = vpop.f32.mrb[0].mxu0
        %516 = vmatprep.mubr.bf16.mxu0 0
        %517 = vmatmul.mubr.bf16.gmra.mrb[0].mxu0 %v341
        %v518 = vpop.f32.mrb[0].mxu0
        %v519 = vadd.f32 %v266, %v518
        %v520 = vpop.f32.mrb[0].mxu0
        %v521 = vpop.f32.mrb[0].mxu0
        %v522 = vadd.f32 %v266, %v521
        %v523 = vpop.f32.mrb[0].mxu0
        %524 = vmatprep.mubr.bf16.mxu0 0
        %525 = vmatmul.mubr.bf16.gmra.mrb[0].mxu0 %v342
        %v526 = vpop.f32.mrb[0].mxu0
        %v527 = vadd.f32 %v266, %v526
        %v528 = vpop.f32.mrb[0].mxu0
        %v529 = vpop.f32.mrb[0].mxu0
        %v530 = vadd.f32 %v266, %v529
        %v531 = vpop.f32.mrb[0].mxu0
        %532 = vmatprep.mubr.bf16.mxu0 0
        %533 = vmatmul.mubr.bf16.gmra.mrb[0].mxu0 %v343
        %v534 = vpop.f32.mrb[0].mxu0
        %v535 = vadd.f32 %v266, %v534
        %v536 = vpop.f32.mrb[0].mxu0
        %v537 = vpop.f32.mrb[0].mxu0
        %v538 = vadd.f32 %v266, %v537
        %v539 = vpop.f32.mrb[0].mxu0
        %540 = vmatprep.mubr.bf16.mxu0 0
        %541 = vmatmul.mubr.bf16.gmra.mrb[0].mxu0 %v344
        %v542 = vpop.f32.mrb[0].mxu0
        %v543 = vadd.f32 %v266, %v542
        %v544 = vpop.f32.mrb[0].mxu0
        %v545 = vpop.f32.mrb[0].mxu0
        %v546 = vadd.f32 %v266, %v545
        %v547 = vpop.f32.mrb[0].mxu0
        %548 = vmatprep.mubr.bf16.mxu0 0
        %549 = vmatmul.mubr.bf16.gmra.mrb[0].mxu0 %v345
        %v550 = vpop.f32.mrb[0].mxu0
        %v551 = vadd.f32 %v266, %v550
        %v552 = vpop.f32.mrb[0].mxu0
        %v553 = vpop.f32.mrb[0].mxu0
        %v554 = vadd.f32 %v266, %v553
        %v555 = vpop.f32.mrb[0].mxu0
        %556 = vmatprep.mubr.bf16.mxu0 0
        %557 = vmatmul.mubr.bf16.gmra.mrb[0].mxu0 %v346
        %v558 = vpop.f32.mrb[0].mxu0
        %v559 = vadd.f32 %v266, %v558
        %v560 = vpop.f32.mrb[0].mxu0
        %v561 = vpop.f32.mrb[0].mxu0
        %v562 = vadd.f32 %v266, %v561
        %v563 = vpop.f32.mrb[0].mxu0
        %564 = vmatprep.mubr.bf16.mxu0 0
        %565 = vmatmul.mubr.bf16.gmra.mrb[0].mxu0 %v347
        %v566 = vpop.f32.mrb[0].mxu0
        %v567 = vadd.f32 %v266, %v566
        %v568 = vpop.f32.mrb[0].mxu0
        %v569 = vpop.f32.mrb[0].mxu0
        %v570 = vadd.f32 %v266, %v569
        %v571 = vpop.f32.mrb[0].mxu0
        %572 = vdwg.mxu0
        %vm573 = vcmp.gt.f32.partialorder %v447, 0.0
        %vm574 = vcmp.gt.f32.partialorder %v450, 0.0
        %vm575 = vcmp.gt.f32.partialorder %v455, 0.0
        %vm576 = vcmp.gt.f32.partialorder %v458, 0.0
        %vm577 = vcmp.gt.f32.partialorder %v463, 0.0
        %vm578 = vcmp.gt.f32.partialorder %v466, 0.0
        %vm579 = vcmp.gt.f32.partialorder %v471, 0.0
        %vm580 = vcmp.gt.f32.partialorder %v474, 0.0
        %vm581 = vcmp.gt.f32.partialorder %v479, 0.0
        %vm582 = vcmp.gt.f32.partialorder %v482, 0.0
        %vm583 = vcmp.gt.f32.partialorder %v487, 0.0
        %vm584 = vcmp.gt.f32.partialorder %v490, 0.0
        %vm585 = vcmp.gt.f32.partialorder %v495, 0.0
        %vm586 = vcmp.gt.f32.partialorder %v498, 0.0
        %vm587 = vcmp.gt.f32.partialorder %v503, 0.0
        %vm588 = vcmp.gt.f32.partialorder %v506, 0.0
        %vm589 = vcmp.gt.f32.partialorder %v511, 0.0
        %vm590 = vcmp.gt.f32.partialorder %v514, 0.0
        %vm591 = vcmp.gt.f32.partialorder %v519, 0.0
        %vm592 = vcmp.gt.f32.partialorder %v522, 0.0
        %vm593 = vcmp.gt.f32.partialorder %v527, 0.0
        %vm594 = vcmp.gt.f32.partialorder %v530, 0.0
        %vm595 = vcmp.gt.f32.partialorder %v535, 0.0
        %vm596 = vcmp.gt.f32.partialorder %v538, 0.0
        %vm597 = vcmp.gt.f32.partialorder %v543, 0.0
        %vm598 = vcmp.gt.f32.partialorder %v546, 0.0
        %vm599 = vcmp.gt.f32.partialorder %v551, 0.0
        %vm600 = vcmp.gt.f32.partialorder %v554, 0.0
        %vm601 = vcmp.gt.f32.partialorder %v559, 0.0
        %vm602 = vcmp.gt.f32.partialorder %v562, 0.0
        %vm603 = vcmp.gt.f32.partialorder %v567, 0.0
        %vm604 = vcmp.gt.f32.partialorder %v570, 0.0
        %v605 = vmul.f32 %v447, 0.2
        %v606 = vmul.f32 %v450, 0.2
        %v607 = vmul.f32 %v455, 0.2
        %v608 = vmul.f32 %v458, 0.2
        %v609 = vmul.f32 %v463, 0.2
        %v610 = vmul.f32 %v466, 0.2
        %v611 = vmul.f32 %v471, 0.2
        %v612 = vmul.f32 %v474, 0.2
        %v613 = vmul.f32 %v479, 0.2
        %v614 = vmul.f32 %v482, 0.2
        %v615 = vmul.f32 %v487, 0.2
        %v616 = vmul.f32 %v490, 0.2
        %v617 = vmul.f32 %v495, 0.2
        %v618 = vmul.f32 %v498, 0.2
        %v619 = vmul.f32 %v503, 0.2
        %v620 = vmul.f32 %v506, 0.2
        %v621 = vmul.f32 %v511, 0.2
        %v622 = vmul.f32 %v514, 0.2
        %v623 = vmul.f32 %v519, 0.2
        %v624 = vmul.f32 %v522, 0.2
        %v625 = vmul.f32 %v527, 0.2
        %v626 = vmul.f32 %v530, 0.2
        %v627 = vmul.f32 %v535, 0.2
        %v628 = vmul.f32 %v538, 0.2
        %v629 = vmul.f32 %v543, 0.2
        %v630 = vmul.f32 %v546, 0.2
        %v631 = vmul.f32 %v551, 0.2
        %v632 = vmul.f32 %v554, 0.2
        %v633 = vmul.f32 %v559, 0.2
        %v634 = vmul.f32 %v562, 0.2
        %v635 = vmul.f32 %v567, 0.2
        %v636 = vmul.f32 %v570, 0.2
        %v637 = vsel %vm573, %v447, %v605
        %v638 = vsel %vm574, %v450, %v606
        %v639 = vsel %vm575, %v455, %v607
        %v640 = vsel %vm576, %v458, %v608
        %v641 = vsel %vm577, %v463, %v609
        %v642 = vsel %vm578, %v466, %v610
        %v643 = vsel %vm579, %v471, %v611
        %v644 = vsel %vm580, %v474, %v612
        %v645 = vsel %vm581, %v479, %v613
        %v646 = vsel %vm582, %v482, %v614
        %v647 = vsel %vm583, %v487, %v615
        %v648 = vsel %vm584, %v490, %v616
        %v649 = vsel %vm585, %v495, %v617
        %v650 = vsel %vm586, %v498, %v618
        %v651 = vsel %vm587, %v503, %v619
        %v652 = vsel %vm588, %v506, %v620
        %v653 = vsel %vm589, %v511, %v621
        %v654 = vsel %vm590, %v514, %v622
        %v655 = vsel %vm591, %v519, %v623
        %v656 = vsel %vm592, %v522, %v624
        %v657 = vsel %vm593, %v527, %v625
        %v658 = vsel %vm594, %v530, %v626
        %v659 = vsel %vm595, %v535, %v627
        %v660 = vsel %vm596, %v538, %v628
        %v661 = vsel %vm597, %v543, %v629
        %v662 = vsel %vm598, %v546, %v630
        %v663 = vsel %vm599, %v551, %v631
        %v664 = vsel %vm600, %v554, %v632
        %v665 = vsel %vm601, %v559, %v633
        %v666 = vsel %vm602, %v562, %v634
        %v667 = vsel %vm603, %v567, %v635
        %v668 = vsel %vm604, %v570, %v636
        %669 = vst [vmem:[%s210] sm:$0xff] %v637
        %670 = vst [vmem:[%s210 + $0x8] sm:$0xff] %v638
        %671 = vst [vmem:[%s210 + $0x10] sm:$0xff] %v639
        %672 = vst [vmem:[%s210 + $0x18] sm:$0xff] %v640
        %673 = vst [vmem:[%s210 + $0x20] sm:$0xff] %v641
        %674 = vst [vmem:[%s210 + $0x28] sm:$0xff] %v642
        %675 = vst [vmem:[%s210 + $0x30] sm:$0xff] %v643
        %676 = vst [vmem:[%s210 + $0x38] sm:$0xff] %v644
        %677 = vst [vmem:[%s210 + $0x40] sm:$0xff] %v645
        %678 = vst [vmem:[%s210 + $0x48] sm:$0xff] %v646
        %679 = vst [vmem:[%s210 + $0x50] sm:$0xff] %v647
        %680 = vst [vmem:[%s210 + $0x58] sm:$0xff] %v648
        %681 = vst [vmem:[%s210 + $0x60] sm:$0xff] %v649
        %682 = vst [vmem:[%s210 + $0x68] sm:$0xff] %v650
        %683 = vst [vmem:[%s210 + $0x70] sm:$0xff] %v651
        %684 = vst [vmem:[%s210 + $0x78] sm:$0xff] %v652
        %685 = vst [vmem:[%s210 + $0x80] sm:$0xff] %v653
        %686 = vst [vmem:[%s210 + $0x88] sm:$0xff] %v654
        %687 = vst [vmem:[%s210 + $0x90] sm:$0xff] %v655
        %688 = vst [vmem:[%s210 + $0x98] sm:$0xff] %v656
        %689 = vst [vmem:[%s210 + $0xa0] sm:$0xff] %v657
        %690 = vst [vmem:[%s210 + $0xa8] sm:$0xff] %v658
        %691 = vst [vmem:[%s210 + $0xb0] sm:$0xff] %v659
        %692 = vst [vmem:[%s210 + $0xb8] sm:$0xff] %v660
        %693 = vst [vmem:[%s210 + $0xc0] sm:$0xff] %v661
        %694 = vst [vmem:[%s210 + $0xc8] sm:$0xff] %v662
        %695 = vst [vmem:[%s210 + $0xd0] sm:$0xff] %v663
        %696 = vst [vmem:[%s210 + $0xd8] sm:$0xff] %v664
        %697 = vst [vmem:[%s210 + $0xe0] sm:$0xff] %v665
        %698 = vst [vmem:[%s210 + $0xe8] sm:$0xff] %v666
        %699 = vst [vmem:[%s210 + $0xf0] sm:$0xff] %v667
        %700 = vst [vmem:[%s210 + $0xf8] sm:$0xff] %v668
        %v701 = vlaneseq
        %v702 = vshrl.u32 %v701, 7
        %v703 = vadd.s32 %v702, 8
        %v704 = vadd.s32 %v702, 16
        %v705 = vadd.s32 %v702, 24
        %v706 = vadd.s32 %v702, 32
        %v707 = vadd.s32 %v702, 40
        %v708 = vadd.s32 %v702, 48
        %v709 = vadd.s32 %v702, 56
        %v710 = vadd.s32 %v702, 64
        %v711 = vadd.s32 %v702, 72
        %v712 = vadd.s32 %v702, 80
        %v713 = vadd.s32 %v702, 88
        %v714 = vadd.s32 %v702, 96
        %v715 = vadd.s32 %v702, 104
        %v716 = vadd.s32 %v702, 112
        %v717 = vadd.s32 %v702, 120
        %v718 = vadd.s32 %v702, 128
        %v719 = vadd.s32 %v702, 136
        %v720 = vadd.s32 %v702, 144
        %v721 = vadd.s32 %v702, 152
        %v722 = vadd.s32 %v702, 160
        %v723 = vadd.s32 %v702, 168
        %v724 = vadd.s32 %v702, 176
        %v725 = vadd.s32 %v702, 184
        %v726 = vadd.s32 %v702, 192
        %v727 = vadd.s32 %v702, 200
        %v728 = vadd.s32 %v702, 208
        %v729 = vadd.s32 %v702, 216
        %v730 = vadd.s32 %v702, 224
        %v731 = vadd.s32 %v702, 232
        %v732 = vadd.s32 %v702, 240
        %v733 = vadd.s32 %v702, 248
        %s734 = smul.u32 %s19, 256
        %v735 = vstv %s734
        %v736 = vadd.s32 %v702, %v735
        %v737 = vadd.s32 %v703, %v735
        %v738 = vadd.s32 %v704, %v735
        %v739 = vadd.s32 %v705, %v735
        %v740 = vadd.s32 %v706, %v735
        %v741 = vadd.s32 %v707, %v735
        %v742 = vadd.s32 %v708, %v735
        %v743 = vadd.s32 %v709, %v735
        %v744 = vadd.s32 %v710, %v735
        %v745 = vadd.s32 %v711, %v735
        %v746 = vadd.s32 %v712, %v735
        %v747 = vadd.s32 %v713, %v735
        %v748 = vadd.s32 %v714, %v735
        %v749 = vadd.s32 %v715, %v735
        %v750 = vadd.s32 %v716, %v735
        %v751 = vadd.s32 %v717, %v735
        %v752 = vadd.s32 %v718, %v735
        %v753 = vadd.s32 %v719, %v735
        %v754 = vadd.s32 %v720, %v735
        %v755 = vadd.s32 %v721, %v735
        %v756 = vadd.s32 %v722, %v735
        %v757 = vadd.s32 %v723, %v735
        %v758 = vadd.s32 %v724, %v735
        %v759 = vadd.s32 %v725, %v735
        %v760 = vadd.s32 %v726, %v735
        %v761 = vadd.s32 %v727, %v735
        %v762 = vadd.s32 %v728, %v735
        %v763 = vadd.s32 %v729, %v735
        %v764 = vadd.s32 %v730, %v735
        %v765 = vadd.s32 %v731, %v735
        %v766 = vadd.s32 %v732, %v735
        %v767 = vadd.s32 %v733, %v735
        %vm768 = vcmp.lt.s32.totalorder %v736, 512
        %vm769 = vcmp.lt.s32.totalorder %v737, 512
        %vm770 = vcmp.lt.s32.totalorder %v738, 512
        %vm771 = vcmp.lt.s32.totalorder %v739, 512
        %vm772 = vcmp.lt.s32.totalorder %v740, 512
        %vm773 = vcmp.lt.s32.totalorder %v741, 512
        %vm774 = vcmp.lt.s32.totalorder %v742, 512
        %vm775 = vcmp.lt.s32.totalorder %v743, 512
        %vm776 = vcmp.lt.s32.totalorder %v744, 512
        %vm777 = vcmp.lt.s32.totalorder %v745, 512
        %vm778 = vcmp.lt.s32.totalorder %v746, 512
        %vm779 = vcmp.lt.s32.totalorder %v747, 512
        %vm780 = vcmp.lt.s32.totalorder %v748, 512
        %vm781 = vcmp.lt.s32.totalorder %v749, 512
        %vm782 = vcmp.lt.s32.totalorder %v750, 512
        %vm783 = vcmp.lt.s32.totalorder %v751, 512
        %vm784 = vcmp.lt.s32.totalorder %v752, 512
        %vm785 = vcmp.lt.s32.totalorder %v753, 512
        %vm786 = vcmp.lt.s32.totalorder %v754, 512
        %vm787 = vcmp.lt.s32.totalorder %v755, 512
        %vm788 = vcmp.lt.s32.totalorder %v756, 512
        %vm789 = vcmp.lt.s32.totalorder %v757, 512
        %vm790 = vcmp.lt.s32.totalorder %v758, 512
        %vm791 = vcmp.lt.s32.totalorder %v759, 512
        %vm792 = vcmp.lt.s32.totalorder %v760, 512
        %vm793 = vcmp.lt.s32.totalorder %v761, 512
        %vm794 = vcmp.lt.s32.totalorder %v762, 512
        %vm795 = vcmp.lt.s32.totalorder %v763, 512
        %vm796 = vcmp.lt.s32.totalorder %v764, 512
        %vm797 = vcmp.lt.s32.totalorder %v765, 512
        %vm798 = vcmp.lt.s32.totalorder %v766, 512
        %vm799 = vcmp.lt.s32.totalorder %v767, 512
        %v800 = vsel %vm768, %v637, 0.0
        %v801 = vsel %vm769, %v638, 0.0
        %v802 = vsel %vm770, %v639, 0.0
        %v803 = vsel %vm771, %v640, 0.0
        %v804 = vsel %vm772, %v641, 0.0
        %v805 = vsel %vm773, %v642, 0.0
        %v806 = vsel %vm774, %v643, 0.0
        %v807 = vsel %vm775, %v644, 0.0
        %v808 = vsel %vm776, %v645, 0.0
        %v809 = vsel %vm777, %v646, 0.0
        %v810 = vsel %vm778, %v647, 0.0
        %v811 = vsel %vm779, %v648, 0.0
        %v812 = vsel %vm780, %v649, 0.0
        %v813 = vsel %vm781, %v650, 0.0
        %v814 = vsel %vm782, %v651, 0.0
        %v815 = vsel %vm783, %v652, 0.0
        %v816 = vsel %vm784, %v653, 0.0
        %v817 = vsel %vm785, %v654, 0.0
        %v818 = vsel %vm786, %v655, 0.0
        %v819 = vsel %vm787, %v656, 0.0
        %v820 = vsel %vm788, %v657, 0.0
        %v821 = vsel %vm789, %v658, 0.0
        %v822 = vsel %vm790, %v659, 0.0
        %v823 = vsel %vm791, %v660, 0.0
        %v824 = vsel %vm792, %v661, 0.0
        %v825 = vsel %vm793, %v662, 0.0
        %v826 = vsel %vm794, %v663, 0.0
        %v827 = vsel %vm795, %v664, 0.0
        %v828 = vsel %vm796, %v665, 0.0
        %v829 = vsel %vm797, %v666, 0.0
        %v830 = vsel %vm798, %v667, 0.0
        %v831 = vsel %vm799, %v668, 0.0
        %v832 = vadd.f32 %v800, %v801
        %v833 = vadd.f32 %v832, %v802
        %v834 = vadd.f32 %v833, %v803
        %v835 = vadd.f32 %v834, %v804
        %v836 = vadd.f32 %v835, %v805
        %v837 = vadd.f32 %v836, %v806
        %v838 = vadd.f32 %v837, %v807
        %v839 = vadd.f32 %v838, %v808
        %v840 = vadd.f32 %v839, %v809
        %v841 = vadd.f32 %v840, %v810
        %v842 = vadd.f32 %v841, %v811
        %v843 = vadd.f32 %v842, %v812
        %v844 = vadd.f32 %v843, %v813
        %v845 = vadd.f32 %v844, %v814
        %v846 = vadd.f32 %v845, %v815
        %v847 = vadd.f32 %v846, %v816
        %v848 = vadd.f32 %v847, %v817
        %v849 = vadd.f32 %v848, %v818
        %v850 = vadd.f32 %v849, %v819
        %v851 = vadd.f32 %v850, %v820
        %v852 = vadd.f32 %v851, %v821
        %v853 = vadd.f32 %v852, %v822
        %v854 = vadd.f32 %v853, %v823
        %v855 = vadd.f32 %v854, %v824
        %v856 = vadd.f32 %v855, %v825
        %v857 = vadd.f32 %v856, %v826
        %v858 = vadd.f32 %v857, %v827
        %v859 = vadd.f32 %v858, %v828
        %v860 = vadd.f32 %v859, %v829
        %v861 = vadd.f32 %v860, %v830
        %v862 = vadd.f32 %v861, %v831
        %v863 = vrot.slane %v862, 4
        %v864 = vadd.f32 %v862, %v863
        %v865 = vrot.slane %v864, 2
        %v866 = vadd.f32 %v864, %v865
        %v867 = vrot.slane %v866, 1
        %v868 = vadd.f32 %v866, %v867
        %v869 = vmul.f32 %v800, %v800
        %v870 = vmul.f32 %v801, %v801
        %v871 = vmul.f32 %v802, %v802
        %v872 = vmul.f32 %v803, %v803
        %v873 = vmul.f32 %v804, %v804
        %v874 = vmul.f32 %v805, %v805
        %v875 = vmul.f32 %v806, %v806
        %v876 = vmul.f32 %v807, %v807
        %v877 = vmul.f32 %v808, %v808
        %v878 = vmul.f32 %v809, %v809
        %v879 = vmul.f32 %v810, %v810
        %v880 = vmul.f32 %v811, %v811
        %v881 = vmul.f32 %v812, %v812
        %v882 = vmul.f32 %v813, %v813
        %v883 = vmul.f32 %v814, %v814
        %v884 = vmul.f32 %v815, %v815
        %v885 = vmul.f32 %v816, %v816
        %v886 = vmul.f32 %v817, %v817
        %v887 = vmul.f32 %v818, %v818
        %v888 = vmul.f32 %v819, %v819
        %v889 = vmul.f32 %v820, %v820
        %v890 = vmul.f32 %v821, %v821
        %v891 = vmul.f32 %v822, %v822
        %v892 = vmul.f32 %v823, %v823
        %v893 = vmul.f32 %v824, %v824
        %v894 = vmul.f32 %v825, %v825
        %v895 = vmul.f32 %v826, %v826
        %v896 = vmul.f32 %v827, %v827
        %v897 = vmul.f32 %v828, %v828
        %v898 = vmul.f32 %v829, %v829
        %v899 = vmul.f32 %v830, %v830
        %v900 = vmul.f32 %v831, %v831
        %v901 = vadd.f32 %v869, %v870
        %v902 = vadd.f32 %v901, %v871
        %v903 = vadd.f32 %v902, %v872
        %v904 = vadd.f32 %v903, %v873
        %v905 = vadd.f32 %v904, %v874
        %v906 = vadd.f32 %v905, %v875
        %v907 = vadd.f32 %v906, %v876
        %v908 = vadd.f32 %v907, %v877
        %v909 = vadd.f32 %v908, %v878
        %v910 = vadd.f32 %v909, %v879
        %v911 = vadd.f32 %v910, %v880
        %v912 = vadd.f32 %v911, %v881
        %v913 = vadd.f32 %v912, %v882
        %v914 = vadd.f32 %v913, %v883
        %v915 = vadd.f32 %v914, %v884
        %v916 = vadd.f32 %v915, %v885
        %v917 = vadd.f32 %v916, %v886
        %v918 = vadd.f32 %v917, %v887
        %v919 = vadd.f32 %v918, %v888
        %v920 = vadd.f32 %v919, %v889
        %v921 = vadd.f32 %v920, %v890
        %v922 = vadd.f32 %v921, %v891
        %v923 = vadd.f32 %v922, %v892
        %v924 = vadd.f32 %v923, %v893
        %v925 = vadd.f32 %v924, %v894
        %v926 = vadd.f32 %v925, %v895
        %v927 = vadd.f32 %v926, %v896
        %v928 = vadd.f32 %v927, %v897
        %v929 = vadd.f32 %v928, %v898
        %v930 = vadd.f32 %v929, %v899
        %v931 = vadd.f32 %v930, %v900
        %v932 = vrot.slane %v931, 4
        %v933 = vadd.f32 %v931, %v932
        %v934 = vrot.slane %v933, 2
        %v935 = vadd.f32 %v933, %v934
        %v936 = vrot.slane %v935, 1
        %v937 = vadd.f32 %v935, %v936
        %vm938 = vcmp.eq.s32.totalorder %v702, 0
        %v939 = vsel %vm938, %v868, 0.0
        %vm940 = vcmp.eq.s32.totalorder %v702, 1
        %v941 = vsel %vm940, %v937, 0.0
        %v942 = vadd.f32 %v939, %v941
        %943 = vst [vmem:[%s199] sm:$0xff] %v942
        %s944 = smul.u32 32, %s19
        %p945 = scmp.lt.s32.totalorder %s944, 63
        %s946 = scalar_select %p945, %s944, 63
        %s947 = smul.addr %s946, 8
        %s948 = scalar_lea.vmem %s3, %s947
        %s949 = sand.u32 %s121, 1
        %s950 = scalar_lea.sflag [#allocation3], %s949
        %s951 = sand.u32 %s121, 1
        %s952 = smul.addr %s951, 8
        %s953 = scalar_lea.vmem [#allocation2], %s952
        // Predicated region
        $region33: #{discriminator_forward.8} parent=31 // pred_check
          %p954 = pneg %p105
        $region34: #{discriminator_forward.8} parent=31 // pred_check_branch
          %956 = sbr.rel (%p954) target = $region36
        $region35: #{discriminator_forward.8} parent=31 // pred_region
          %s957 = smul.u32 32, %s19
        $region36: #{discriminator_forward.8} parent=31 // pred_fallthru
          _
        // Predicated region
        $region37: #{discriminator_forward.8} parent=31 // pred_check
          %p958 = pneg %p131
        $region38: #{discriminator_forward.8} parent=31 // pred_check_branch
          %960 = sbr.rel (%p958) target = $region40
        $region39: #{discriminator_forward.8} parent=31 // pred_region
          %s962 = ssub.s32 128, 128
          %963 = vsyncadd %s950, %s962
          %s964 = smul.addr %s19, 128
          %s965 = scalar_lea.hbm %s4, %s964
          %s967 = sshll.u32 %s953, 4
          %s968 = int_to_ptr.vmem [resolvable:$true] %s967
          %970 = dma.vmem_to_hbm [thread:$0]  %s968, 128, %s965, %s950
        $region40: #{discriminator_forward.8} parent=31 // pred_fallthru
          _
      $region32: #{discriminator_forward.8} parent=5 // pred_fallthru
        _
      %p971 = scmp.le.s32.totalorder 2, %s14
      // Predicated region
      $region41: #{discriminator_forward.8} parent=5 // pred_check
        %p972 = pneg %p971
      $region42: #{discriminator_forward.8} parent=5 // pred_check_branch
        %974 = sbr.rel (%p972) target = $region44
      $region43: #{discriminator_forward.8} parent=5 // pred_region
        %s975 = ssub.s32 %s14, 2
        // Predicated region
        $region45: #{discriminator_forward.8} parent=43 // pred_check
          %p976 = pneg %p111
        $region46: #{discriminator_forward.8} parent=43 // pred_check_branch
          %978 = sbr.rel (%p976) target = $region48
        $region47: #{discriminator_forward.8} parent=43 // pred_region
          %s979 = smul.u32 32, %s20
          %p980 = scmp.lt.s32.totalorder %s979, 63
          %s981 = scalar_select %p980, %s979, 63
          %s982 = smul.addr %s981, 8
          %s983 = scalar_lea.vmem %s3, %s982
        $region48: #{discriminator_forward.8} parent=43 // pred_fallthru
          _
        // Predicated region
        $region49: #{discriminator_forward.8} parent=43 // pred_check
          %p984 = pneg %p137
        $region50: #{discriminator_forward.8} parent=43 // pred_check_branch
          %986 = sbr.rel (%p984) target = $region52
        $region51: #{discriminator_forward.8} parent=43 // pred_region
          %s987 = sand.u32 %s122, 1
          %s988 = scalar_lea.sflag [#allocation3], %s987
          %s989 = sand.u32 %s122, 1
          %s990 = smul.addr %s989, 8
          %s991 = scalar_lea.vmem [#allocation2], %s990
          %992 = dma.done %s988, 128
        $region52: #{discriminator_forward.8} parent=43 // pred_fallthru
          _
      $region44: #{discriminator_forward.8} parent=5 // pred_fallthru
        _
    $region6: #{discriminator_forward.8} parent=1 // loop_footer
      %s18 = sadd.s32 1, %s14
    $region7: #{discriminator_forward.8} parent=1 // loop_footer_branch
      %13 = sbr.rel target = $region3
    $region8: #{discriminator_forward.8} parent=1 // loop_exit
      _
    %993 = vsyncpa [#allocation3], 1
    %s994 = scalar_lea.sflag [#allocation3], 1
    %995 = vsyncpa %s994, 1

// kernel: discriminator_forward.9
$region0: #{discriminator_forward.9}
  #allocation0 [shape = 'u32[]', space=smem, size = 0x4, offset = 0x4, fixed_abs, tag = 'smem constant byte address 0x4 - core index']
  #allocation1 [shape = 'u32[144,128]{1,0:T(1,128)}', space=vmem, size = 0x12000, scoped, tag = 'internal scratch']
  %s0 = inlined_call_operand.vmem [shape: bf16[128,128], index: 0, kind: input, shape index: {}]
  %s1 = inlined_call_operand.vmem [shape: bf16[128,128], index: 1, kind: input, shape index: {}]
  %s2 = inlined_call_operand.vmem [shape: f32[1,128], index: 2, kind: input, shape index: {}]
  %s3 = inlined_call_operand.vmem [shape: f32[128,128], index: 3, kind: output, shape index: {0}]
  %s4 = inlined_call_operand.vmem [shape: f32[1,8,128], index: 4, kind: output, shape index: {1}]
  %5 = xla_tuple %s3, %s4
  %s6 = sld [smem:[#allocation0]]
  $region30: #{discriminator_forward.9} parent=0
    _
  %s8 = ssub.s32 1, %s6
  %s9 = scalar_select 0, %s8, %s6
  // Predicated region
  $region2: #{discriminator_forward.9} parent=0 // pred_check
    _
  $region3: #{discriminator_forward.9} parent=0 // pred_check_branch
    %11 = sbr.rel (0) target = $region5
  $region4: #{discriminator_forward.9} parent=0 // pred_region
    _
  $region5: #{discriminator_forward.9} parent=0 // pred_fallthru
    _
  // Predicated region
  $region6: #{discriminator_forward.9} parent=0 // pred_check
    _
  $region7: #{discriminator_forward.9} parent=0 // pred_check_branch
    %13 = sbr.rel (0) target = $region9
  $region8: #{discriminator_forward.9} parent=0 // pred_region
    _
  $region9: #{discriminator_forward.9} parent=0 // pred_fallthru
    _
  // Predicated region
  $region10: #{discriminator_forward.9} parent=0 // pred_check
    _
  $region11: #{discriminator_forward.9} parent=0 // pred_check_branch
    %15 = sbr.rel (0) target = $region13
  $region12: #{discriminator_forward.9} parent=0 // pred_region
    _
  $region13: #{discriminator_forward.9} parent=0 // pred_fallthru
    _
  %v17 = vld [vmem:[%s0] sm:$0xf]
  %v18 = vld [vmem:[%s0 + $0x4] sm:$0xf]
  %v19 = vld [vmem:[%s0 + $0x8] sm:$0xf]
  %v20 = vld [vmem:[%s0 + $0xc] sm:$0xf]
  %v21 = vld [vmem:[%s0 + $0x10] sm:$0xf]
  %v22 = vld [vmem:[%s0 + $0x14] sm:$0xf]
  %v23 = vld [vmem:[%s0 + $0x18] sm:$0xf]
  %v24 = vld [vmem:[%s0 + $0x1c] sm:$0xf]
  %v25 = vld [vmem:[%s0 + $0x20] sm:$0xf]
  %v26 = vld [vmem:[%s0 + $0x24] sm:$0xf]
  %v27 = vld [vmem:[%s0 + $0x28] sm:$0xf]
  %v28 = vld [vmem:[%s0 + $0x2c] sm:$0xf]
  %v29 = vld [vmem:[%s0 + $0x30] sm:$0xf]
  %v30 = vld [vmem:[%s0 + $0x34] sm:$0xf]
  %v31 = vld [vmem:[%s0 + $0x38] sm:$0xf]
  %v32 = vld [vmem:[%s0 + $0x3c] sm:$0xf]
  %v33 = vld [vmem:[%s1] sm:$0xf]
  %v34 = vld [vmem:[%s1 + $0x4] sm:$0xf]
  %v35 = vld [vmem:[%s1 + $0x8] sm:$0xf]
  %v36 = vld [vmem:[%s1 + $0xc] sm:$0xf]
  %v37 = vld [vmem:[%s1 + $0x10] sm:$0xf]
  %v38 = vld [vmem:[%s1 + $0x14] sm:$0xf]
  %v39 = vld [vmem:[%s1 + $0x18] sm:$0xf]
  %v40 = vld [vmem:[%s1 + $0x1c] sm:$0xf]
  %v41 = vld [vmem:[%s1 + $0x20] sm:$0xf]
  %v42 = vld [vmem:[%s1 + $0x24] sm:$0xf]
  %v43 = vld [vmem:[%s1 + $0x28] sm:$0xf]
  %v44 = vld [vmem:[%s1 + $0x2c] sm:$0xf]
  %v45 = vld [vmem:[%s1 + $0x30] sm:$0xf]
  %v46 = vld [vmem:[%s1 + $0x34] sm:$0xf]
  %v47 = vld [vmem:[%s1 + $0x38] sm:$0xf]
  %v48 = vld [vmem:[%s1 + $0x3c] sm:$0xf]
  %v49 = vld [vmem:[%s2] sm:$0x1]
  %v51 = vlaneseq
  %v52 = vshrl.u32 %v51, 7
  %v53 = vsub.s32 0, %v52
  %v54 = vrot.slane %v49, %v53
  %v72 = vunpack.c.l.b16 %v17
  %v73 = vunpack.c.l.b16 %v18
  %v74 = vunpack.c.l.b16 %v19
  %v75 = vunpack.c.l.b16 %v20
  %v76 = vunpack.c.l.b16 %v21
  %v77 = vunpack.c.l.b16 %v22
  %v78 = vunpack.c.l.b16 %v23
  %v79 = vunpack.c.l.b16 %v24
  %v80 = vunpack.c.l.b16 %v25
  %v81 = vunpack.c.l.b16 %v26
  %v82 = vunpack.c.l.b16 %v27
  %v83 = vunpack.c.l.b16 %v28
  %v84 = vunpack.c.l.b16 %v29
  %v85 = vunpack.c.l.b16 %v30
  %v86 = vunpack.c.l.b16 %v31
  %v87 = vunpack.c.l.b16 %v32
  %v88 = vpack.c.b16 %v73, %v72
  %v89 = vpack.c.b16 %v75, %v74
  %v90 = vpack.c.b16 %v77, %v76
  %v91 = vpack.c.b16 %v79, %v78
  %v92 = vpack.c.b16 %v81, %v80
  %v93 = vpack.c.b16 %v83, %v82
  %v94 = vpack.c.b16 %v85, %v84
  %v95 = vpack.c.b16 %v87, %v86
  %v120 = vunpack.c.l.b16 %v33
  %v121 = vunpack.c.l.b16 %v34
  %v122 = vunpack.c.l.b16 %v35
  %v123 = vunpack.c.l.b16 %v36
  %v124 = vunpack.c.l.b16 %v37
  %v125 = vunpack.c.l.b16 %v38
  %v126 = vunpack.c.l.b16 %v39
  %v127 = vunpack.c.l.b16 %v40
  %v128 = vunpack.c.l.b16 %v41
  %v129 = vunpack.c.l.b16 %v42
  %v130 = vunpack.c.l.b16 %v43
  %v131 = vunpack.c.l.b16 %v44
  %v132 = vunpack.c.l.b16 %v45
  %v133 = vunpack.c.l.b16 %v46
  %v134 = vunpack.c.l.b16 %v47
  %v135 = vunpack.c.l.b16 %v48
  %v136 = vpack.c.b16 %v121, %v120
  %v137 = vpack.c.b16 %v123, %v122
  %v138 = vpack.c.b16 %v125, %v124
  %v139 = vpack.c.b16 %v127, %v126
  %v140 = vpack.c.b16 %v129, %v128
  %v141 = vpack.c.b16 %v131, %v130
  %v142 = vpack.c.b16 %v133, %v132
  %v143 = vpack.c.b16 %v135, %v134
  %152 = vmatprep.subr.bf16.mxu0 0
  %153 = vmatpush1.bf16.msra.mxu0 %v136
  %154 = vmatprep.subr.bf16.mxu0 0
  %155 = vmatpush1.bf16.msra.mxu0 %v137
  %156 = vmatprep.subr.bf16.mxu0 0
  %157 = vmatpush1.bf16.msra.mxu0 %v138
  %158 = vmatprep.subr.bf16.mxu0 0
  %159 = vmatpush1.bf16.msra.mxu0 %v139
  %160 = vmatprep.subr.bf16.mxu0 0
  %161 = vmatpush1.bf16.msra.mxu0 %v140
  %162 = vmatprep.subr.bf16.mxu0 0
  %163 = vmatpush1.bf16.msra.mxu0 %v141
  %164 = vmatprep.subr.bf16.mxu0 0
  %165 = vmatpush1.bf16.msra.mxu0 %v142
  %166 = vmatprep.subr.bf16.mxu0 0
  %167 = vmatpush1.bf16.msra.mxu0 %v143
  %168 = vmatprep.subr.bf16.mxu0 0
  %169 = vmatpush1.bf16.msra.mxu0 0
  %170 = vmatprep.subr.bf16.mxu0 0
  %171 = vmatpush1.bf16.msra.mxu0 0
  %172 = vmatprep.subr.bf16.mxu0 0
  %173 = vmatpush1.bf16.msra.mxu0 0
  %174 = vmatprep.subr.bf16.mxu0 0
  %175 = vmatpush1.bf16.msra.mxu0 0
  %176 = vmatprep.subr.bf16.mxu0 0
  %177 = vmatpush1.bf16.msra.mxu0 0
  %178 = vmatprep.subr.bf16.mxu0 0
  %179 = vmatpush1.bf16.msra.mxu0 0
  %180 = vmatprep.subr.bf16.mxu0 0
  %181 = vmatpush1.bf16.msra.mxu0 0
  %182 = vmatprep.subr.bf16.mxu0 0
  %183 = vmatpush1.bf16.msra.mxu0 0
  %184 = vmatprep.mubr.bf16.mxu0 0
  %185 = vmatmul.mubr.bf16.gmra.mrb[0].mxu0 %v88
  %v186 = vpop.f32.mrb[0].mxu0
  %v187 = vadd.f32 %v54, %v186
  %v188 = vpop.f32.mrb[0].mxu0
  %v189 = vpop.f32.mrb[0].mxu0
  %v190 = vadd.f32 %v54, %v189
  %v191 = vpop.f32.mrb[0].mxu0
  %192 = vmatprep.mubr.bf16.mxu0 0
  %193 = vmatmul.mubr.bf16.gmra.mrb[0].mxu0 %v89
  %v194 = vpop.f32.mrb[0].mxu0
  %v195 = vadd.f32 %v54, %v194
  %v196 = vpop.f32.mrb[0].mxu0
  %v197 = vpop.f32.mrb[0].mxu0
  %v198 = vadd.f32 %v54, %v197
  %v199 = vpop.f32.mrb[0].mxu0
  %200 = vmatprep.mubr.bf16.mxu0 0
  %201 = vmatmul.mubr.bf16.gmra.mrb[0].mxu0 %v90
  %v202 = vpop.f32.mrb[0].mxu0
  %v203 = vadd.f32 %v54, %v202
  %v204 = vpop.f32.mrb[0].mxu0
  %v205 = vpop.f32.mrb[0].mxu0
  %v206 = vadd.f32 %v54, %v205
  %v207 = vpop.f32.mrb[0].mxu0
  %208 = vmatprep.mubr.bf16.mxu0 0
  %209 = vmatmul.mubr.bf16.gmra.mrb[0].mxu0 %v91
  %v210 = vpop.f32.mrb[0].mxu0
  %v211 = vadd.f32 %v54, %v210
  %v212 = vpop.f32.mrb[0].mxu0
  %v213 = vpop.f32.mrb[0].mxu0
  %v214 = vadd.f32 %v54, %v213
  %v215 = vpop.f32.mrb[0].mxu0
  %216 = vmatprep.mubr.bf16.mxu0 0
  %217 = vmatmul.mubr.bf16.gmra.mrb[0].mxu0 %v92
  %v218 = vpop.f32.mrb[0].mxu0
  %v219 = vadd.f32 %v54, %v218
  %v220 = vpop.f32.mrb[0].mxu0
  %v221 = vpop.f32.mrb[0].mxu0
  %v222 = vadd.f32 %v54, %v221
  %v223 = vpop.f32.mrb[0].mxu0
  %224 = vmatprep.mubr.bf16.mxu0 0
  %225 = vmatmul.mubr.bf16.gmra.mrb[0].mxu0 %v93
  %v226 = vpop.f32.mrb[0].mxu0
  %v227 = vadd.f32 %v54, %v226
  %v228 = vpop.f32.mrb[0].mxu0
  %v229 = vpop.f32.mrb[0].mxu0
  %v230 = vadd.f32 %v54, %v229
  %v231 = vpop.f32.mrb[0].mxu0
  %232 = vmatprep.mubr.bf16.mxu0 0
  %233 = vmatmul.mubr.bf16.gmra.mrb[0].mxu0 %v94
  %v234 = vpop.f32.mrb[0].mxu0
  %v235 = vadd.f32 %v54, %v234
  %v236 = vpop.f32.mrb[0].mxu0
  %v237 = vpop.f32.mrb[0].mxu0
  %v238 = vadd.f32 %v54, %v237
  %v239 = vpop.f32.mrb[0].mxu0
  %240 = vmatprep.mubr.bf16.mxu0 0
  %241 = vmatmul.mubr.bf16.gmra.mrb[0].mxu0 %v95
  %v242 = vpop.f32.mrb[0].mxu0
  %v243 = vadd.f32 %v54, %v242
  %v244 = vpop.f32.mrb[0].mxu0
  %v245 = vpop.f32.mrb[0].mxu0
  %v246 = vadd.f32 %v54, %v245
  %v247 = vpop.f32.mrb[0].mxu0
  %248 = vdwg.mxu0
  %249 = vst [vmem:[%s3] sm:$0xff] %v187
  %250 = vst [vmem:[%s3 + $0x8] sm:$0xff] %v190
  %251 = vst [vmem:[%s3 + $0x10] sm:$0xff] %v195
  %252 = vst [vmem:[%s3 + $0x18] sm:$0xff] %v198
  %253 = vst [vmem:[%s3 + $0x20] sm:$0xff] %v203
  %254 = vst [vmem:[%s3 + $0x28] sm:$0xff] %v206
  %255 = vst [vmem:[%s3 + $0x30] sm:$0xff] %v211
  %256 = vst [vmem:[%s3 + $0x38] sm:$0xff] %v214
  %257 = vst [vmem:[%s3 + $0x40] sm:$0xff] %v219
  %258 = vst [vmem:[%s3 + $0x48] sm:$0xff] %v222
  %259 = vst [vmem:[%s3 + $0x50] sm:$0xff] %v227
  %260 = vst [vmem:[%s3 + $0x58] sm:$0xff] %v230
  %261 = vst [vmem:[%s3 + $0x60] sm:$0xff] %v235
  %262 = vst [vmem:[%s3 + $0x68] sm:$0xff] %v238
  %263 = vst [vmem:[%s3 + $0x70] sm:$0xff] %v243
  %264 = vst [vmem:[%s3 + $0x78] sm:$0xff] %v246
  %v265 = vlaneseq
  %v266 = vshrl.u32 %v265, 7
  %v267 = vadd.s32 %v266, 8
  %v268 = vadd.s32 %v266, 16
  %v269 = vadd.s32 %v266, 24
  %v270 = vadd.s32 %v266, 32
  %v271 = vadd.s32 %v266, 40
  %v272 = vadd.s32 %v266, 48
  %v273 = vadd.s32 %v266, 56
  %v274 = vadd.s32 %v266, 64
  %v275 = vadd.s32 %v266, 72
  %v276 = vadd.s32 %v266, 80
  %v277 = vadd.s32 %v266, 88
  %v278 = vadd.s32 %v266, 96
  %v279 = vadd.s32 %v266, 104
  %v280 = vadd.s32 %v266, 112
  %v281 = vadd.s32 %v266, 120
  %s282 = smul.u32 0, 128
  %v283 = vstv %s282
  %v284 = vadd.s32 %v266, %v283
  %v285 = vadd.s32 %v267, %v283
  %v286 = vadd.s32 %v268, %v283
  %v287 = vadd.s32 %v269, %v283
  %v288 = vadd.s32 %v270, %v283
  %v289 = vadd.s32 %v271, %v283
  %v290 = vadd.s32 %v272, %v283
  %v291 = vadd.s32 %v273, %v283
  %v292 = vadd.s32 %v274, %v283
  %v293 = vadd.s32 %v275, %v283
  %v294 = vadd.s32 %v276, %v283
  %v295 = vadd.s32 %v277, %v283
  %v296 = vadd.s32 %v278, %v283
  %v297 = vadd.s32 %v279, %v283
  %v298 = vadd.s32 %v280, %v283
  %v299 = vadd.s32 %v281, %v283
  %vm300 = vcmp.lt.s32.totalorder %v284, 128
  %vm301 = vcmp.lt.s32.totalorder %v285, 128
  %vm302 = vcmp.lt.s32.totalorder %v286, 128
  %vm303 = vcmp.lt.s32.totalorder %v287, 128
  %vm304 = vcmp.lt.s32.totalorder %v288, 128
  %vm305 = vcmp.lt.s32.totalorder %v289, 128
  %vm306 = vcmp.lt.s32.totalorder %v290, 128
  %vm307 = vcmp.lt.s32.totalorder %v291, 128
  %vm308 = vcmp.lt.s32.totalorder %v292, 128
  %vm309 = vcmp.lt.s32.totalorder %v293, 128
  %vm310 = vcmp.lt.s32.totalorder %v294, 128
  %vm311 = vcmp.lt.s32.totalorder %v295, 128
  %vm312 = vcmp.lt.s32.totalorder %v296, 128
  %vm313 = vcmp.lt.s32.totalorder %v297, 128
  %vm314 = vcmp.lt.s32.totalorder %v298, 128
  %vm315 = vcmp.lt.s32.totalorder %v299, 128
  %v316 = vsel %vm300, %v187, 0.0
  %v317 = vsel %vm301, %v190, 0.0
  %v318 = vsel %vm302, %v195, 0.0
  %v319 = vsel %vm303, %v198, 0.0
  %v320 = vsel %vm304, %v203, 0.0
  %v321 = vsel %vm305, %v206, 0.0
  %v322 = vsel %vm306, %v211, 0.0
  %v323 = vsel %vm307, %v214, 0.0
  %v324 = vsel %vm308, %v219, 0.0
  %v325 = vsel %vm309, %v222, 0.0
  %v326 = vsel %vm310, %v227, 0.0
  %v327 = vsel %vm311, %v230, 0.0
  %v328 = vsel %vm312, %v235, 0.0
  %v329 = vsel %vm313, %v238, 0.0
  %v330 = vsel %vm314, %v243, 0.0
  %v331 = vsel %vm315, %v246, 0.0
  %v332 = vadd.f32 %v316, %v317
  %v333 = vadd.f32 %v332, %v318
  %v334 = vadd.f32 %v333, %v319
  %v335 = vadd.f32 %v334, %v320
  %v336 = vadd.f32 %v335, %v321
  %v337 = vadd.f32 %v336, %v322
  %v338 = vadd.f32 %v337, %v323
  %v339 = vadd.f32 %v338, %v324
  %v340 = vadd.f32 %v339, %v325
  %v341 = vadd.f32 %v340, %v326
  %v342 = vadd.f32 %v341, %v327
  %v343 = vadd.f32 %v342, %v328
  %v344 = vadd.f32 %v343, %v329
  %v345 = vadd.f32 %v344, %v330
  %v346 = vadd.f32 %v345, %v331
  %v347 = vrot.slane %v346, 4
  %v348 = vadd.f32 %v346, %v347
  %v349 = vrot.slane %v348, 2
  %v350 = vadd.f32 %v348, %v349
  %v351 = vrot.slane %v350, 1
  %v352 = vadd.f32 %v350, %v351
  %v353 = vmul.f32 %v316, %v316
  %v354 = vmul.f32 %v317, %v317
  %v355 = vmul.f32 %v318, %v318
  %v356 = vmul.f32 %v319, %v319
  %v357 = vmul.f32 %v320, %v320
  %v358 = vmul.f32 %v321, %v321
  %v359 = vmul.f32 %v322, %v322
  %v360 = vmul.f32 %v323, %v323
  %v361 = vmul.f32 %v324, %v324
  %v362 = vmul.f32 %v325, %v325
  %v363 = vmul.f32 %v326, %v326
  %v364 = vmul.f32 %v327, %v327
  %v365 = vmul.f32 %v328, %v328
  %v366 = vmul.f32 %v329, %v329
  %v367 = vmul.f32 %v330, %v330
  %v368 = vmul.f32 %v331, %v331
  %v369 = vadd.f32 %v353, %v354
  %v370 = vadd.f32 %v369, %v355
  %v371 = vadd.f32 %v370, %v356
  %v372 = vadd.f32 %v371, %v357
  %v373 = vadd.f32 %v372, %v358
  %v374 = vadd.f32 %v373, %v359
  %v375 = vadd.f32 %v374, %v360
  %v376 = vadd.f32 %v375, %v361
  %v377 = vadd.f32 %v376, %v362
  %v378 = vadd.f32 %v377, %v363
  %v379 = vadd.f32 %v378, %v364
  %v380 = vadd.f32 %v379, %v365
  %v381 = vadd.f32 %v380, %v366
  %v382 = vadd.f32 %v381, %v367
  %v383 = vadd.f32 %v382, %v368
  %v384 = vrot.slane %v383, 4
  %v385 = vadd.f32 %v383, %v384
  %v386 = vrot.slane %v385, 2
  %v387 = vadd.f32 %v385, %v386
  %v388 = vrot.slane %v387, 1
  %v389 = vadd.f32 %v387, %v388
  %vm390 = vcmp.eq.s32.totalorder %v266, 0
  %v391 = vsel %vm390, %v352, 0.0
  %vm392 = vcmp.eq.s32.totalorder %v266, 1
  %v393 = vsel %vm392, %v389, 0.0
  %v394 = vadd.f32 %v391, %v393
  %395 = vst [vmem:[%s4] sm:$0xff] %v394
  // Predicated region
  $region14: #{discriminator_forward.9} parent=0 // pred_check
    _
  $region15: #{discriminator_forward.9} parent=0 // pred_check_branch
    %397 = sbr.rel (0) target = $region17
  $region16: #{discriminator_forward.9} parent=0 // pred_region
    _
  $region17: #{discriminator_forward.9} parent=0 // pred_fallthru
    _
  // Predicated region
  $region18: #{discriminator_forward.9} parent=0 // pred_check
    _
  $region19: #{discriminator_forward.9} parent=0 // pred_check_branch
    %399 = sbr.rel (0) target = $region21
  $region20: #{discriminator_forward.9} parent=0 // pred_region
    _
  $region21: #{discriminator_forward.9} parent=0 // pred_fallthru
    _
  // Predicated region
  $region22: #{discriminator_forward.9} parent=0 // pred_check
    _
  $region23: #{discriminator_forward.9} parent=0 // pred_check_branch
    %401 = sbr.rel (0) target = $region25
  $region24: #{discriminator_forward.9} parent=0 // pred_region
    _
  $region25: #{discriminator_forward.9} parent=0 // pred_fallthru
    _
  // Predicated region
  $region26: #{discriminator_forward.9} parent=0 // pred_check
    _
  $region27: #{discriminator_forward.9} parent=0 // pred_check_branch
    %403 = sbr.rel (0) target = $region29
  $region28: #{discriminator_forward.9} parent=0 // pred_region
    _
  $region29: #{discriminator_forward.9} parent=0 // pred_fallthru
    _

// kernel: discriminator_forward.10
$region0: #{discriminator_forward.10}
  #allocation0 [shape = 'u32[]', space=smem, size = 0x4, offset = 0x4, fixed_abs, tag = 'smem constant byte address 0x4 - core index']
  #allocation1 [shape = 'u32[144,128]{1,0:T(1,128)}', space=vmem, size = 0x12000, scoped, tag = 'internal scratch']
  %s0 = inlined_call_operand.vmem [shape: f32[128,128], index: 0, kind: input, shape index: {}]
  %s1 = inlined_call_operand.vmem [shape: f32[1,128], index: 1, kind: input, shape index: {}]
  %s2 = inlined_call_operand.vmem [shape: f32[1,128], index: 2, kind: input, shape index: {}]
  %s3 = inlined_call_operand.vmem [shape: f32[128,128], index: 3, kind: output, shape index: {}]
  %s4 = sld [smem:[#allocation0]]
  $region22: #{discriminator_forward.10} parent=0
    _
  %s6 = ssub.s32 1, %s4
  %s7 = scalar_select 0, %s6, %s4
  // Predicated region
  $region2: #{discriminator_forward.10} parent=0 // pred_check
    _
  $region3: #{discriminator_forward.10} parent=0 // pred_check_branch
    %9 = sbr.rel (0) target = $region5
  $region4: #{discriminator_forward.10} parent=0 // pred_region
    _
  $region5: #{discriminator_forward.10} parent=0 // pred_fallthru
    _
  // Predicated region
  $region6: #{discriminator_forward.10} parent=0 // pred_check
    _
  $region7: #{discriminator_forward.10} parent=0 // pred_check_branch
    %11 = sbr.rel (0) target = $region9
  $region8: #{discriminator_forward.10} parent=0 // pred_region
    _
  $region9: #{discriminator_forward.10} parent=0 // pred_fallthru
    _
  // Predicated region
  $region10: #{discriminator_forward.10} parent=0 // pred_check
    _
  $region11: #{discriminator_forward.10} parent=0 // pred_check_branch
    %13 = sbr.rel (0) target = $region13
  $region12: #{discriminator_forward.10} parent=0 // pred_region
    _
  $region13: #{discriminator_forward.10} parent=0 // pred_fallthru
    _
  %v14 = vld [vmem:[%s0] sm:$0xff]
  %v15 = vld [vmem:[%s0 + $0x8] sm:$0xff]
  %v16 = vld [vmem:[%s0 + $0x10] sm:$0xff]
  %v17 = vld [vmem:[%s0 + $0x18] sm:$0xff]
  %v18 = vld [vmem:[%s0 + $0x20] sm:$0xff]
  %v19 = vld [vmem:[%s0 + $0x28] sm:$0xff]
  %v20 = vld [vmem:[%s0 + $0x30] sm:$0xff]
  %v21 = vld [vmem:[%s0 + $0x38] sm:$0xff]
  %v22 = vld [vmem:[%s0 + $0x40] sm:$0xff]
  %v23 = vld [vmem:[%s0 + $0x48] sm:$0xff]
  %v24 = vld [vmem:[%s0 + $0x50] sm:$0xff]
  %v25 = vld [vmem:[%s0 + $0x58] sm:$0xff]
  %v26 = vld [vmem:[%s0 + $0x60] sm:$0xff]
  %v27 = vld [vmem:[%s0 + $0x68] sm:$0xff]
  %v28 = vld [vmem:[%s0 + $0x70] sm:$0xff]
  %v29 = vld [vmem:[%s0 + $0x78] sm:$0xff]
  %v30 = vld [vmem:[%s1] sm:$0x1]
  %v32 = vlaneseq
  %v33 = vshrl.u32 %v32, 7
  %v34 = vsub.s32 0, %v33
  %v35 = vrot.slane %v30, %v34
  %v37 = vmul.f32 %v14, %v35
  %v38 = vmul.f32 %v15, %v35
  %v39 = vmul.f32 %v16, %v35
  %v40 = vmul.f32 %v17, %v35
  %v41 = vmul.f32 %v18, %v35
  %v42 = vmul.f32 %v19, %v35
  %v43 = vmul.f32 %v20, %v35
  %v44 = vmul.f32 %v21, %v35
  %v45 = vmul.f32 %v22, %v35
  %v46 = vmul.f32 %v23, %v35
  %v47 = vmul.f32 %v24, %v35
  %v48 = vmul.f32 %v25, %v35
  %v49 = vmul.f32 %v26, %v35
  %v50 = vmul.f32 %v27, %v35
  %v51 = vmul.f32 %v28, %v35
  %v52 = vmul.f32 %v29, %v35
  %v53 = vld [vmem:[%s2] sm:$0x1]
  %v55 = vlaneseq
  %v56 = vshrl.u32 %v55, 7
  %v57 = vsub.s32 0, %v56
  %v58 = vrot.slane %v53, %v57
  %v60 = vadd.f32 %v37, %v58
  %v61 = vadd.f32 %v38, %v58
  %v62 = vadd.f32 %v39, %v58
  %v63 = vadd.f32 %v40, %v58
  %v64 = vadd.f32 %v41, %v58
  %v65 = vadd.f32 %v42, %v58
  %v66 = vadd.f32 %v43, %v58
  %v67 = vadd.f32 %v44, %v58
  %v68 = vadd.f32 %v45, %v58
  %v69 = vadd.f32 %v46, %v58
  %v70 = vadd.f32 %v47, %v58
  %v71 = vadd.f32 %v48, %v58
  %v72 = vadd.f32 %v49, %v58
  %v73 = vadd.f32 %v50, %v58
  %v74 = vadd.f32 %v51, %v58
  %v75 = vadd.f32 %v52, %v58
  %vm76 = vcmp.gt.f32.partialorder %v60, 0.0
  %vm77 = vcmp.gt.f32.partialorder %v61, 0.0
  %vm78 = vcmp.gt.f32.partialorder %v62, 0.0
  %vm79 = vcmp.gt.f32.partialorder %v63, 0.0
  %vm80 = vcmp.gt.f32.partialorder %v64, 0.0
  %vm81 = vcmp.gt.f32.partialorder %v65, 0.0
  %vm82 = vcmp.gt.f32.partialorder %v66, 0.0
  %vm83 = vcmp.gt.f32.partialorder %v67, 0.0
  %vm84 = vcmp.gt.f32.partialorder %v68, 0.0
  %vm85 = vcmp.gt.f32.partialorder %v69, 0.0
  %vm86 = vcmp.gt.f32.partialorder %v70, 0.0
  %vm87 = vcmp.gt.f32.partialorder %v71, 0.0
  %vm88 = vcmp.gt.f32.partialorder %v72, 0.0
  %vm89 = vcmp.gt.f32.partialorder %v73, 0.0
  %vm90 = vcmp.gt.f32.partialorder %v74, 0.0
  %vm91 = vcmp.gt.f32.partialorder %v75, 0.0
  %v92 = vmul.f32 %v60, 0.2
  %v93 = vmul.f32 %v61, 0.2
  %v94 = vmul.f32 %v62, 0.2
  %v95 = vmul.f32 %v63, 0.2
  %v96 = vmul.f32 %v64, 0.2
  %v97 = vmul.f32 %v65, 0.2
  %v98 = vmul.f32 %v66, 0.2
  %v99 = vmul.f32 %v67, 0.2
  %v100 = vmul.f32 %v68, 0.2
  %v101 = vmul.f32 %v69, 0.2
  %v102 = vmul.f32 %v70, 0.2
  %v103 = vmul.f32 %v71, 0.2
  %v104 = vmul.f32 %v72, 0.2
  %v105 = vmul.f32 %v73, 0.2
  %v106 = vmul.f32 %v74, 0.2
  %v107 = vmul.f32 %v75, 0.2
  %v108 = vsel %vm76, %v60, %v92
  %v109 = vsel %vm77, %v61, %v93
  %v110 = vsel %vm78, %v62, %v94
  %v111 = vsel %vm79, %v63, %v95
  %v112 = vsel %vm80, %v64, %v96
  %v113 = vsel %vm81, %v65, %v97
  %v114 = vsel %vm82, %v66, %v98
  %v115 = vsel %vm83, %v67, %v99
  %v116 = vsel %vm84, %v68, %v100
  %v117 = vsel %vm85, %v69, %v101
  %v118 = vsel %vm86, %v70, %v102
  %v119 = vsel %vm87, %v71, %v103
  %v120 = vsel %vm88, %v72, %v104
  %v121 = vsel %vm89, %v73, %v105
  %v122 = vsel %vm90, %v74, %v106
  %v123 = vsel %vm91, %v75, %v107
  %124 = vst [vmem:[%s3] sm:$0xff] %v108
  %125 = vst [vmem:[%s3 + $0x8] sm:$0xff] %v109
  %126 = vst [vmem:[%s3 + $0x10] sm:$0xff] %v110
  %127 = vst [vmem:[%s3 + $0x18] sm:$0xff] %v111
  %128 = vst [vmem:[%s3 + $0x20] sm:$0xff] %v112
  %129 = vst [vmem:[%s3 + $0x28] sm:$0xff] %v113
  %130 = vst [vmem:[%s3 + $0x30] sm:$0xff] %v114
  %131 = vst [vmem:[%s3 + $0x38] sm:$0xff] %v115
  %132 = vst [vmem:[%s3 + $0x40] sm:$0xff] %v116
  %133 = vst [vmem:[%s3 + $0x48] sm:$0xff] %v117
  %134 = vst [vmem:[%s3 + $0x50] sm:$0xff] %v118
  %135 = vst [vmem:[%s3 + $0x58] sm:$0xff] %v119
  %136 = vst [vmem:[%s3 + $0x60] sm:$0xff] %v120
  %137 = vst [vmem:[%s3 + $0x68] sm:$0xff] %v121
  %138 = vst [vmem:[%s3 + $0x70] sm:$0xff] %v122
  %139 = vst [vmem:[%s3 + $0x78] sm:$0xff] %v123
  // Predicated region
  $region14: #{discriminator_forward.10} parent=0 // pred_check
    _
  $region15: #{discriminator_forward.10} parent=0 // pred_check_branch
    %141 = sbr.rel (0) target = $region17
  $region16: #{discriminator_forward.10} parent=0 // pred_region
    _
  $region17: #{discriminator_forward.10} parent=0 // pred_fallthru
    _
  // Predicated region
  $region18: #{discriminator_forward.10} parent=0 // pred_check
    _
  $region19: #{discriminator_forward.10} parent=0 // pred_check_branch
    %143 = sbr.rel (0) target = $region21
  $region20: #{discriminator_forward.10} parent=0 // pred_region
    _
  $region21: #{discriminator_forward.10} parent=0 // pred_fallthru
    _

// kernel: discriminator_forward.11
$region0: #{discriminator_forward.11}
  #allocation0 [shape = 'u32[]', space=smem, size = 0x4, offset = 0x4, fixed_abs, tag = 'smem constant byte address 0x4 - core index']
  #allocation1 [shape = 'u32[144,128]{1,0:T(1,128)}', space=vmem, size = 0x12000, scoped, tag = 'internal scratch']
  %s0 = inlined_call_operand.vmem [shape: bf16[32,256], index: 0, kind: input, shape index: {}]
  %s1 = inlined_call_operand.vmem [shape: bf16[256,128], index: 1, kind: input, shape index: {}]
  %s2 = inlined_call_operand.vmem [shape: f32[1,128], index: 2, kind: input, shape index: {}]
  %s3 = inlined_call_operand.vmem [shape: f32[32,128], index: 3, kind: output, shape index: {0}]
  %s4 = inlined_call_operand.vmem [shape: f32[1,8,128], index: 4, kind: output, shape index: {1}]
  %5 = xla_tuple %s3, %s4
  %s6 = sld [smem:[#allocation0]]
  $region30: #{discriminator_forward.11} parent=0
    _
  %s8 = ssub.s32 1, %s6
  %s9 = scalar_select 0, %s8, %s6
  // Predicated region
  $region2: #{discriminator_forward.11} parent=0 // pred_check
    _
  $region3: #{discriminator_forward.11} parent=0 // pred_check_branch
    %11 = sbr.rel (0) target = $region5
  $region4: #{discriminator_forward.11} parent=0 // pred_region
    _
  $region5: #{discriminator_forward.11} parent=0 // pred_fallthru
    _
  // Predicated region
  $region6: #{discriminator_forward.11} parent=0 // pred_check
    _
  $region7: #{discriminator_forward.11} parent=0 // pred_check_branch
    %13 = sbr.rel (0) target = $region9
  $region8: #{discriminator_forward.11} parent=0 // pred_region
    _
  $region9: #{discriminator_forward.11} parent=0 // pred_fallthru
    _
  // Predicated region
  $region10: #{discriminator_forward.11} parent=0 // pred_check
    _
  $region11: #{discriminator_forward.11} parent=0 // pred_check_branch
    %15 = sbr.rel (0) target = $region13
  $region12: #{discriminator_forward.11} parent=0 // pred_region
    _
  $region13: #{discriminator_forward.11} parent=0 // pred_fallthru
    _
  %v17 = vld [vmem:[%s0] sm:$0xff]
  %v18 = vld [vmem:[%s0 + $0x8] sm:$0xff]
  %v19 = vld [vmem:[%s0 + $0x10] sm:$0xff]
  %v20 = vld [vmem:[%s0 + $0x18] sm:$0xff]
  %v21 = vld [vmem:[%s1] sm:$0xf]
  %v22 = vld [vmem:[%s1 + $0x4] sm:$0xf]
  %v23 = vld [vmem:[%s1 + $0x8] sm:$0xf]
  %v24 = vld [vmem:[%s1 + $0xc] sm:$0xf]
  %v25 = vld [vmem:[%s1 + $0x10] sm:$0xf]
  %v26 = vld [vmem:[%s1 + $0x14] sm:$0xf]
  %v27 = vld [vmem:[%s1 + $0x18] sm:$0xf]
  %v28 = vld [vmem:[%s1 + $0x1c] sm:$0xf]
  %v29 = vld [vmem:[%s1 + $0x20] sm:$0xf]
  %v30 = vld [vmem:[%s1 + $0x24] sm:$0xf]
  %v31 = vld [vmem:[%s1 + $0x28] sm:$0xf]
  %v32 = vld [vmem:[%s1 + $0x2c] sm:$0xf]
  %v33 = vld [vmem:[%s1 + $0x30] sm:$0xf]
  %v34 = vld [vmem:[%s1 + $0x34] sm:$0xf]
  %v35 = vld [vmem:[%s1 + $0x38] sm:$0xf]
  %v36 = vld [vmem:[%s1 + $0x3c] sm:$0xf]
  %v37 = vld [vmem:[%s1 + $0x40] sm:$0xf]
  %v38 = vld [vmem:[%s1 + $0x44] sm:$0xf]
  %v39 = vld [vmem:[%s1 + $0x48] sm:$0xf]
  %v40 = vld [vmem:[%s1 + $0x4c] sm:$0xf]
  %v41 = vld [vmem:[%s1 + $0x50] sm:$0xf]
  %v42 = vld [vmem:[%s1 + $0x54] sm:$0xf]
  %v43 = vld [vmem:[%s1 + $0x58] sm:$0xf]
  %v44 = vld [vmem:[%s1 + $0x5c] sm:$0xf]
  %v45 = vld [vmem:[%s1 + $0x60] sm:$0xf]
  %v46 = vld [vmem:[%s1 + $0x64] sm:$0xf]
  %v47 = vld [vmem:[%s1 + $0x68] sm:$0xf]
  %v48 = vld [vmem:[%s1 + $0x6c] sm:$0xf]
  %v49 = vld [vmem:[%s1 + $0x70] sm:$0xf]
  %v50 = vld [vmem:[%s1 + $0x74] sm:$0xf]
  %v51 = vld [vmem:[%s1 + $0x78] sm:$0xf]
  %v52 = vld [vmem:[%s1 + $0x7c] sm:$0xf]
  %v53 = vld [vmem:[%s2] sm:$0x1]
  %v55 = vlaneseq
  %v56 = vshrl.u32 %v55, 7
  %v57 = vsub.s32 0, %v56
  %v58 = vrot.slane %v53, %v57
  %v64 = vunpack.c.l.b16 %v17
  %v65 = vunpack.c.h.b16 %v17
  %v66 = vunpack.c.l.b16 %v18
  %v67 = vunpack.c.h.b16 %v18
  %v68 = vunpack.c.l.b16 %v19
  %v69 = vunpack.c.h.b16 %v19
  %v70 = vunpack.c.l.b16 %v20
  %v71 = vunpack.c.h.b16 %v20
  %v72 = vpack.c.b16 %v66, %v64
  %v73 = vpack.c.b16 %v67, %v65
  %v74 = vpack.c.b16 %v70, %v68
  %v75 = vpack.c.b16 %v71, %v69
  %v112 = vunpack.c.l.b16 %v21
  %v113 = vunpack.c.l.b16 %v22
  %v114 = vunpack.c.l.b16 %v23
  %v115 = vunpack.c.l.b16 %v24
  %v116 = vunpack.c.l.b16 %v25
  %v117 = vunpack.c.l.b16 %v26
  %v118 = vunpack.c.l.b16 %v27
  %v119 = vunpack.c.l.b16 %v28
  %v120 = vunpack.c.l.b16 %v29
  %v121 = vunpack.c.l.b16 %v30
  %v122 = vunpack.c.l.b16 %v31
  %v123 = vunpack.c.l.b16 %v32
  %v124 = vunpack.c.l.b16 %v33
  %v125 = vunpack.c.l.b16 %v34
  %v126 = vunpack.c.l.b16 %v35
  %v127 = vunpack.c.l.b16 %v36
  %v128 = vunpack.c.l.b16 %v37
  %v129 = vunpack.c.l.b16 %v38
  %v130 = vunpack.c.l.b16 %v39
  %v131 = vunpack.c.l.b16 %v40
  %v132 = vunpack.c.l.b16 %v41
  %v133 = vunpack.c.l.b16 %v42
  %v134 = vunpack.c.l.b16 %v43
  %v135 = vunpack.c.l.b16 %v44
  %v136 = vunpack.c.l.b16 %v45
  %v137 = vunpack.c.l.b16 %v46
  %v138 = vunpack.c.l.b16 %v47
  %v139 = vunpack.c.l.b16 %v48
  %v140 = vunpack.c.l.b16 %v49
  %v141 = vunpack.c.l.b16 %v50
  %v142 = vunpack.c.l.b16 %v51
  %v143 = vunpack.c.l.b16 %v52
  %v144 = vpack.c.b16 %v113, %v112
  %v145 = vpack.c.b16 %v115, %v114
  %v146 = vpack.c.b16 %v117, %v116
  %v147 = vpack.c.b16 %v119, %v118
  %v148 = vpack.c.b16 %v121, %v120
  %v149 = vpack.c.b16 %v123, %v122
  %v150 = vpack.c.b16 %v125, %v124
  %v151 = vpack.c.b16 %v127, %v126
  %v152 = vpack.c.b16 %v129, %v128
  %v153 = vpack.c.b16 %v131, %v130
  %v154 = vpack.c.b16 %v133, %v132
  %v155 = vpack.c.b16 %v135, %v134
  %v156 = vpack.c.b16 %v137, %v136
  %v157 = vpack.c.b16 %v139, %v138
  %v158 = vpack.c.b16 %v141, %v140
  %v159 = vpack.c.b16 %v143, %v142
  %176 = vmatprep.subr.bf16.mxu0 0
  %177 = vmatpush1.bf16.msra.mxu0 %v144
  %178 = vmatprep.subr.bf16.mxu0 0
  %179 = vmatpush1.bf16.msra.mxu0 %v145
  %180 = vmatprep.subr.bf16.mxu0 0
  %181 = vmatpush1.bf16.msra.mxu0 %v146
  %182 = vmatprep.subr.bf16.mxu0 0
  %183 = vmatpush1.bf16.msra.mxu0 %v147
  %184 = vmatprep.subr.bf16.mxu0 0
  %185 = vmatpush1.bf16.msra.mxu0 %v148
  %186 = vmatprep.subr.bf16.mxu0 0
  %187 = vmatpush1.bf16.msra.mxu0 %v149
  %188 = vmatprep.subr.bf16.mxu0 0
  %189 = vmatpush1.bf16.msra.mxu0 %v150
  %190 = vmatprep.subr.bf16.mxu0 0
  %191 = vmatpush1.bf16.msra.mxu0 %v151
  %192 = vmatprep.subr.bf16.mxu0 0
  %193 = vmatpush1.bf16.msra.mxu0 %v152
  %194 = vmatprep.subr.bf16.mxu0 0
  %195 = vmatpush1.bf16.msra.mxu0 %v153
  %196 = vmatprep.subr.bf16.mxu0 0
  %197 = vmatpush1.bf16.msra.mxu0 %v154
  %198 = vmatprep.subr.bf16.mxu0 0
  %199 = vmatpush1.bf16.msra.mxu0 %v155
  %200 = vmatprep.subr.bf16.mxu0 0
  %201 = vmatpush1.bf16.msra.mxu0 %v156
  %202 = vmatprep.subr.bf16.mxu0 0
  %203 = vmatpush1.bf16.msra.mxu0 %v157
  %204 = vmatprep.subr.bf16.mxu0 0
  %205 = vmatpush1.bf16.msra.mxu0 %v158
  %206 = vmatprep.subr.bf16.mxu0 0
  %207 = vmatpush1.bf16.msra.mxu0 %v159
  %208 = vmatprep.mubr.bf16.mxu0 %v73
  %209 = vmatmul.mubr.bf16.gmra.mrb[0].mxu0 %v72
  %v210 = vpop.f32.mrb[0].mxu0
  %v211 = vadd.f32 %v58, %v210
  %v212 = vpop.f32.mrb[0].mxu0
  %v213 = vpop.f32.mrb[0].mxu0
  %v214 = vadd.f32 %v58, %v213
  %v215 = vpop.f32.mrb[0].mxu0
  %216 = vmatprep.mubr.bf16.mxu0 %v75
  %217 = vmatmul.mubr.bf16.gmra.mrb[0].mxu0 %v74
  %v218 = vpop.f32.mrb[0].mxu0
  %v219 = vadd.f32 %v58, %v218
  %v220 = vpop.f32.mrb[0].mxu0
  %v221 = vpop.f32.mrb[0].mxu0
  %v222 = vadd.f32 %v58, %v221
  %v223 = vpop.f32.mrb[0].mxu0
  %224 = vdwg.mxu0
  %225 = vst [vmem:[%s3] sm:$0xff] %v211
  %226 = vst [vmem:[%s3 + $0x8] sm:$0xff] %v214
  %227 = vst [vmem:[%s3 + $0x10] sm:$0xff] %v219
  %228 = vst [vmem:[%s3 + $0x18] sm:$0xff] %v222
  %v229 = vlaneseq
  %v230 = vshrl.u32 %v229, 7
  %v231 = vadd.s32 %v230, 8
  %v232 = vadd.s32 %v230, 16
  %v233 = vadd.s32 %v230, 24
  %s234 = smul.u32 0, 32
  %v235 = vstv %s234
  %v236 = vadd.s32 %v230, %v235
  %v237 = vadd.s32 %v231, %v235
  %v238 = vadd.s32 %v232, %v235
  %v239 = vadd.s32 %v233, %v235
  %vm240 = vcmp.lt.s32.totalorder %v236, 32
  %vm241 = vcmp.lt.s32.totalorder %v237, 32
  %vm242 = vcmp.lt.s32.totalorder %v238, 32
  %vm243 = vcmp.lt.s32.totalorder %v239, 32
  %v244 = vsel %vm240, %v211, 0.0
  %v245 = vsel %vm241, %v214, 0.0
  %v246 = vsel %vm242, %v219, 0.0
  %v247 = vsel %vm243, %v222, 0.0
  %v248 = vadd.f32 %v244, %v245
  %v249 = vadd.f32 %v248, %v246
  %v250 = vadd.f32 %v249, %v247
  %v251 = vrot.slane %v250, 4
  %v252 = vadd.f32 %v250, %v251
  %v253 = vrot.slane %v252, 2
  %v254 = vadd.f32 %v252, %v253
  %v255 = vrot.slane %v254, 1
  %v256 = vadd.f32 %v254, %v255
  %v257 = vmul.f32 %v244, %v244
  %v258 = vmul.f32 %v245, %v245
  %v259 = vmul.f32 %v246, %v246
  %v260 = vmul.f32 %v247, %v247
  %v261 = vadd.f32 %v257, %v258
  %v262 = vadd.f32 %v261, %v259
  %v263 = vadd.f32 %v262, %v260
  %v264 = vrot.slane %v263, 4
  %v265 = vadd.f32 %v263, %v264
  %v266 = vrot.slane %v265, 2
  %v267 = vadd.f32 %v265, %v266
  %v268 = vrot.slane %v267, 1
  %v269 = vadd.f32 %v267, %v268
  %vm270 = vcmp.eq.s32.totalorder %v230, 0
  %v271 = vsel %vm270, %v256, 0.0
  %vm272 = vcmp.eq.s32.totalorder %v230, 1
  %v273 = vsel %vm272, %v269, 0.0
  %v274 = vadd.f32 %v271, %v273
  %275 = vst [vmem:[%s4] sm:$0xff] %v274
  // Predicated region
  $region14: #{discriminator_forward.11} parent=0 // pred_check
    _
  $region15: #{discriminator_forward.11} parent=0 // pred_check_branch
    %277 = sbr.rel (0) target = $region17
  $region16: #{discriminator_forward.11} parent=0 // pred_region
    _
  $region17: #{discriminator_forward.11} parent=0 // pred_fallthru
    _
  // Predicated region
  $region18: #{discriminator_forward.11} parent=0 // pred_check
    _
  $region19: #{discriminator_forward.11} parent=0 // pred_check_branch
    %279 = sbr.rel (0) target = $region21
  $region20: #{discriminator_forward.11} parent=0 // pred_region
    _
  $region21: #{discriminator_forward.11} parent=0 // pred_fallthru
    _
  // Predicated region
  $region22: #{discriminator_forward.11} parent=0 // pred_check
    _
  $region23: #{discriminator_forward.11} parent=0 // pred_check_branch
    %281 = sbr.rel (0) target = $region25
  $region24: #{discriminator_forward.11} parent=0 // pred_region
    _
  $region25: #{discriminator_forward.11} parent=0 // pred_fallthru
    _
  // Predicated region
  $region26: #{discriminator_forward.11} parent=0 // pred_check
    _
  $region27: #{discriminator_forward.11} parent=0 // pred_check_branch
    %283 = sbr.rel (0) target = $region29
  $region28: #{discriminator_forward.11} parent=0 // pred_region
    _
  $region29: #{discriminator_forward.11} parent=0 // pred_fallthru
    _

// kernel: discriminator_forward.12
$region0: #{discriminator_forward.12}
  #allocation0 [shape = 'u32[]', space=smem, size = 0x4, offset = 0x4, fixed_abs, tag = 'smem constant byte address 0x4 - core index']
  #allocation1 [shape = 'u32[144,128]{1,0:T(1,128)}', space=vmem, size = 0x12000, scoped, tag = 'internal scratch']
  %s0 = inlined_call_operand.vmem [shape: f32[32,128], index: 0, kind: input, shape index: {}]
  %s1 = inlined_call_operand.vmem [shape: f32[1,128], index: 1, kind: input, shape index: {}]
  %s2 = inlined_call_operand.vmem [shape: f32[1,128], index: 2, kind: input, shape index: {}]
  %s3 = inlined_call_operand.vmem [shape: f32[32,128], index: 3, kind: output, shape index: {}]
  %s4 = sld [smem:[#allocation0]]
  $region22: #{discriminator_forward.12} parent=0
    _
  %s6 = ssub.s32 1, %s4
  %s7 = scalar_select 0, %s6, %s4
  // Predicated region
  $region2: #{discriminator_forward.12} parent=0 // pred_check
    _
  $region3: #{discriminator_forward.12} parent=0 // pred_check_branch
    %9 = sbr.rel (0) target = $region5
  $region4: #{discriminator_forward.12} parent=0 // pred_region
    _
  $region5: #{discriminator_forward.12} parent=0 // pred_fallthru
    _
  // Predicated region
  $region6: #{discriminator_forward.12} parent=0 // pred_check
    _
  $region7: #{discriminator_forward.12} parent=0 // pred_check_branch
    %11 = sbr.rel (0) target = $region9
  $region8: #{discriminator_forward.12} parent=0 // pred_region
    _
  $region9: #{discriminator_forward.12} parent=0 // pred_fallthru
    _
  // Predicated region
  $region10: #{discriminator_forward.12} parent=0 // pred_check
    _
  $region11: #{discriminator_forward.12} parent=0 // pred_check_branch
    %13 = sbr.rel (0) target = $region13
  $region12: #{discriminator_forward.12} parent=0 // pred_region
    _
  $region13: #{discriminator_forward.12} parent=0 // pred_fallthru
    _
  %v14 = vld [vmem:[%s0] sm:$0xff]
  %v15 = vld [vmem:[%s0 + $0x8] sm:$0xff]
  %v16 = vld [vmem:[%s0 + $0x10] sm:$0xff]
  %v17 = vld [vmem:[%s0 + $0x18] sm:$0xff]
  %v18 = vld [vmem:[%s1] sm:$0x1]
  %v20 = vlaneseq
  %v21 = vshrl.u32 %v20, 7
  %v22 = vsub.s32 0, %v21
  %v23 = vrot.slane %v18, %v22
  %v25 = vmul.f32 %v14, %v23
  %v26 = vmul.f32 %v15, %v23
  %v27 = vmul.f32 %v16, %v23
  %v28 = vmul.f32 %v17, %v23
  %v29 = vld [vmem:[%s2] sm:$0x1]
  %v31 = vlaneseq
  %v32 = vshrl.u32 %v31, 7
  %v33 = vsub.s32 0, %v32
  %v34 = vrot.slane %v29, %v33
  %v36 = vadd.f32 %v25, %v34
  %v37 = vadd.f32 %v26, %v34
  %v38 = vadd.f32 %v27, %v34
  %v39 = vadd.f32 %v28, %v34
  %vm40 = vcmp.gt.f32.partialorder %v36, 0.0
  %vm41 = vcmp.gt.f32.partialorder %v37, 0.0
  %vm42 = vcmp.gt.f32.partialorder %v38, 0.0
  %vm43 = vcmp.gt.f32.partialorder %v39, 0.0
  %v44 = vmul.f32 %v36, 0.2
  %v45 = vmul.f32 %v37, 0.2
  %v46 = vmul.f32 %v38, 0.2
  %v47 = vmul.f32 %v39, 0.2
  %v48 = vsel %vm40, %v36, %v44
  %v49 = vsel %vm41, %v37, %v45
  %v50 = vsel %vm42, %v38, %v46
  %v51 = vsel %vm43, %v39, %v47
  %52 = vst [vmem:[%s3] sm:$0xff] %v48
  %53 = vst [vmem:[%s3 + $0x8] sm:$0xff] %v49
  %54 = vst [vmem:[%s3 + $0x10] sm:$0xff] %v50
  %55 = vst [vmem:[%s3 + $0x18] sm:$0xff] %v51
  // Predicated region
  $region14: #{discriminator_forward.12} parent=0 // pred_check
    _
  $region15: #{discriminator_forward.12} parent=0 // pred_check_branch
    %57 = sbr.rel (0) target = $region17
  $region16: #{discriminator_forward.12} parent=0 // pred_region
    _
  $region17: #{discriminator_forward.12} parent=0 // pred_fallthru
    _
  // Predicated region
  $region18: #{discriminator_forward.12} parent=0 // pred_check
    _
  $region19: #{discriminator_forward.12} parent=0 // pred_check_branch
    %59 = sbr.rel (0) target = $region21
  $region20: #{discriminator_forward.12} parent=0 // pred_region
    _
  $region21: #{discriminator_forward.12} parent=0 // pred_fallthru
    _

// kernel: discriminator_forward.13
$region0: #{discriminator_forward.13}
  #allocation0 [shape = 'u32[]', space=smem, size = 0x4, offset = 0x4, fixed_abs, tag = 'smem constant byte address 0x4 - core index']
  #allocation1 [shape = 'u32[144,128]{1,0:T(1,128)}', space=vmem, size = 0x12000, scoped, tag = 'internal scratch']
  %s0 = inlined_call_operand.vmem [shape: bf16[8,512], index: 0, kind: input, shape index: {}]
  %s1 = inlined_call_operand.vmem [shape: bf16[512,128], index: 1, kind: input, shape index: {}]
  %s2 = inlined_call_operand.vmem [shape: f32[1,128], index: 2, kind: input, shape index: {}]
  %s3 = inlined_call_operand.vmem [shape: f32[8,128], index: 3, kind: output, shape index: {0}]
  %s4 = inlined_call_operand.vmem [shape: f32[1,8,128], index: 4, kind: output, shape index: {1}]
  %5 = xla_tuple %s3, %s4
  %s6 = sld [smem:[#allocation0]]
  $region30: #{discriminator_forward.13} parent=0
    _
  %s8 = ssub.s32 1, %s6
  %s9 = scalar_select 0, %s8, %s6
  // Predicated region
  $region2: #{discriminator_forward.13} parent=0 // pred_check
    _
  $region3: #{discriminator_forward.13} parent=0 // pred_check_branch
    %11 = sbr.rel (0) target = $region5
  $region4: #{discriminator_forward.13} parent=0 // pred_region
    _
  $region5: #{discriminator_forward.13} parent=0 // pred_fallthru
    _
  // Predicated region
  $region6: #{discriminator_forward.13} parent=0 // pred_check
    _
  $region7: #{discriminator_forward.13} parent=0 // pred_check_branch
    %13 = sbr.rel (0) target = $region9
  $region8: #{discriminator_forward.13} parent=0 // pred_region
    _
  $region9: #{discriminator_forward.13} parent=0 // pred_fallthru
    _
  // Predicated region
  $region10: #{discriminator_forward.13} parent=0 // pred_check
    _
  $region11: #{discriminator_forward.13} parent=0 // pred_check_branch
    %15 = sbr.rel (0) target = $region13
  $region12: #{discriminator_forward.13} parent=0 // pred_region
    _
  $region13: #{discriminator_forward.13} parent=0 // pred_fallthru
    _
  %v17 = vld [vmem:[%s0] sm:$0xff]
  %v18 = vld [vmem:[%s0 + $0x8] sm:$0xff]
  %v19 = vld [vmem:[%s1] sm:$0xf]
  %v20 = vld [vmem:[%s1 + $0x4] sm:$0xf]
  %v21 = vld [vmem:[%s1 + $0x8] sm:$0xf]
  %v22 = vld [vmem:[%s1 + $0xc] sm:$0xf]
  %v23 = vld [vmem:[%s1 + $0x10] sm:$0xf]
  %v24 = vld [vmem:[%s1 + $0x14] sm:$0xf]
  %v25 = vld [vmem:[%s1 + $0x18] sm:$0xf]
  %v26 = vld [vmem:[%s1 + $0x1c] sm:$0xf]
  %v27 = vld [vmem:[%s1 + $0x20] sm:$0xf]
  %v28 = vld [vmem:[%s1 + $0x24] sm:$0xf]
  %v29 = vld [vmem:[%s1 + $0x28] sm:$0xf]
  %v30 = vld [vmem:[%s1 + $0x2c] sm:$0xf]
  %v31 = vld [vmem:[%s1 + $0x30] sm:$0xf]
  %v32 = vld [vmem:[%s1 + $0x34] sm:$0xf]
  %v33 = vld [vmem:[%s1 + $0x38] sm:$0xf]
  %v34 = vld [vmem:[%s1 + $0x3c] sm:$0xf]
  %v35 = vld [vmem:[%s1 + $0x40] sm:$0xf]
  %v36 = vld [vmem:[%s1 + $0x44] sm:$0xf]
  %v37 = vld [vmem:[%s1 + $0x48] sm:$0xf]
  %v38 = vld [vmem:[%s1 + $0x4c] sm:$0xf]
  %v39 = vld [vmem:[%s1 + $0x50] sm:$0xf]
  %v40 = vld [vmem:[%s1 + $0x54] sm:$0xf]
  %v41 = vld [vmem:[%s1 + $0x58] sm:$0xf]
  %v42 = vld [vmem:[%s1 + $0x5c] sm:$0xf]
  %v43 = vld [vmem:[%s1 + $0x60] sm:$0xf]
  %v44 = vld [vmem:[%s1 + $0x64] sm:$0xf]
  %v45 = vld [vmem:[%s1 + $0x68] sm:$0xf]
  %v46 = vld [vmem:[%s1 + $0x6c] sm:$0xf]
  %v47 = vld [vmem:[%s1 + $0x70] sm:$0xf]
  %v48 = vld [vmem:[%s1 + $0x74] sm:$0xf]
  %v49 = vld [vmem:[%s1 + $0x78] sm:$0xf]
  %v50 = vld [vmem:[%s1 + $0x7c] sm:$0xf]
  %v51 = vld [vmem:[%s1 + $0x80] sm:$0xf]
  %v52 = vld [vmem:[%s1 + $0x84] sm:$0xf]
  %v53 = vld [vmem:[%s1 + $0x88] sm:$0xf]
  %v54 = vld [vmem:[%s1 + $0x8c] sm:$0xf]
  %v55 = vld [vmem:[%s1 + $0x90] sm:$0xf]
  %v56 = vld [vmem:[%s1 + $0x94] sm:$0xf]
  %v57 = vld [vmem:[%s1 + $0x98] sm:$0xf]
  %v58 = vld [vmem:[%s1 + $0x9c] sm:$0xf]
  %v59 = vld [vmem:[%s1 + $0xa0] sm:$0xf]
  %v60 = vld [vmem:[%s1 + $0xa4] sm:$0xf]
  %v61 = vld [vmem:[%s1 + $0xa8] sm:$0xf]
  %v62 = vld [vmem:[%s1 + $0xac] sm:$0xf]
  %v63 = vld [vmem:[%s1 + $0xb0] sm:$0xf]
  %v64 = vld [vmem:[%s1 + $0xb4] sm:$0xf]
  %v65 = vld [vmem:[%s1 + $0xb8] sm:$0xf]
  %v66 = vld [vmem:[%s1 + $0xbc] sm:$0xf]
  %v67 = vld [vmem:[%s1 + $0xc0] sm:$0xf]
  %v68 = vld [vmem:[%s1 + $0xc4] sm:$0xf]
  %v69 = vld [vmem:[%s1 + $0xc8] sm:$0xf]
  %v70 = vld [vmem:[%s1 + $0xcc] sm:$0xf]
  %v71 = vld [vmem:[%s1 + $0xd0] sm:$0xf]
  %v72 = vld [vmem:[%s1 + $0xd4] sm:$0xf]
  %v73 = vld [vmem:[%s1 + $0xd8] sm:$0xf]
  %v74 = vld [vmem:[%s1 + $0xdc] sm:$0xf]
  %v75 = vld [vmem:[%s1 + $0xe0] sm:$0xf]
  %v76 = vld [vmem:[%s1 + $0xe4] sm:$0xf]
  %v77 = vld [vmem:[%s1 + $0xe8] sm:$0xf]
  %v78 = vld [vmem:[%s1 + $0xec] sm:$0xf]
  %v79 = vld [vmem:[%s1 + $0xf0] sm:$0xf]
  %v80 = vld [vmem:[%s1 + $0xf4] sm:$0xf]
  %v81 = vld [vmem:[%s1 + $0xf8] sm:$0xf]
  %v82 = vld [vmem:[%s1 + $0xfc] sm:$0xf]
  %v83 = vld [vmem:[%s2] sm:$0x1]
  %v85 = vlaneseq
  %v86 = vshrl.u32 %v85, 7
  %v87 = vsub.s32 0, %v86
  %v88 = vrot.slane %v83, %v87
  %v92 = vunpack.c.l.b16 %v17
  %v93 = vunpack.c.h.b16 %v17
  %v94 = vunpack.c.l.b16 %v18
  %v95 = vunpack.c.h.b16 %v18
  %v96 = vpack.c.b16 %v92, %v92
  %v97 = vpack.c.b16 %v93, %v93
  %v98 = vpack.c.b16 %v94, %v94
  %v99 = vpack.c.b16 %v95, %v95
  %v168 = vunpack.c.l.b16 %v19
  %v169 = vunpack.c.l.b16 %v20
  %v170 = vunpack.c.l.b16 %v21
  %v171 = vunpack.c.l.b16 %v22
  %v172 = vunpack.c.l.b16 %v23
  %v173 = vunpack.c.l.b16 %v24
  %v174 = vunpack.c.l.b16 %v25
  %v175 = vunpack.c.l.b16 %v26
  %v176 = vunpack.c.l.b16 %v27
  %v177 = vunpack.c.l.b16 %v28
  %v178 = vunpack.c.l.b16 %v29
  %v179 = vunpack.c.l.b16 %v30
  %v180 = vunpack.c.l.b16 %v31
  %v181 = vunpack.c.l.b16 %v32
  %v182 = vunpack.c.l.b16 %v33
  %v183 = vunpack.c.l.b16 %v34
  %v184 = vunpack.c.l.b16 %v35
  %v185 = vunpack.c.l.b16 %v36
  %v186 = vunpack.c.l.b16 %v37
  %v187 = vunpack.c.l.b16 %v38
  %v188 = vunpack.c.l.b16 %v39
  %v189 = vunpack.c.l.b16 %v40
  %v190 = vunpack.c.l.b16 %v41
  %v191 = vunpack.c.l.b16 %v42
  %v192 = vunpack.c.l.b16 %v43
  %v193 = vunpack.c.l.b16 %v44
  %v194 = vunpack.c.l.b16 %v45
  %v195 = vunpack.c.l.b16 %v46
  %v196 = vunpack.c.l.b16 %v47
  %v197 = vunpack.c.l.b16 %v48
  %v198 = vunpack.c.l.b16 %v49
  %v199 = vunpack.c.l.b16 %v50
  %v200 = vunpack.c.l.b16 %v51
  %v201 = vunpack.c.l.b16 %v52
  %v202 = vunpack.c.l.b16 %v53
  %v203 = vunpack.c.l.b16 %v54
  %v204 = vunpack.c.l.b16 %v55
  %v205 = vunpack.c.l.b16 %v56
  %v206 = vunpack.c.l.b16 %v57
  %v207 = vunpack.c.l.b16 %v58
  %v208 = vunpack.c.l.b16 %v59
  %v209 = vunpack.c.l.b16 %v60
  %v210 = vunpack.c.l.b16 %v61
  %v211 = vunpack.c.l.b16 %v62
  %v212 = vunpack.c.l.b16 %v63
  %v213 = vunpack.c.l.b16 %v64
  %v214 = vunpack.c.l.b16 %v65
  %v215 = vunpack.c.l.b16 %v66
  %v216 = vunpack.c.l.b16 %v67
  %v217 = vunpack.c.l.b16 %v68
  %v218 = vunpack.c.l.b16 %v69
  %v219 = vunpack.c.l.b16 %v70
  %v220 = vunpack.c.l.b16 %v71
  %v221 = vunpack.c.l.b16 %v72
  %v222 = vunpack.c.l.b16 %v73
  %v223 = vunpack.c.l.b16 %v74
  %v224 = vunpack.c.l.b16 %v75
  %v225 = vunpack.c.l.b16 %v76
  %v226 = vunpack.c.l.b16 %v77
  %v227 = vunpack.c.l.b16 %v78
  %v228 = vunpack.c.l.b16 %v79
  %v229 = vunpack.c.l.b16 %v80
  %v230 = vunpack.c.l.b16 %v81
  %v231 = vunpack.c.l.b16 %v82
  %v232 = vpack.c.b16 %v169, %v168
  %v233 = vpack.c.b16 %v171, %v170
  %v234 = vpack.c.b16 %v173, %v172
  %v235 = vpack.c.b16 %v175, %v174
  %v236 = vpack.c.b16 %v177, %v176
  %v237 = vpack.c.b16 %v179, %v178
  %v238 = vpack.c.b16 %v181, %v180
  %v239 = vpack.c.b16 %v183, %v182
  %v240 = vpack.c.b16 %v185, %v184
  %v241 = vpack.c.b16 %v187, %v186
  %v242 = vpack.c.b16 %v189, %v188
  %v243 = vpack.c.b16 %v191, %v190
  %v244 = vpack.c.b16 %v193, %v192
  %v245 = vpack.c.b16 %v195, %v194
  %v246 = vpack.c.b16 %v197, %v196
  %v247 = vpack.c.b16 %v199, %v198
  %v248 = vpack.c.b16 %v201, %v200
  %v249 = vpack.c.b16 %v203, %v202
  %v250 = vpack.c.b16 %v205, %v204
  %v251 = vpack.c.b16 %v207, %v206
  %v252 = vpack.c.b16 %v209, %v208
  %v253 = vpack.c.b16 %v211, %v210
  %v254 = vpack.c.b16 %v213, %v212
  %v255 = vpack.c.b16 %v215, %v214
  %v256 = vpack.c.b16 %v217, %v216
  %v257 = vpack.c.b16 %v219, %v218
  %v258 = vpack.c.b16 %v221, %v220
  %v259 = vpack.c.b16 %v223, %v222
  %v260 = vpack.c.b16 %v225, %v224
  %v261 = vpack.c.b16 %v227, %v226
  %v262 = vpack.c.b16 %v229, %v228
  %v263 = vpack.c.b16 %v231, %v230
  %296 = vmatprep.subr.bf16.mxu0 0
  %297 = vmatpush1.bf16.msra.mxu0 %v232
  %298 = vmatprep.subr.bf16.mxu0 0
  %299 = vmatpush1.bf16.msra.mxu0 %v233
  %300 = vmatprep.subr.bf16.mxu0 0
  %301 = vmatpush1.bf16.msra.mxu0 %v234
  %302 = vmatprep.subr.bf16.mxu0 0
  %303 = vmatpush1.bf16.msra.mxu0 %v235
  %304 = vmatprep.subr.bf16.mxu0 0
  %305 = vmatpush1.bf16.msra.mxu0 %v236
  %306 = vmatprep.subr.bf16.mxu0 0
  %307 = vmatpush1.bf16.msra.mxu0 %v237
  %308 = vmatprep.subr.bf16.mxu0 0
  %309 = vmatpush1.bf16.msra.mxu0 %v238
  %310 = vmatprep.subr.bf16.mxu0 0
  %311 = vmatpush1.bf16.msra.mxu0 %v239
  %312 = vmatprep.subr.bf16.mxu0 0
  %313 = vmatpush1.bf16.msra.mxu0 %v240
  %314 = vmatprep.subr.bf16.mxu0 0
  %315 = vmatpush1.bf16.msra.mxu0 %v241
  %316 = vmatprep.subr.bf16.mxu0 0
  %317 = vmatpush1.bf16.msra.mxu0 %v242
  %318 = vmatprep.subr.bf16.mxu0 0
  %319 = vmatpush1.bf16.msra.mxu0 %v243
  %320 = vmatprep.subr.bf16.mxu0 0
  %321 = vmatpush1.bf16.msra.mxu0 %v244
  %322 = vmatprep.subr.bf16.mxu0 0
  %323 = vmatpush1.bf16.msra.mxu0 %v245
  %324 = vmatprep.subr.bf16.mxu0 0
  %325 = vmatpush1.bf16.msra.mxu0 %v246
  %326 = vmatprep.subr.bf16.mxu0 0
  %327 = vmatpush1.bf16.msra.mxu0 %v247
  %328 = vmatprep.mubr.bf16.mxu0 %v97
  %329 = vmatmul.mubr.bf16.gmra.mrb[0].mxu0 %v96
  %v330 = vpop.f32.mrb[0].mxu0
  %v331 = vadd.f32 %v88, %v330
  %v332 = vpop.f32.mrb[0].mxu0
  %v333 = vpop.f32.mrb[0].mxu0
  %v334 = vpop.f32.mrb[0].mxu0
  %335 = vdwg.mxu0
  %336 = vmatprep.subr.bf16.mxu0 0
  %337 = vmatpush1.bf16.msra.mxu0 %v248
  %338 = vmatprep.subr.bf16.mxu0 0
  %339 = vmatpush1.bf16.msra.mxu0 %v249
  %340 = vmatprep.subr.bf16.mxu0 0
  %341 = vmatpush1.bf16.msra.mxu0 %v250
  %342 = vmatprep.subr.bf16.mxu0 0
  %343 = vmatpush1.bf16.msra.mxu0 %v251
  %344 = vmatprep.subr.bf16.mxu0 0
  %345 = vmatpush1.bf16.msra.mxu0 %v252
  %346 = vmatprep.subr.bf16.mxu0 0
  %347 = vmatpush1.bf16.msra.mxu0 %v253
  %348 = vmatprep.subr.bf16.mxu0 0
  %349 = vmatpush1.bf16.msra.mxu0 %v254
  %350 = vmatprep.subr.bf16.mxu0 0
  %351 = vmatpush1.bf16.msra.mxu0 %v255
  %352 = vmatprep.subr.bf16.mxu0 0
  %353 = vmatpush1.bf16.msra.mxu0 %v256
  %354 = vmatprep.subr.bf16.mxu0 0
  %355 = vmatpush1.bf16.msra.mxu0 %v257
  %356 = vmatprep.subr.bf16.mxu0 0
  %357 = vmatpush1.bf16.msra.mxu0 %v258
  %358 = vmatprep.subr.bf16.mxu0 0
  %359 = vmatpush1.bf16.msra.mxu0 %v259
  %360 = vmatprep.subr.bf16.mxu0 0
  %361 = vmatpush1.bf16.msra.mxu0 %v260
  %362 = vmatprep.subr.bf16.mxu0 0
  %363 = vmatpush1.bf16.msra.mxu0 %v261
  %364 = vmatprep.subr.bf16.mxu0 0
  %365 = vmatpush1.bf16.msra.mxu0 %v262
  %366 = vmatprep.subr.bf16.mxu0 0
  %367 = vmatpush1.bf16.msra.mxu0 %v263
  %368 = vmatprep.mubr.bf16.mxu0 %v99
  %369 = vmatmul.mubr.bf16.gmra.mrb[0].mxu0 %v98
  %v370 = vpop.f32.mrb[0].mxu0
  %v371 = vadd.f32 %v331, %v370
  %v372 = vpop.f32.mrb[0].mxu0
  %v373 = vpop.f32.mrb[0].mxu0
  %v374 = vpop.f32.mrb[0].mxu0
  %375 = vdwg.mxu0
  %376 = vst [vmem:[%s3] sm:$0xff] %v371
  %v377 = vlaneseq
  %v378 = vshrl.u32 %v377, 7
  %s379 = smul.u32 0, 8
  %v380 = vstv %s379
  %v381 = vadd.s32 %v378, %v380
  %vm382 = vcmp.lt.s32.totalorder %v381, 8
  %v383 = vsel %vm382, %v371, 0.0
  %v384 = vrot.slane %v383, 4
  %v385 = vadd.f32 %v383, %v384
  %v386 = vrot.slane %v385, 2
  %v387 = vadd.f32 %v385, %v386
  %v388 = vrot.slane %v387, 1
  %v389 = vadd.f32 %v387, %v388
  %v390 = vmul.f32 %v383, %v383
  %v391 = vrot.slane %v390, 4
  %v392 = vadd.f32 %v390, %v391
  %v393 = vrot.slane %v392, 2
  %v394 = vadd.f32 %v392, %v393
  %v395 = vrot.slane %v394, 1
  %v396 = vadd.f32 %v394, %v395
  %vm397 = vcmp.eq.s32.totalorder %v378, 0
  %v398 = vsel %vm397, %v389, 0.0
  %vm399 = vcmp.eq.s32.totalorder %v378, 1
  %v400 = vsel %vm399, %v396, 0.0
  %v401 = vadd.f32 %v398, %v400
  %402 = vst [vmem:[%s4] sm:$0xff] %v401
  // Predicated region
  $region14: #{discriminator_forward.13} parent=0 // pred_check
    _
  $region15: #{discriminator_forward.13} parent=0 // pred_check_branch
    %404 = sbr.rel (0) target = $region17
  $region16: #{discriminator_forward.13} parent=0 // pred_region
    _
  $region17: #{discriminator_forward.13} parent=0 // pred_fallthru
    _
  // Predicated region
  $region18: #{discriminator_forward.13} parent=0 // pred_check
    _
  $region19: #{discriminator_forward.13} parent=0 // pred_check_branch
    %406 = sbr.rel (0) target = $region21
  $region20: #{discriminator_forward.13} parent=0 // pred_region
    _
  $region21: #{discriminator_forward.13} parent=0 // pred_fallthru
    _
  // Predicated region
  $region22: #{discriminator_forward.13} parent=0 // pred_check
    _
  $region23: #{discriminator_forward.13} parent=0 // pred_check_branch
    %408 = sbr.rel (0) target = $region25
  $region24: #{discriminator_forward.13} parent=0 // pred_region
    _
  $region25: #{discriminator_forward.13} parent=0 // pred_fallthru
    _
  // Predicated region
  $region26: #{discriminator_forward.13} parent=0 // pred_check
    _
  $region27: #{discriminator_forward.13} parent=0 // pred_check_branch
    %410 = sbr.rel (0) target = $region29
  $region28: #{discriminator_forward.13} parent=0 // pred_region
    _
  $region29: #{discriminator_forward.13} parent=0 // pred_fallthru
    _

// kernel: discriminator_forward.14
$region0: #{discriminator_forward.14}
  #allocation0 [shape = 'u32[]', space=smem, size = 0x4, offset = 0x4, fixed_abs, tag = 'smem constant byte address 0x4 - core index']
  #allocation1 [shape = 'u32[144,128]{1,0:T(1,128)}', space=vmem, size = 0x12000, scoped, tag = 'internal scratch']
  %s0 = inlined_call_operand.vmem [shape: f32[8,128], index: 0, kind: input, shape index: {}]
  %s1 = inlined_call_operand.vmem [shape: f32[1,128], index: 1, kind: input, shape index: {}]
  %s2 = inlined_call_operand.vmem [shape: f32[1,128], index: 2, kind: input, shape index: {}]
  %s3 = inlined_call_operand.vmem [shape: f32[8,128], index: 3, kind: output, shape index: {}]
  %s4 = sld [smem:[#allocation0]]
  $region22: #{discriminator_forward.14} parent=0
    _
  %s6 = ssub.s32 1, %s4
  %s7 = scalar_select 0, %s6, %s4
  // Predicated region
  $region2: #{discriminator_forward.14} parent=0 // pred_check
    _
  $region3: #{discriminator_forward.14} parent=0 // pred_check_branch
    %9 = sbr.rel (0) target = $region5
  $region4: #{discriminator_forward.14} parent=0 // pred_region
    _
  $region5: #{discriminator_forward.14} parent=0 // pred_fallthru
    _
  // Predicated region
  $region6: #{discriminator_forward.14} parent=0 // pred_check
    _
  $region7: #{discriminator_forward.14} parent=0 // pred_check_branch
    %11 = sbr.rel (0) target = $region9
  $region8: #{discriminator_forward.14} parent=0 // pred_region
    _
  $region9: #{discriminator_forward.14} parent=0 // pred_fallthru
    _
  // Predicated region
  $region10: #{discriminator_forward.14} parent=0 // pred_check
    _
  $region11: #{discriminator_forward.14} parent=0 // pred_check_branch
    %13 = sbr.rel (0) target = $region13
  $region12: #{discriminator_forward.14} parent=0 // pred_region
    _
  $region13: #{discriminator_forward.14} parent=0 // pred_fallthru
    _
  %v14 = vld [vmem:[%s0] sm:$0xff]
  %v15 = vld [vmem:[%s1] sm:$0x1]
  %v17 = vlaneseq
  %v18 = vshrl.u32 %v17, 7
  %v19 = vsub.s32 0, %v18
  %v20 = vrot.slane %v15, %v19
  %v22 = vmul.f32 %v14, %v20
  %v23 = vld [vmem:[%s2] sm:$0x1]
  %v25 = vlaneseq
  %v26 = vshrl.u32 %v25, 7
  %v27 = vsub.s32 0, %v26
  %v28 = vrot.slane %v23, %v27
  %v30 = vadd.f32 %v22, %v28
  %vm31 = vcmp.gt.f32.partialorder %v30, 0.0
  %v32 = vmul.f32 %v30, 0.2
  %v33 = vsel %vm31, %v30, %v32
  %34 = vst [vmem:[%s3] sm:$0xff] %v33
  // Predicated region
  $region14: #{discriminator_forward.14} parent=0 // pred_check
    _
  $region15: #{discriminator_forward.14} parent=0 // pred_check_branch
    %36 = sbr.rel (0) target = $region17
  $region16: #{discriminator_forward.14} parent=0 // pred_region
    _
  $region17: #{discriminator_forward.14} parent=0 // pred_fallthru
    _
  // Predicated region
  $region18: #{discriminator_forward.14} parent=0 // pred_check
    _
  $region19: #{discriminator_forward.14} parent=0 // pred_check_branch
    %38 = sbr.rel (0) target = $region21
  $region20: #{discriminator_forward.14} parent=0 // pred_region
    _
  $region21: #{discriminator_forward.14} parent=0 // pred_fallthru
    _

// kernel: discriminator_forward.15
$region0: #{discriminator_forward.15}
  #allocation0 [shape = 'u32[]', space=smem, size = 0x4, offset = 0x4, fixed_abs, tag = 'smem constant byte address 0x4 - core index']
  #allocation1 [shape = 'u32[144,128]{1,0:T(1,128)}', space=vmem, size = 0x12000, scoped, tag = 'internal scratch']
  %s0 = inlined_call_operand.vmem [shape: bf16[8,1024], index: 0, kind: input, shape index: {}]
  %s1 = inlined_call_operand.vmem [shape: bf16[1024,128], index: 1, kind: input, shape index: {}]
  %s2 = inlined_call_operand.vmem [shape: f32[1,128], index: 2, kind: input, shape index: {}]
  %s3 = inlined_call_operand.vmem [shape: f32[8,128], index: 3, kind: output, shape index: {0}]
  %s4 = inlined_call_operand.hbm [shape: f32[1,8,128], index: 4, kind: output, shape index: {1}]
  %5 = xla_tuple %s3, %s4
  %s6 = sld [smem:[#allocation0]]
  $region30: #{discriminator_forward.15} parent=0
    _
  %s8 = ssub.s32 1, %s6
  %s9 = scalar_select 0, %s8, %s6
  $region1: #{discriminator_forward.15} parent=0
    #allocation2 [shape = 'u8[4096]{0}', space=vmem, size = 0x1000, scoped, tag = 'output window, operand 1, single buffered']
    #allocation3 [shape = 's32[1]{0}', space=sflag, size = 0x4, scoped, tag = 'scoped memory for discriminator_forward.15']
    %10 = vsyncpa [#allocation3], 0
    // Predicated region
    $region2: #{discriminator_forward.15} parent=1 // pred_check
      _
    $region3: #{discriminator_forward.15} parent=1 // pred_check_branch
      %12 = sbr.rel (0) target = $region5
    $region4: #{discriminator_forward.15} parent=1 // pred_region
      _
    $region5: #{discriminator_forward.15} parent=1 // pred_fallthru
      _
    // Predicated region
    $region6: #{discriminator_forward.15} parent=1 // pred_check
      _
    $region7: #{discriminator_forward.15} parent=1 // pred_check_branch
      %14 = sbr.rel (0) target = $region9
    $region8: #{discriminator_forward.15} parent=1 // pred_region
      _
    $region9: #{discriminator_forward.15} parent=1 // pred_fallthru
      _
    // Predicated region
    $region10: #{discriminator_forward.15} parent=1 // pred_check
      _
    $region11: #{discriminator_forward.15} parent=1 // pred_check_branch
      %16 = sbr.rel (0) target = $region13
    $region12: #{discriminator_forward.15} parent=1 // pred_region
      _
    $region13: #{discriminator_forward.15} parent=1 // pred_fallthru
      _
    %v18 = vld [vmem:[%s0] sm:$0xff]
    %v19 = vld [vmem:[%s0 + $0x8] sm:$0xff]
    %v20 = vld [vmem:[%s0 + $0x10] sm:$0xff]
    %v21 = vld [vmem:[%s0 + $0x18] sm:$0xff]
    %v22 = vld [vmem:[%s1] sm:$0xf]
    %v23 = vld [vmem:[%s1 + $0x4] sm:$0xf]
    %v24 = vld [vmem:[%s1 + $0x8] sm:$0xf]
    %v25 = vld [vmem:[%s1 + $0xc] sm:$0xf]
    %v26 = vld [vmem:[%s1 + $0x10] sm:$0xf]
    %v27 = vld [vmem:[%s1 + $0x14] sm:$0xf]
    %v28 = vld [vmem:[%s1 + $0x18] sm:$0xf]
    %v29 = vld [vmem:[%s1 + $0x1c] sm:$0xf]
    %v30 = vld [vmem:[%s1 + $0x20] sm:$0xf]
    %v31 = vld [vmem:[%s1 + $0x24] sm:$0xf]
    %v32 = vld [vmem:[%s1 + $0x28] sm:$0xf]
    %v33 = vld [vmem:[%s1 + $0x2c] sm:$0xf]
    %v34 = vld [vmem:[%s1 + $0x30] sm:$0xf]
    %v35 = vld [vmem:[%s1 + $0x34] sm:$0xf]
    %v36 = vld [vmem:[%s1 + $0x38] sm:$0xf]
    %v37 = vld [vmem:[%s1 + $0x3c] sm:$0xf]
    %v38 = vld [vmem:[%s1 + $0x40] sm:$0xf]
    %v39 = vld [vmem:[%s1 + $0x44] sm:$0xf]
    %v40 = vld [vmem:[%s1 + $0x48] sm:$0xf]
    %v41 = vld [vmem:[%s1 + $0x4c] sm:$0xf]
    %v42 = vld [vmem:[%s1 + $0x50] sm:$0xf]
    %v43 = vld [vmem:[%s1 + $0x54] sm:$0xf]
    %v44 = vld [vmem:[%s1 + $0x58] sm:$0xf]
    %v45 = vld [vmem:[%s1 + $0x5c] sm:$0xf]
    %v46 = vld [vmem:[%s1 + $0x60] sm:$0xf]
    %v47 = vld [vmem:[%s1 + $0x64] sm:$0xf]
    %v48 = vld [vmem:[%s1 + $0x68] sm:$0xf]
    %v49 = vld [vmem:[%s1 + $0x6c] sm:$0xf]
    %v50 = vld [vmem:[%s1 + $0x70] sm:$0xf]
    %v51 = vld [vmem:[%s1 + $0x74] sm:$0xf]
    %v52 = vld [vmem:[%s1 + $0x78] sm:$0xf]
    %v53 = vld [vmem:[%s1 + $0x7c] sm:$0xf]
    %v54 = vld [vmem:[%s1 + $0x80] sm:$0xf]
    %v55 = vld [vmem:[%s1 + $0x84] sm:$0xf]
    %v56 = vld [vmem:[%s1 + $0x88] sm:$0xf]
    %v57 = vld [vmem:[%s1 + $0x8c] sm:$0xf]
    %v58 = vld [vmem:[%s1 + $0x90] sm:$0xf]
    %v59 = vld [vmem:[%s1 + $0x94] sm:$0xf]
    %v60 = vld [vmem:[%s1 + $0x98] sm:$0xf]
    %v61 = vld [vmem:[%s1 + $0x9c] sm:$0xf]
    %v62 = vld [vmem:[%s1 + $0xa0] sm:$0xf]
    %v63 = vld [vmem:[%s1 + $0xa4] sm:$0xf]
    %v64 = vld [vmem:[%s1 + $0xa8] sm:$0xf]
    %v65 = vld [vmem:[%s1 + $0xac] sm:$0xf]
    %v66 = vld [vmem:[%s1 + $0xb0] sm:$0xf]
    %v67 = vld [vmem:[%s1 + $0xb4] sm:$0xf]
    %v68 = vld [vmem:[%s1 + $0xb8] sm:$0xf]
    %v69 = vld [vmem:[%s1 + $0xbc] sm:$0xf]
    %v70 = vld [vmem:[%s1 + $0xc0] sm:$0xf]
    %v71 = vld [vmem:[%s1 + $0xc4] sm:$0xf]
    %v72 = vld [vmem:[%s1 + $0xc8] sm:$0xf]
    %v73 = vld [vmem:[%s1 + $0xcc] sm:$0xf]
    %v74 = vld [vmem:[%s1 + $0xd0] sm:$0xf]
    %v75 = vld [vmem:[%s1 + $0xd4] sm:$0xf]
    %v76 = vld [vmem:[%s1 + $0xd8] sm:$0xf]
    %v77 = vld [vmem:[%s1 + $0xdc] sm:$0xf]
    %v78 = vld [vmem:[%s1 + $0xe0] sm:$0xf]
    %v79 = vld [vmem:[%s1 + $0xe4] sm:$0xf]
    %v80 = vld [vmem:[%s1 + $0xe8] sm:$0xf]
    %v81 = vld [vmem:[%s1 + $0xec] sm:$0xf]
    %v82 = vld [vmem:[%s1 + $0xf0] sm:$0xf]
    %v83 = vld [vmem:[%s1 + $0xf4] sm:$0xf]
    %v84 = vld [vmem:[%s1 + $0xf8] sm:$0xf]
    %v85 = vld [vmem:[%s1 + $0xfc] sm:$0xf]
    %v86 = vld [vmem:[%s1 + $0x100] sm:$0xf]
    %v87 = vld [vmem:[%s1 + $0x104] sm:$0xf]
    %v88 = vld [vmem:[%s1 + $0x108] sm:$0xf]
    %v89 = vld [vmem:[%s1 + $0x10c] sm:$0xf]
    %v90 = vld [vmem:[%s1 + $0x110] sm:$0xf]
    %v91 = vld [vmem:[%s1 + $0x114] sm:$0xf]
    %v92 = vld [vmem:[%s1 + $0x118] sm:$0xf]
    %v93 = vld [vmem:[%s1 + $0x11c] sm:$0xf]
    %v94 = vld [vmem:[%s1 + $0x120] sm:$0xf]
    %v95 = vld [vmem:[%s1 + $0x124] sm:$0xf]
    %v96 = vld [vmem:[%s1 + $0x128] sm:$0xf]
    %v97 = vld [vmem:[%s1 + $0x12c] sm:$0xf]
    %v98 = vld [vmem:[%s1 + $0x130] sm:$0xf]
    %v99 = vld [vmem:[%s1 + $0x134] sm:$0xf]
    %v100 = vld [vmem:[%s1 + $0x138] sm:$0xf]
    %v101 = vld [vmem:[%s1 + $0x13c] sm:$0xf]
    %v102 = vld [vmem:[%s1 + $0x140] sm:$0xf]
    %v103 = vld [vmem:[%s1 + $0x144] sm:$0xf]
    %v104 = vld [vmem:[%s1 + $0x148] sm:$0xf]
    %v105 = vld [vmem:[%s1 + $0x14c] sm:$0xf]
    %v106 = vld [vmem:[%s1 + $0x150] sm:$0xf]
    %v107 = vld [vmem:[%s1 + $0x154] sm:$0xf]
    %v108 = vld [vmem:[%s1 + $0x158] sm:$0xf]
    %v109 = vld [vmem:[%s1 + $0x15c] sm:$0xf]
    %v110 = vld [vmem:[%s1 + $0x160] sm:$0xf]
    %v111 = vld [vmem:[%s1 + $0x164] sm:$0xf]
    %v112 = vld [vmem:[%s1 + $0x168] sm:$0xf]
    %v113 = vld [vmem:[%s1 + $0x16c] sm:$0xf]
    %v114 = vld [vmem:[%s1 + $0x170] sm:$0xf]
    %v115 = vld [vmem:[%s1 + $0x174] sm:$0xf]
    %v116 = vld [vmem:[%s1 + $0x178] sm:$0xf]
    %v117 = vld [vmem:[%s1 + $0x17c] sm:$0xf]
    %v118 = vld [vmem:[%s1 + $0x180] sm:$0xf]
    %v119 = vld [vmem:[%s1 + $0x184] sm:$0xf]
    %v120 = vld [vmem:[%s1 + $0x188] sm:$0xf]
    %v121 = vld [vmem:[%s1 + $0x18c] sm:$0xf]
    %v122 = vld [vmem:[%s1 + $0x190] sm:$0xf]
    %v123 = vld [vmem:[%s1 + $0x194] sm:$0xf]
    %v124 = vld [vmem:[%s1 + $0x198] sm:$0xf]
    %v125 = vld [vmem:[%s1 + $0x19c] sm:$0xf]
    %v126 = vld [vmem:[%s1 + $0x1a0] sm:$0xf]
    %v127 = vld [vmem:[%s1 + $0x1a4] sm:$0xf]
    %v128 = vld [vmem:[%s1 + $0x1a8] sm:$0xf]
    %v129 = vld [vmem:[%s1 + $0x1ac] sm:$0xf]
    %v130 = vld [vmem:[%s1 + $0x1b0] sm:$0xf]
    %v131 = vld [vmem:[%s1 + $0x1b4] sm:$0xf]
    %v132 = vld [vmem:[%s1 + $0x1b8] sm:$0xf]
    %v133 = vld [vmem:[%s1 + $0x1bc] sm:$0xf]
    %v134 = vld [vmem:[%s1 + $0x1c0] sm:$0xf]
    %v135 = vld [vmem:[%s1 + $0x1c4] sm:$0xf]
    %v136 = vld [vmem:[%s1 + $0x1c8] sm:$0xf]
    %v137 = vld [vmem:[%s1 + $0x1cc] sm:$0xf]
    %v138 = vld [vmem:[%s1 + $0x1d0] sm:$0xf]
    %v139 = vld [vmem:[%s1 + $0x1d4] sm:$0xf]
    %v140 = vld [vmem:[%s1 + $0x1d8] sm:$0xf]
    %v141 = vld [vmem:[%s1 + $0x1dc] sm:$0xf]
    %v142 = vld [vmem:[%s1 + $0x1e0] sm:$0xf]
    %v143 = vld [vmem:[%s1 + $0x1e4] sm:$0xf]
    %v144 = vld [vmem:[%s1 + $0x1e8] sm:$0xf]
    %v145 = vld [vmem:[%s1 + $0x1ec] sm:$0xf]
    %v146 = vld [vmem:[%s1 + $0x1f0] sm:$0xf]
    %v147 = vld [vmem:[%s1 + $0x1f4] sm:$0xf]
    %v148 = vld [vmem:[%s1 + $0x1f8] sm:$0xf]
    %v149 = vld [vmem:[%s1 + $0x1fc] sm:$0xf]
    %v150 = vld [vmem:[%s2] sm:$0x1]
    %v152 = vlaneseq
    %v153 = vshrl.u32 %v152, 7
    %v154 = vsub.s32 0, %v153
    %v155 = vrot.slane %v150, %v154
    %v161 = vunpack.c.l.b16 %v18
    %v162 = vunpack.c.h.b16 %v18
    %v163 = vunpack.c.l.b16 %v19
    %v164 = vunpack.c.h.b16 %v19
    %v165 = vunpack.c.l.b16 %v20
    %v166 = vunpack.c.h.b16 %v20
    %v167 = vunpack.c.l.b16 %v21
    %v168 = vunpack.c.h.b16 %v21
    %v169 = vpack.c.b16 %v161, %v161
    %v170 = vpack.c.b16 %v162, %v162
    %v171 = vpack.c.b16 %v163, %v163
    %v172 = vpack.c.b16 %v164, %v164
    %v173 = vpack.c.b16 %v165, %v165
    %v174 = vpack.c.b16 %v166, %v166
    %v175 = vpack.c.b16 %v167, %v167
    %v176 = vpack.c.b16 %v168, %v168
    %v313 = vunpack.c.l.b16 %v22
    %v314 = vunpack.c.l.b16 %v23
    %v315 = vunpack.c.l.b16 %v24
    %v316 = vunpack.c.l.b16 %v25
    %v317 = vunpack.c.l.b16 %v26
    %v318 = vunpack.c.l.b16 %v27
    %v319 = vunpack.c.l.b16 %v28
    %v320 = vunpack.c.l.b16 %v29
    %v321 = vunpack.c.l.b16 %v30
    %v322 = vunpack.c.l.b16 %v31
    %v323 = vunpack.c.l.b16 %v32
    %v324 = vunpack.c.l.b16 %v33
    %v325 = vunpack.c.l.b16 %v34
    %v326 = vunpack.c.l.b16 %v35
    %v327 = vunpack.c.l.b16 %v36
    %v328 = vunpack.c.l.b16 %v37
    %v329 = vunpack.c.l.b16 %v38
    %v330 = vunpack.c.l.b16 %v39
    %v331 = vunpack.c.l.b16 %v40
    %v332 = vunpack.c.l.b16 %v41
    %v333 = vunpack.c.l.b16 %v42
    %v334 = vunpack.c.l.b16 %v43
    %v335 = vunpack.c.l.b16 %v44
    %v336 = vunpack.c.l.b16 %v45
    %v337 = vunpack.c.l.b16 %v46
    %v338 = vunpack.c.l.b16 %v47
    %v339 = vunpack.c.l.b16 %v48
    %v340 = vunpack.c.l.b16 %v49
    %v341 = vunpack.c.l.b16 %v50
    %v342 = vunpack.c.l.b16 %v51
    %v343 = vunpack.c.l.b16 %v52
    %v344 = vunpack.c.l.b16 %v53
    %v345 = vunpack.c.l.b16 %v54
    %v346 = vunpack.c.l.b16 %v55
    %v347 = vunpack.c.l.b16 %v56
    %v348 = vunpack.c.l.b16 %v57
    %v349 = vunpack.c.l.b16 %v58
    %v350 = vunpack.c.l.b16 %v59
    %v351 = vunpack.c.l.b16 %v60
    %v352 = vunpack.c.l.b16 %v61
    %v353 = vunpack.c.l.b16 %v62
    %v354 = vunpack.c.l.b16 %v63
    %v355 = vunpack.c.l.b16 %v64
    %v356 = vunpack.c.l.b16 %v65
    %v357 = vunpack.c.l.b16 %v66
    %v358 = vunpack.c.l.b16 %v67
    %v359 = vunpack.c.l.b16 %v68
    %v360 = vunpack.c.l.b16 %v69
    %v361 = vunpack.c.l.b16 %v70
    %v362 = vunpack.c.l.b16 %v71
    %v363 = vunpack.c.l.b16 %v72
    %v364 = vunpack.c.l.b16 %v73
    %v365 = vunpack.c.l.b16 %v74
    %v366 = vunpack.c.l.b16 %v75
    %v367 = vunpack.c.l.b16 %v76
    %v368 = vunpack.c.l.b16 %v77
    %v369 = vunpack.c.l.b16 %v78
    %v370 = vunpack.c.l.b16 %v79
    %v371 = vunpack.c.l.b16 %v80
    %v372 = vunpack.c.l.b16 %v81
    %v373 = vunpack.c.l.b16 %v82
    %v374 = vunpack.c.l.b16 %v83
    %v375 = vunpack.c.l.b16 %v84
    %v376 = vunpack.c.l.b16 %v85
    %v377 = vunpack.c.l.b16 %v86
    %v378 = vunpack.c.l.b16 %v87
    %v379 = vunpack.c.l.b16 %v88
    %v380 = vunpack.c.l.b16 %v89
    %v381 = vunpack.c.l.b16 %v90
    %v382 = vunpack.c.l.b16 %v91
    %v383 = vunpack.c.l.b16 %v92
    %v384 = vunpack.c.l.b16 %v93
    %v385 = vunpack.c.l.b16 %v94
    %v386 = vunpack.c.l.b16 %v95
    %v387 = vunpack.c.l.b16 %v96
    %v388 = vunpack.c.l.b16 %v97
    %v389 = vunpack.c.l.b16 %v98
    %v390 = vunpack.c.l.b16 %v99
    %v391 = vunpack.c.l.b16 %v100
    %v392 = vunpack.c.l.b16 %v101
    %v393 = vunpack.c.l.b16 %v102
    %v394 = vunpack.c.l.b16 %v103
    %v395 = vunpack.c.l.b16 %v104
    %v396 = vunpack.c.l.b16 %v105
    %v397 = vunpack.c.l.b16 %v106
    %v398 = vunpack.c.l.b16 %v107
    %v399 = vunpack.c.l.b16 %v108
    %v400 = vunpack.c.l.b16 %v109
    %v401 = vunpack.c.l.b16 %v110
    %v402 = vunpack.c.l.b16 %v111
    %v403 = vunpack.c.l.b16 %v112
    %v404 = vunpack.c.l.b16 %v113
    %v405 = vunpack.c.l.b16 %v114
    %v406 = vunpack.c.l.b16 %v115
    %v407 = vunpack.c.l.b16 %v116
    %v408 = vunpack.c.l.b16 %v117
    %v409 = vunpack.c.l.b16 %v118
    %v410 = vunpack.c.l.b16 %v119
    %v411 = vunpack.c.l.b16 %v120
    %v412 = vunpack.c.l.b16 %v121
    %v413 = vunpack.c.l.b16 %v122
    %v414 = vunpack.c.l.b16 %v123
    %v415 = vunpack.c.l.b16 %v124
    %v416 = vunpack.c.l.b16 %v125
    %v417 = vunpack.c.l.b16 %v126
    %v418 = vunpack.c.l.b16 %v127
    %v419 = vunpack.c.l.b16 %v128
    %v420 = vunpack.c.l.b16 %v129
    %v421 = vunpack.c.l.b16 %v130
    %v422 = vunpack.c.l.b16 %v131
    %v423 = vunpack.c.l.b16 %v132
    %v424 = vunpack.c.l.b16 %v133
    %v425 = vunpack.c.l.b16 %v134
    %v426 = vunpack.c.l.b16 %v135
    %v427 = vunpack.c.l.b16 %v136
    %v428 = vunpack.c.l.b16 %v137
    %v429 = vunpack.c.l.b16 %v138
    %v430 = vunpack.c.l.b16 %v139
    %v431 = vunpack.c.l.b16 %v140
    %v432 = vunpack.c.l.b16 %v141
    %v433 = vunpack.c.l.b16 %v142
    %v434 = vunpack.c.l.b16 %v143
    %v435 = vunpack.c.l.b16 %v144
    %v436 = vunpack.c.l.b16 %v145
    %v437 = vunpack.c.l.b16 %v146
    %v438 = vunpack.c.l.b16 %v147
    %v439 = vunpack.c.l.b16 %v148
    %v440 = vunpack.c.l.b16 %v149
    %v441 = vpack.c.b16 %v314, %v313
    %v442 = vpack.c.b16 %v316, %v315
    %v443 = vpack.c.b16 %v318, %v317
    %v444 = vpack.c.b16 %v320, %v319
    %v445 = vpack.c.b16 %v322, %v321
    %v446 = vpack.c.b16 %v324, %v323
    %v447 = vpack.c.b16 %v326, %v325
    %v448 = vpack.c.b16 %v328, %v327
    %v449 = vpack.c.b16 %v330, %v329
    %v450 = vpack.c.b16 %v332, %v331
    %v451 = vpack.c.b16 %v334, %v333
    %v452 = vpack.c.b16 %v336, %v335
    %v453 = vpack.c.b16 %v338, %v337
    %v454 = vpack.c.b16 %v340, %v339
    %v455 = vpack.c.b16 %v342, %v341
    %v456 = vpack.c.b16 %v344, %v343
    %v457 = vpack.c.b16 %v346, %v345
    %v458 = vpack.c.b16 %v348, %v347
    %v459 = vpack.c.b16 %v350, %v349
    %v460 = vpack.c.b16 %v352, %v351
    %v461 = vpack.c.b16 %v354, %v353
    %v462 = vpack.c.b16 %v356, %v355
    %v463 = vpack.c.b16 %v358, %v357
    %v464 = vpack.c.b16 %v360, %v359
    %v465 = vpack.c.b16 %v362, %v361
    %v466 = vpack.c.b16 %v364, %v363
    %v467 = vpack.c.b16 %v366, %v365
    %v468 = vpack.c.b16 %v368, %v367
    %v469 = vpack.c.b16 %v370, %v369
    %v470 = vpack.c.b16 %v372, %v371
    %v471 = vpack.c.b16 %v374, %v373
    %v472 = vpack.c.b16 %v376, %v375
    %v473 = vpack.c.b16 %v378, %v377
    %v474 = vpack.c.b16 %v380, %v379
    %v475 = vpack.c.b16 %v382, %v381
    %v476 = vpack.c.b16 %v384, %v383
    %v477 = vpack.c.b16 %v386, %v385
    %v478 = vpack.c.b16 %v388, %v387
    %v479 = vpack.c.b16 %v390, %v389
    %v480 = vpack.c.b16 %v392, %v391
    %v481 = vpack.c.b16 %v394, %v393
    %v482 = vpack.c.b16 %v396, %v395
    %v483 = vpack.c.b16 %v398, %v397
    %v484 = vpack.c.b16 %v400, %v399
    %v485 = vpack.c.b16 %v402, %v401
    %v486 = vpack.c.b16 %v404, %v403
    %v487 = vpack.c.b16 %v406, %v405
    %v488 = vpack.c.b16 %v408, %v407
    %v489 = vpack.c.b16 %v410, %v409
    %v490 = vpack.c.b16 %v412, %v411
    %v491 = vpack.c.b16 %v414, %v413
    %v492 = vpack.c.b16 %v416, %v415
    %v493 = vpack.c.b16 %v418, %v417
    %v494 = vpack.c.b16 %v420, %v419
    %v495 = vpack.c.b16 %v422, %v421
    %v496 = vpack.c.b16 %v424, %v423
    %v497 = vpack.c.b16 %v426, %v425
    %v498 = vpack.c.b16 %v428, %v427
    %v499 = vpack.c.b16 %v430, %v429
    %v500 = vpack.c.b16 %v432, %v431
    %v501 = vpack.c.b16 %v434, %v433
    %v502 = vpack.c.b16 %v436, %v435
    %v503 = vpack.c.b16 %v438, %v437
    %v504 = vpack.c.b16 %v440, %v439
    %569 = vmatprep.subr.bf16.mxu0 0
    %570 = vmatpush1.bf16.msra.mxu0 %v441
    %571 = vmatprep.subr.bf16.mxu0 0
    %572 = vmatpush1.bf16.msra.mxu0 %v442
    %573 = vmatprep.subr.bf16.mxu0 0
    %574 = vmatpush1.bf16.msra.mxu0 %v443
    %575 = vmatprep.subr.bf16.mxu0 0
    %576 = vmatpush1.bf16.msra.mxu0 %v444
    %577 = vmatprep.subr.bf16.mxu0 0
    %578 = vmatpush1.bf16.msra.mxu0 %v445
    %579 = vmatprep.subr.bf16.mxu0 0
    %580 = vmatpush1.bf16.msra.mxu0 %v446
    %581 = vmatprep.subr.bf16.mxu0 0
    %582 = vmatpush1.bf16.msra.mxu0 %v447
    %583 = vmatprep.subr.bf16.mxu0 0
    %584 = vmatpush1.bf16.msra.mxu0 %v448
    %585 = vmatprep.subr.bf16.mxu0 0
    %586 = vmatpush1.bf16.msra.mxu0 %v449
    %587 = vmatprep.subr.bf16.mxu0 0
    %588 = vmatpush1.bf16.msra.mxu0 %v450
    %589 = vmatprep.subr.bf16.mxu0 0
    %590 = vmatpush1.bf16.msra.mxu0 %v451
    %591 = vmatprep.subr.bf16.mxu0 0
    %592 = vmatpush1.bf16.msra.mxu0 %v452
    %593 = vmatprep.subr.bf16.mxu0 0
    %594 = vmatpush1.bf16.msra.mxu0 %v453
    %595 = vmatprep.subr.bf16.mxu0 0
    %596 = vmatpush1.bf16.msra.mxu0 %v454
    %597 = vmatprep.subr.bf16.mxu0 0
    %598 = vmatpush1.bf16.msra.mxu0 %v455
    %599 = vmatprep.subr.bf16.mxu0 0
    %600 = vmatpush1.bf16.msra.mxu0 %v456
    %601 = vmatprep.mubr.bf16.mxu0 %v170
    %602 = vmatmul.mubr.bf16.gmra.mrb[0].mxu0 %v169
    %v603 = vpop.f32.mrb[0].mxu0
    %v604 = vadd.f32 %v155, %v603
    %v605 = vpop.f32.mrb[0].mxu0
    %v606 = vpop.f32.mrb[0].mxu0
    %v607 = vpop.f32.mrb[0].mxu0
    %608 = vdwg.mxu0
    %609 = vmatprep.subr.bf16.mxu0 0
    %610 = vmatpush1.bf16.msra.mxu0 %v457
    %611 = vmatprep.subr.bf16.mxu0 0
    %612 = vmatpush1.bf16.msra.mxu0 %v458
    %613 = vmatprep.subr.bf16.mxu0 0
    %614 = vmatpush1.bf16.msra.mxu0 %v459
    %615 = vmatprep.subr.bf16.mxu0 0
    %616 = vmatpush1.bf16.msra.mxu0 %v460
    %617 = vmatprep.subr.bf16.mxu0 0
    %618 = vmatpush1.bf16.msra.mxu0 %v461
    %619 = vmatprep.subr.bf16.mxu0 0
    %620 = vmatpush1.bf16.msra.mxu0 %v462
    %621 = vmatprep.subr.bf16.mxu0 0
    %622 = vmatpush1.bf16.msra.mxu0 %v463
    %623 = vmatprep.subr.bf16.mxu0 0
    %624 = vmatpush1.bf16.msra.mxu0 %v464
    %625 = vmatprep.subr.bf16.mxu0 0
    %626 = vmatpush1.bf16.msra.mxu0 %v465
    %627 = vmatprep.subr.bf16.mxu0 0
    %628 = vmatpush1.bf16.msra.mxu0 %v466
    %629 = vmatprep.subr.bf16.mxu0 0
    %630 = vmatpush1.bf16.msra.mxu0 %v467
    %631 = vmatprep.subr.bf16.mxu0 0
    %632 = vmatpush1.bf16.msra.mxu0 %v468
    %633 = vmatprep.subr.bf16.mxu0 0
    %634 = vmatpush1.bf16.msra.mxu0 %v469
    %635 = vmatprep.subr.bf16.mxu0 0
    %636 = vmatpush1.bf16.msra.mxu0 %v470
    %637 = vmatprep.subr.bf16.mxu0 0
    %638 = vmatpush1.bf16.msra.mxu0 %v471
    %639 = vmatprep.subr.bf16.mxu0 0
    %640 = vmatpush1.bf16.msra.mxu0 %v472
    %641 = vmatprep.mubr.bf16.mxu0 %v172
    %642 = vmatmul.mubr.bf16.gmra.mrb[0].mxu0 %v171
    %v643 = vpop.f32.mrb[0].mxu0
    %v644 = vadd.f32 %v604, %v643
    %v645 = vpop.f32.mrb[0].mxu0
    %v646 = vpop.f32.mrb[0].mxu0
    %v647 = vpop.f32.mrb[0].mxu0
    %648 = vdwg.mxu0
    %649 = vmatprep.subr.bf16.mxu0 0
    %650 = vmatpush1.bf16.msra.mxu0 %v473
    %651 = vmatprep.subr.bf16.mxu0 0
    %652 = vmatpush1.bf16.msra.mxu0 %v474
    %653 = vmatprep.subr.bf16.mxu0 0
    %654 = vmatpush1.bf16.msra.mxu0 %v475
    %655 = vmatprep.subr.bf16.mxu0 0
    %656 = vmatpush1.bf16.msra.mxu0 %v476
    %657 = vmatprep.subr.bf16.mxu0 0
    %658 = vmatpush1.bf16.msra.mxu0 %v477
    %659 = vmatprep.subr.bf16.mxu0 0
    %660 = vmatpush1.bf16.msra.mxu0 %v478
    %661 = vmatprep.subr.bf16.mxu0 0
    %662 = vmatpush1.bf16.msra.mxu0 %v479
    %663 = vmatprep.subr.bf16.mxu0 0
    %664 = vmatpush1.bf16.msra.mxu0 %v480
    %665 = vmatprep.subr.bf16.mxu0 0
    %666 = vmatpush1.bf16.msra.mxu0 %v481
    %667 = vmatprep.subr.bf16.mxu0 0
    %668 = vmatpush1.bf16.msra.mxu0 %v482
    %669 = vmatprep.subr.bf16.mxu0 0
    %670 = vmatpush1.bf16.msra.mxu0 %v483
    %671 = vmatprep.subr.bf16.mxu0 0
    %672 = vmatpush1.bf16.msra.mxu0 %v484
    %673 = vmatprep.subr.bf16.mxu0 0
    %674 = vmatpush1.bf16.msra.mxu0 %v485
    %675 = vmatprep.subr.bf16.mxu0 0
    %676 = vmatpush1.bf16.msra.mxu0 %v486
    %677 = vmatprep.subr.bf16.mxu0 0
    %678 = vmatpush1.bf16.msra.mxu0 %v487
    %679 = vmatprep.subr.bf16.mxu0 0
    %680 = vmatpush1.bf16.msra.mxu0 %v488
    %681 = vmatprep.mubr.bf16.mxu0 %v174
    %682 = vmatmul.mubr.bf16.gmra.mrb[0].mxu0 %v173
    %v683 = vpop.f32.mrb[0].mxu0
    %v684 = vadd.f32 %v644, %v683
    %v685 = vpop.f32.mrb[0].mxu0
    %v686 = vpop.f32.mrb[0].mxu0
    %v687 = vpop.f32.mrb[0].mxu0
    %688 = vdwg.mxu0
    %689 = vmatprep.subr.bf16.mxu0 0
    %690 = vmatpush1.bf16.msra.mxu0 %v489
    %691 = vmatprep.subr.bf16.mxu0 0
    %692 = vmatpush1.bf16.msra.mxu0 %v490
    %693 = vmatprep.subr.bf16.mxu0 0
    %694 = vmatpush1.bf16.msra.mxu0 %v491
    %695 = vmatprep.subr.bf16.mxu0 0
    %696 = vmatpush1.bf16.msra.mxu0 %v492
    %697 = vmatprep.subr.bf16.mxu0 0
    %698 = vmatpush1.bf16.msra.mxu0 %v493
    %699 = vmatprep.subr.bf16.mxu0 0
    %700 = vmatpush1.bf16.msra.mxu0 %v494
    %701 = vmatprep.subr.bf16.mxu0 0
    %702 = vmatpush1.bf16.msra.mxu0 %v495
    %703 = vmatprep.subr.bf16.mxu0 0
    %704 = vmatpush1.bf16.msra.mxu0 %v496
    %705 = vmatprep.subr.bf16.mxu0 0
    %706 = vmatpush1.bf16.msra.mxu0 %v497
    %707 = vmatprep.subr.bf16.mxu0 0
    %708 = vmatpush1.bf16.msra.mxu0 %v498
    %709 = vmatprep.subr.bf16.mxu0 0
    %710 = vmatpush1.bf16.msra.mxu0 %v499
    %711 = vmatprep.subr.bf16.mxu0 0
    %712 = vmatpush1.bf16.msra.mxu0 %v500
    %713 = vmatprep.subr.bf16.mxu0 0
    %714 = vmatpush1.bf16.msra.mxu0 %v501
    %715 = vmatprep.subr.bf16.mxu0 0
    %716 = vmatpush1.bf16.msra.mxu0 %v502
    %717 = vmatprep.subr.bf16.mxu0 0
    %718 = vmatpush1.bf16.msra.mxu0 %v503
    %719 = vmatprep.subr.bf16.mxu0 0
    %720 = vmatpush1.bf16.msra.mxu0 %v504
    %721 = vmatprep.mubr.bf16.mxu0 %v176
    %722 = vmatmul.mubr.bf16.gmra.mrb[0].mxu0 %v175
    %v723 = vpop.f32.mrb[0].mxu0
    %v724 = vadd.f32 %v684, %v723
    %v725 = vpop.f32.mrb[0].mxu0
    %v726 = vpop.f32.mrb[0].mxu0
    %v727 = vpop.f32.mrb[0].mxu0
    %728 = vdwg.mxu0
    %v729 = vxor.u32 %v724, 2147483648
    %v730 = vmul.f32 %v729, 1.442695
    %v731 = vpow.pop %v730
    %v732 = vadd.f32 %v731, 1.0
    %v733 = vrcp.pop %v732
    %v734 = vmul.f32 1.0, %v733
    %735 = vst [vmem:[%s3] sm:$0xff] %v734
    %v736 = vlaneseq
    %v737 = vshrl.u32 %v736, 7
    %s738 = smul.u32 0, 8
    %v739 = vstv %s738
    %v740 = vadd.s32 %v737, %v739
    %vm741 = vcmp.lt.s32.totalorder %v740, 2
    %v742 = vsel %vm741, %v734, 0.0
    %v743 = vrot.slane %v742, 4
    %v744 = vadd.f32 %v742, %v743
    %v745 = vrot.slane %v744, 2
    %v746 = vadd.f32 %v744, %v745
    %v747 = vrot.slane %v746, 1
    %v748 = vadd.f32 %v746, %v747
    %v749 = vmul.f32 %v742, %v742
    %v750 = vrot.slane %v749, 4
    %v751 = vadd.f32 %v749, %v750
    %v752 = vrot.slane %v751, 2
    %v753 = vadd.f32 %v751, %v752
    %v754 = vrot.slane %v753, 1
    %v755 = vadd.f32 %v753, %v754
    %vm756 = vcmp.eq.s32.totalorder %v737, 0
    %v757 = vsel %vm756, %v748, 0.0
    %vm758 = vcmp.eq.s32.totalorder %v737, 1
    %v759 = vsel %vm758, %v755, 0.0
    %v760 = vadd.f32 %v757, %v759
    %761 = vst [vmem:[#allocation2] sm:$0xff] %v760
    // Predicated region
    $region14: #{discriminator_forward.15} parent=1 // pred_check
      _
    $region15: #{discriminator_forward.15} parent=1 // pred_check_branch
      %763 = sbr.rel (0) target = $region17
    $region16: #{discriminator_forward.15} parent=1 // pred_region
      _
    $region17: #{discriminator_forward.15} parent=1 // pred_fallthru
      _
    // Predicated region
    $region18: #{discriminator_forward.15} parent=1 // pred_check
      _
    $region19: #{discriminator_forward.15} parent=1 // pred_check_branch
      %765 = sbr.rel (0) target = $region21
    $region20: #{discriminator_forward.15} parent=1 // pred_region
      %s767 = ssub.s32 128, 128
      %768 = vsyncadd [#allocation3], %s767
      %s770 = sshll.u32 [#allocation2], 4
      %s771 = int_to_ptr.vmem [resolvable:$true] %s770
      %773 = dma.vmem_to_hbm [thread:$0]  %s771, 128, %s4, [#allocation3]
    $region21: #{discriminator_forward.15} parent=1 // pred_fallthru
      _
    // Predicated region
    $region22: #{discriminator_forward.15} parent=1 // pred_check
      _
    $region23: #{discriminator_forward.15} parent=1 // pred_check_branch
      %775 = sbr.rel (0) target = $region25
    $region24: #{discriminator_forward.15} parent=1 // pred_region
      _
    $region25: #{discriminator_forward.15} parent=1 // pred_fallthru
      _
    // Predicated region
    $region26: #{discriminator_forward.15} parent=1 // pred_check
      _
    $region27: #{discriminator_forward.15} parent=1 // pred_check_branch
      %777 = sbr.rel (0) target = $region29
    $region28: #{discriminator_forward.15} parent=1 // pred_region
      %778 = dma.done [#allocation3], 128
    $region29: #{discriminator_forward.15} parent=1 // pred_fallthru
      _
    %779 = vsyncpa [#allocation3], 1

</llo_original>
